<compile_context>
chip_gen: v7x
topology: tpu7x:2x2x1
jax: 0.10.0
libtpu: 0.0.40
codegen_flags: <defaults>
</compile_context>

<pallas_src>
import jax
import jax.numpy as jnp
from jax import lax
from jax.experimental import pallas as pl
from jax.experimental.pallas import tpu as pltpu


def _bottleneck_kernel(x_ref, w1_ref, b1_ref, w2_ref, b2_ref, w3_ref, b3_ref,
                       out_ref, midpad_ref):
    # x_ref     : (1, H, W, Cin)   bf16  input block (also the identity branch)
    # w1_ref    : (Cin, CP)        bf16  conv1 weight, bn1 scale folded, lane-padded
    # w2_ref    : (9, CP, CP)      bf16  conv2 taps (k=kh*3+kw), bn2 scale folded
    # w3_ref    : (CP, Cout)       bf16  conv3 weight, bn3 scale folded
    # b*_ref    : (1, C)           f32   folded BN shifts (zero in padded lanes)
    # out_ref   : (1, H, W, Cout)  bf16
    # midpad_ref: (H+2, W+2, CP)   bf16  zero-padded conv2 input staging (VMEM)
    _, H, W, Cout = out_ref.shape
    Cin = x_ref.shape[3]
    CP = w1_ref.shape[1]                                  # multiple of 128

    x = x_ref[0].reshape(H * W, Cin)                      # bf16, free view (W % 8 == 0)

    # ---- conv1 (1x1) + bn1 + relu : one MXU matmul, scale pre-folded -------
    acc1 = jnp.dot(x, w1_ref[...], preferred_element_type=jnp.float32)
    mid1 = jnp.maximum(acc1 + b1_ref[...], 0.0).astype(jnp.bfloat16)

    # ---- stage conv2 input (bf16); zero only the 1-pixel border strips -----
    # TODO(synk): zero the border once per core (needs a per-core first-step
    #             flag; program_id(0)==0 is wrong under megacore sharding).
    zrow = jnp.zeros((1, W + 2, CP), jnp.bfloat16)
    zcol = jnp.zeros((H, 1, CP), jnp.bfloat16)
    midpad_ref[0:1, :, :] = zrow
    midpad_ref[H + 1:H + 2, :, :] = zrow
    midpad_ref[1:H + 1, 0:1, :] = zcol
    midpad_ref[1:H + 1, W + 1:W + 2, :] = zcol
    midpad_ref[1:H + 1, 1:W + 1, :] = mid1.reshape(H, W, CP)

    # ---- conv2 (3x3, pad 1) + bn2 + relu ------------------------------------
    # Nine accumulating K=CP matmuls read directly from the bf16 midpad scratch
    # (no im2col slab -> no slab stores, no per-patch reshape copies).
    acc2 = None
    for k in range(9):
        dh, dw = divmod(k, 3)
        patch = midpad_ref[dh:dh + H, dw:dw + W, :].reshape(H * W, CP)
        pk = jnp.dot(patch, w2_ref[k], preferred_element_type=jnp.float32)
        acc2 = pk if acc2 is None else acc2 + pk
    mid2 = jnp.maximum(acc2 + b2_ref[...], 0.0).astype(jnp.bfloat16)

    # ---- conv3 (1x1) + bn3 + residual + relu --------------------------------
    acc3 = jnp.dot(mid2, w3_ref[...], preferred_element_type=jnp.float32)
    out = jnp.maximum(acc3 + b3_ref[...] + x.astype(jnp.float32), 0.0)
    out_ref[...] = out.astype(out_ref.dtype).reshape(1, H, W, Cout)


def bottleneck_pallas_nhwc(x_nhwc, w1, g1, be1, rm1, rv1, w2, g2, be2, rm2, rv2,
                           w3, g3, be3, rm3, rv3, eps=1e-5):
    """Fused Bottleneck forward. NHWC in -> NHWC bf16 out (inference BN)."""
    N, H, W, Cin = x_nhwc.shape
    Cmid = w1.shape[0]                       # width = planes * base_width/64 * groups
    Cout = w3.shape[0]                       # planes * expansion
    assert Cin == Cout, "identity path requires inplanes == planes * expansion"
    assert w2.shape == (Cmid, Cmid, 3, 3)
    CP = ((Cmid + 127) // 128) * 128         # lane-pad the bottleneck width
    pad_m = CP - Cmid

    # Fold BN (inference form): y = conv(x, w) * scale + shift
    s1 = g1 / jnp.sqrt(rv1 + eps); b1 = be1 - rm1 * s1
    s2 = g2 / jnp.sqrt(rv2 + eps); b2 = be2 - rm2 * s2
    s3 = g3 / jnp.sqrt(rv3 + eps); b3 = be3 - rm3 * s3

    # Conv weights -> matmul layouts, BN scale folded per output channel, bf16,
    # zero-padded to CP lanes (padded channels compute exactly zero).
    w1_f = jnp.pad(w1.reshape(Cmid, Cin).T * s1[None, :],
                   ((0, 0), (0, pad_m))).astype(jnp.bfloat16)             # (Cin, CP)
    w2_f = jnp.pad(jnp.transpose(w2, (2, 3, 1, 0)).reshape(9, Cmid, Cmid)
                   * s2[None, None, :],
                   ((0, 0), (0, pad_m), (0, pad_m))).astype(jnp.bfloat16)  # (9, CP, CP)
    w3_f = jnp.pad(w3.reshape(Cout, Cmid).T * s3[None, :],
                   ((0, pad_m), (0, 0))).astype(jnp.bfloat16)             # (CP, Cout)
    b1_f = jnp.pad(b1, (0, pad_m)).reshape(1, CP).astype(jnp.float32)
    b2_f = jnp.pad(b2, (0, pad_m)).reshape(1, CP).astype(jnp.float32)
    b3_f = b3.reshape(1, Cout).astype(jnp.float32)

    x_bf = x_nhwc.astype(jnp.bfloat16)

    # TODO(synk): mark the weight/bias specs pipeline_mode=pl.Buffered(1)
    #             (constant index maps need no double buffer) to free VMEM on v7x.
    return pl.pallas_call(
        _bottleneck_kernel,
        out_shape=jax.ShapeDtypeStruct((N, H, W, Cout), jnp.bfloat16),
        grid_spec=pltpu.PrefetchScalarGridSpec(
            num_scalar_prefetch=0,
            grid=(N,),
            in_specs=[
                pl.BlockSpec((1, H, W, Cin), lambda n: (n, 0, 0, 0)),   # x / identity
                pl.BlockSpec((Cin, CP), lambda n: (0, 0)),              # w1 (bn1 folded)
                pl.BlockSpec((1, CP), lambda n: (0, 0)),                # bn1 shift
                pl.BlockSpec((9, CP, CP), lambda n: (0, 0, 0)),         # w2 taps (bn2 folded)
                pl.BlockSpec((1, CP), lambda n: (0, 0)),                # bn2 shift
                pl.BlockSpec((CP, Cout), lambda n: (0, 0)),             # w3 (bn3 folded)
                pl.BlockSpec((1, Cout), lambda n: (0, 0)),              # bn3 shift
            ],
            out_specs=pl.BlockSpec((1, H, W, Cout), lambda n: (n, 0, 0, 0)),
            scratch_shapes=[
                pltpu.VMEM((H + 2, W + 2, CP), jnp.bfloat16),           # padded conv2 input
            ],
        ),
        compiler_params=pltpu.CompilerParams(
            dimension_semantics=("parallel",),
            vmem_limit_bytes=32 * 1024 * 1024,
        ),
    )(x_bf, w1_f, b1_f, w2_f, b2_f, w3_f, b3_f)


def bottleneck_pallas(x_nchw, *params, eps=1e-5):
    """NCHW adapter matching the PyTorch module interface (x: (N,C,H,W)).

    TODO(synk): in a full NHWC-resident model these two transposes (and the
    f32 cast) disappear; they exist only to present the PyTorch NCHW contract.
    """
    x_nhwc = jnp.transpose(x_nchw, (0, 2, 3, 1))
    out = bottleneck_pallas_nhwc(x_nhwc, *params, eps=eps)
    return jnp.transpose(out.astype(jnp.float32), (0, 3, 1, 2))


def bottleneck_reference(x, w1, g1, be1, rm1, rv1, w2, g2, be2, rm2, rv2,
                         w3, g3, be3, rm3, rv3, eps=1e-5):
    """Plain-JAX f32 reference of the PyTorch Bottleneck forward (NCHW)."""
    def conv(inp, w, pad):
        return lax.conv_general_dilated(
            inp, w, window_strides=(1, 1), padding=((pad, pad), (pad, pad)),
            dimension_numbers=("NCHW", "OIHW", "NCHW"))

    def bn(inp, g, b, m, v):
        return ((inp - m[None, :, None, None])
                / jnp.sqrt(v + eps)[None, :, None, None]
                * g[None, :, None, None] + b[None, :, None, None])

    out = jax.nn.relu(bn(conv(x, w1, 0), g1, be1, rm1, rv1))
    out = jax.nn.relu(bn(conv(out, w2, 1), g2, be2, rm2, rv2))
    out = bn(conv(out, w3, 0), g3, be3, rm3, rv3)
    return jax.nn.relu(out + x)


if __name__ == "__main__":
    key = jax.random.PRNGKey(0)
    ks = jax.random.split(key, 16)

    # Bottleneck(inplanes=32, planes=8): width=8, out channels = planes*4 = 32
    N, planes, H, W = 2, 8, 16, 16
    width = planes
    Cin = Cout = planes * 4

    x = jax.random.normal(ks[0], (N, Cin, H, W), jnp.float32)

    # conv weights (PyTorch layout: out_ch, in_ch, kh, kw), bias=False
    w1 = jax.random.normal(ks[1], (width, Cin, 1, 1), jnp.float32) * 0.1
    w2 = jax.random.normal(ks[2], (width, width, 3, 3), jnp.float32) * 0.1
    w3 = jax.random.normal(ks[3], (Cout, width, 1, 1), jnp.float32) * 0.1

    def bn_params(kg, kb, km, kv, c):
        g = jax.random.uniform(kg, (c,), jnp.float32, 0.5, 1.5)
        b = jax.random.normal(kb, (c,), jnp.float32) * 0.1
        m = jax.random.normal(km, (c,), jnp.float32) * 0.1
        v = jax.random.uniform(kv, (c,), jnp.float32, 0.5, 1.5)
        return g, b, m, v

    g1, be1, rm1, rv1 = bn_params(ks[4], ks[5], ks[6], ks[7], width)
    g2, be2, rm2, rv2 = bn_params(ks[8], ks[9], ks[10], ks[11], width)
    g3, be3, rm3, rv3 = bn_params(ks[12], ks[13], ks[14], ks[15], Cout)

    out = bottleneck_pallas(x, w1, g1, be1, rm1, rv1, w2, g2, be2, rm2, rv2,
                            w3, g3, be3, rm3, rv3)
    out = jax.block_until_ready(out)

    # Reference consumes the same bf16-quantized activations the kernel sees;
    # kernel output is bf16 (inference), hence the loose tolerance.
    x_q = x.astype(jnp.bfloat16).astype(jnp.float32)
    ref = bottleneck_reference(x_q, w1, g1, be1, rm1, rv1, w2, g2, be2, rm2, rv2,
                               w3, g3, be3, rm3, rv3)

    assert out.shape == (N, Cout, H, W)
    assert jnp.allclose(out, ref, atol=5e-2, rtol=5e-2), \
        f"max err {jnp.max(jnp.abs(out - ref))}"

    print("KERNEL_OK")
</pallas_src>

<mosaic_0001>
module attributes {stable_mosaic.version = 11 : i64} {
  func.func @_bottleneck_kernel(%arg0: i32, %arg1: memref<1x16x16x32xbf16, #tpu.memory_space<vmem>>, %arg2: memref<32x128xbf16, #tpu.memory_space<vmem>>, %arg3: memref<1x128xf32, #tpu.memory_space<vmem>>, %arg4: memref<9x128x128xbf16, #tpu.memory_space<vmem>>, %arg5: memref<1x128xf32, #tpu.memory_space<vmem>>, %arg6: memref<128x32xbf16, #tpu.memory_space<vmem>>, %arg7: memref<1x32xf32, #tpu.memory_space<vmem>>, %arg8: memref<1x16x16x32xbf16, #tpu.memory_space<vmem>>, %arg9: memref<18x18x128xbf16, #tpu.memory_space<vmem>>) attributes {dimension_semantics = [#tpu.dimension_semantics<parallel>], iteration_bounds = array<i64: 2>, scalar_prefetch = 0 : i64, scratch_operands = 1 : i64, tpu.core_type = #tpu.core_type<tc>, window_params = [{transform_indices = @transform_0, window_bounds = array<i64: 1, 16, 16, 32>}, {pipeline_mode = #tpu.pipeline_mode<synchronous>, transform_indices = @transform_1, window_bounds = array<i64: 32, 128>}, {pipeline_mode = #tpu.pipeline_mode<synchronous>, transform_indices = @transform_2, window_bounds = array<i64: 1, 128>}, {pipeline_mode = #tpu.pipeline_mode<synchronous>, transform_indices = @transform_3, window_bounds = array<i64: 9, 128, 128>}, {pipeline_mode = #tpu.pipeline_mode<synchronous>, transform_indices = @transform_4, window_bounds = array<i64: 1, 128>}, {pipeline_mode = #tpu.pipeline_mode<synchronous>, transform_indices = @transform_5, window_bounds = array<i64: 128, 32>}, {pipeline_mode = #tpu.pipeline_mode<synchronous>, transform_indices = @transform_6, window_bounds = array<i64: 1, 32>}, {transform_indices = @transform_7, window_bounds = array<i64: 1, 16, 16, 32>}]} {
    %c0 = arith.constant 0 : index
    %c0_0 = arith.constant 0 : index
    %c0_1 = arith.constant 0 : index
    %c0_2 = arith.constant 0 : index
    %0 = vector.load %arg1[%c0, %c0_0, %c0_1, %c0_2] : memref<1x16x16x32xbf16, #tpu.memory_space<vmem>>, vector<1x16x16x32xbf16>
    %1 = vector.shape_cast %0 : vector<1x16x16x32xbf16> to vector<16x16x32xbf16>
    %2 = vector.shape_cast %1 : vector<16x16x32xbf16> to vector<256x32xbf16>
    %c0_3 = arith.constant 0 : index
    %c0_4 = arith.constant 0 : index
    %3 = vector.load %arg2[%c0_3, %c0_4] : memref<32x128xbf16, #tpu.memory_space<vmem>>, vector<32x128xbf16>
    %cst = arith.constant dense<0.000000e+00> : vector<256x128xf32>
    %4 = tpu.matmul %2, %3, %cst {dimension_numbers = #tpu.dot_dimension_numbers<[1], [0], [0], [1], [0, 0, 1, 1], [], []>} : vector<256x32xbf16>, vector<32x128xbf16>, vector<256x128xf32> -> vector<256x128xf32>
    %c0_5 = arith.constant 0 : index
    %c0_6 = arith.constant 0 : index
    %5 = vector.load %arg3[%c0_5, %c0_6] : memref<1x128xf32, #tpu.memory_space<vmem>>, vector<1x128xf32>
    %6 = vector.broadcast %5 : vector<1x128xf32> to vector<256x128xf32>
    %7 = arith.addf %4, %6 : vector<256x128xf32>
    %cst_7 = arith.constant 0.000000e+00 : f32
    %8 = vector.broadcast %cst_7 : f32 to vector<256x128xf32>
    %9 = arith.maximumf %7, %8 : vector<256x128xf32>
    %10 = arith.truncf %9 : vector<256x128xf32> to vector<256x128xbf16>
    %cst_8 = arith.constant 0.000000e+00 : bf16
    %11 = vector.broadcast %cst_8 : bf16 to vector<1x18x128xbf16>
    %cst_9 = arith.constant 0.000000e+00 : bf16
    %12 = vector.broadcast %cst_9 : bf16 to vector<16x1x128xbf16>
    %c0_10 = arith.constant 0 : index
    %c0_11 = arith.constant 0 : index
    %c0_12 = arith.constant 0 : index
    %13 = vector.load %arg9[%c0_10, %c0_11, %c0_12] : memref<18x18x128xbf16, #tpu.memory_space<vmem>>, vector<1x18x128xbf16>
    tpu.vector_store %arg9[%c0_10, %c0_11, %c0_12], %11 {strides = array<i32>} : memref<18x18x128xbf16, #tpu.memory_space<vmem>>, vector<1x18x128xbf16>,
    %c17 = arith.constant 17 : index
    %c0_13 = arith.constant 0 : index
    %c0_14 = arith.constant 0 : index
    %14 = vector.load %arg9[%c17, %c0_13, %c0_14] : memref<18x18x128xbf16, #tpu.memory_space<vmem>>, vector<1x18x128xbf16>
    tpu.vector_store %arg9[%c17, %c0_13, %c0_14], %11 {strides = array<i32>} : memref<18x18x128xbf16, #tpu.memory_space<vmem>>, vector<1x18x128xbf16>,
    %c1 = arith.constant 1 : index
    %c0_15 = arith.constant 0 : index
    %c0_16 = arith.constant 0 : index
    %15 = vector.load %arg9[%c1, %c0_15, %c0_16] : memref<18x18x128xbf16, #tpu.memory_space<vmem>>, vector<16x1x128xbf16>
    tpu.vector_store %arg9[%c1, %c0_15, %c0_16], %12 {strides = array<i32>} : memref<18x18x128xbf16, #tpu.memory_space<vmem>>, vector<16x1x128xbf16>,
    %c1_17 = arith.constant 1 : index
    %c17_18 = arith.constant 17 : index
    %c0_19 = arith.constant 0 : index
    %16 = vector.load %arg9[%c1_17, %c17_18, %c0_19] : memref<18x18x128xbf16, #tpu.memory_space<vmem>>, vector<16x1x128xbf16>
    tpu.vector_store %arg9[%c1_17, %c17_18, %c0_19], %12 {strides = array<i32>} : memref<18x18x128xbf16, #tpu.memory_space<vmem>>, vector<16x1x128xbf16>,
    %17 = vector.shape_cast %10 : vector<256x128xbf16> to vector<16x16x128xbf16>
    %c1_20 = arith.constant 1 : index
    %c1_21 = arith.constant 1 : index
    %c0_22 = arith.constant 0 : index
    %18 = vector.load %arg9[%c1_20, %c1_21, %c0_22] : memref<18x18x128xbf16, #tpu.memory_space<vmem>>, vector<16x16x128xbf16>
    tpu.vector_store %arg9[%c1_20, %c1_21, %c0_22], %17 {strides = array<i32>} : memref<18x18x128xbf16, #tpu.memory_space<vmem>>, vector<16x16x128xbf16>,
    %c0_23 = arith.constant 0 : index
    %c0_24 = arith.constant 0 : index
    %c0_25 = arith.constant 0 : index
    %19 = vector.load %arg9[%c0_23, %c0_24, %c0_25] : memref<18x18x128xbf16, #tpu.memory_space<vmem>>, vector<16x16x128xbf16>
    %20 = vector.shape_cast %19 : vector<16x16x128xbf16> to vector<256x128xbf16>
    %c0_26 = arith.constant 0 : index
    %c0_27 = arith.constant 0 : index
    %c0_28 = arith.constant 0 : index
    %21 = vector.load %arg4[%c0_26, %c0_27, %c0_28] : memref<9x128x128xbf16, #tpu.memory_space<vmem>>, vector<1x128x128xbf16>
    %22 = vector.shape_cast %21 : vector<1x128x128xbf16> to vector<128x128xbf16>
    %cst_29 = arith.constant dense<0.000000e+00> : vector<256x128xf32>
    %23 = tpu.matmul %20, %22, %cst_29 {dimension_numbers = #tpu.dot_dimension_numbers<[1], [0], [0], [1], [0, 0, 1, 1], [], []>} : vector<256x128xbf16>, vector<128x128xbf16>, vector<256x128xf32> -> vector<256x128xf32>
    %c0_30 = arith.constant 0 : index
    %c1_31 = arith.constant 1 : index
    %c0_32 = arith.constant 0 : index
    %24 = vector.load %arg9[%c0_30, %c1_31, %c0_32] : memref<18x18x128xbf16, #tpu.memory_space<vmem>>, vector<16x16x128xbf16>
    %25 = vector.shape_cast %24 : vector<16x16x128xbf16> to vector<256x128xbf16>
    %c1_33 = arith.constant 1 : index
    %c0_34 = arith.constant 0 : index
    %c0_35 = arith.constant 0 : index
    %26 = vector.load %arg4[%c1_33, %c0_34, %c0_35] : memref<9x128x128xbf16, #tpu.memory_space<vmem>>, vector<1x128x128xbf16>
    %27 = vector.shape_cast %26 : vector<1x128x128xbf16> to vector<128x128xbf16>
    %cst_36 = arith.constant dense<0.000000e+00> : vector<256x128xf32>
    %28 = tpu.matmul %25, %27, %cst_36 {dimension_numbers = #tpu.dot_dimension_numbers<[1], [0], [0], [1], [0, 0, 1, 1], [], []>} : vector<256x128xbf16>, vector<128x128xbf16>, vector<256x128xf32> -> vector<256x128xf32>
    %29 = arith.addf %23, %28 : vector<256x128xf32>
    %c0_37 = arith.constant 0 : index
    %c2 = arith.constant 2 : index
    %c0_38 = arith.constant 0 : index
    %30 = vector.load %arg9[%c0_37, %c2, %c0_38] : memref<18x18x128xbf16, #tpu.memory_space<vmem>>, vector<16x16x128xbf16>
    %31 = vector.shape_cast %30 : vector<16x16x128xbf16> to vector<256x128xbf16>
    %c2_39 = arith.constant 2 : index
    %c0_40 = arith.constant 0 : index
    %c0_41 = arith.constant 0 : index
    %32 = vector.load %arg4[%c2_39, %c0_40, %c0_41] : memref<9x128x128xbf16, #tpu.memory_space<vmem>>, vector<1x128x128xbf16>
    %33 = vector.shape_cast %32 : vector<1x128x128xbf16> to vector<128x128xbf16>
    %cst_42 = arith.constant dense<0.000000e+00> : vector<256x128xf32>
    %34 = tpu.matmul %31, %33, %cst_42 {dimension_numbers = #tpu.dot_dimension_numbers<[1], [0], [0], [1], [0, 0, 1, 1], [], []>} : vector<256x128xbf16>, vector<128x128xbf16>, vector<256x128xf32> -> vector<256x128xf32>
    %35 = arith.addf %29, %34 : vector<256x128xf32>
    %c1_43 = arith.constant 1 : index
    %c0_44 = arith.constant 0 : index
    %c0_45 = arith.constant 0 : index
    %36 = vector.load %arg9[%c1_43, %c0_44, %c0_45] : memref<18x18x128xbf16, #tpu.memory_space<vmem>>, vector<16x16x128xbf16>
    %37 = vector.shape_cast %36 : vector<16x16x128xbf16> to vector<256x128xbf16>
    %c3 = arith.constant 3 : index
    %c0_46 = arith.constant 0 : index
    %c0_47 = arith.constant 0 : index
    %38 = vector.load %arg4[%c3, %c0_46, %c0_47] : memref<9x128x128xbf16, #tpu.memory_space<vmem>>, vector<1x128x128xbf16>
    %39 = vector.shape_cast %38 : vector<1x128x128xbf16> to vector<128x128xbf16>
    %cst_48 = arith.constant dense<0.000000e+00> : vector<256x128xf32>
    %40 = tpu.matmul %37, %39, %cst_48 {dimension_numbers = #tpu.dot_dimension_numbers<[1], [0], [0], [1], [0, 0, 1, 1], [], []>} : vector<256x128xbf16>, vector<128x128xbf16>, vector<256x128xf32> -> vector<256x128xf32>
    %41 = arith.addf %35, %40 : vector<256x128xf32>
    %c1_49 = arith.constant 1 : index
    %c1_50 = arith.constant 1 : index
    %c0_51 = arith.constant 0 : index
    %42 = vector.load %arg9[%c1_49, %c1_50, %c0_51] : memref<18x18x128xbf16, #tpu.memory_space<vmem>>, vector<16x16x128xbf16>
    %43 = vector.shape_cast %42 : vector<16x16x128xbf16> to vector<256x128xbf16>
    %c4 = arith.constant 4 : index
    %c0_52 = arith.constant 0 : index
    %c0_53 = arith.constant 0 : index
    %44 = vector.load %arg4[%c4, %c0_52, %c0_53] : memref<9x128x128xbf16, #tpu.memory_space<vmem>>, vector<1x128x128xbf16>
    %45 = vector.shape_cast %44 : vector<1x128x128xbf16> to vector<128x128xbf16>
    %cst_54 = arith.constant dense<0.000000e+00> : vector<256x128xf32>
    %46 = tpu.matmul %43, %45, %cst_54 {dimension_numbers = #tpu.dot_dimension_numbers<[1], [0], [0], [1], [0, 0, 1, 1], [], []>} : vector<256x128xbf16>, vector<128x128xbf16>, vector<256x128xf32> -> vector<256x128xf32>
    %47 = arith.addf %41, %46 : vector<256x128xf32>
    %c1_55 = arith.constant 1 : index
    %c2_56 = arith.constant 2 : index
    %c0_57 = arith.constant 0 : index
    %48 = vector.load %arg9[%c1_55, %c2_56, %c0_57] : memref<18x18x128xbf16, #tpu.memory_space<vmem>>, vector<16x16x128xbf16>
    %49 = vector.shape_cast %48 : vector<16x16x128xbf16> to vector<256x128xbf16>
    %c5 = arith.constant 5 : index
    %c0_58 = arith.constant 0 : index
    %c0_59 = arith.constant 0 : index
    %50 = vector.load %arg4[%c5, %c0_58, %c0_59] : memref<9x128x128xbf16, #tpu.memory_space<vmem>>, vector<1x128x128xbf16>
    %51 = vector.shape_cast %50 : vector<1x128x128xbf16> to vector<128x128xbf16>
    %cst_60 = arith.constant dense<0.000000e+00> : vector<256x128xf32>
    %52 = tpu.matmul %49, %51, %cst_60 {dimension_numbers = #tpu.dot_dimension_numbers<[1], [0], [0], [1], [0, 0, 1, 1], [], []>} : vector<256x128xbf16>, vector<128x128xbf16>, vector<256x128xf32> -> vector<256x128xf32>
    %53 = arith.addf %47, %52 : vector<256x128xf32>
    %c2_61 = arith.constant 2 : index
    %c0_62 = arith.constant 0 : index
    %c0_63 = arith.constant 0 : index
    %54 = vector.load %arg9[%c2_61, %c0_62, %c0_63] : memref<18x18x128xbf16, #tpu.memory_space<vmem>>, vector<16x16x128xbf16>
    %55 = vector.shape_cast %54 : vector<16x16x128xbf16> to vector<256x128xbf16>
    %c6 = arith.constant 6 : index
    %c0_64 = arith.constant 0 : index
    %c0_65 = arith.constant 0 : index
    %56 = vector.load %arg4[%c6, %c0_64, %c0_65] : memref<9x128x128xbf16, #tpu.memory_space<vmem>>, vector<1x128x128xbf16>
    %57 = vector.shape_cast %56 : vector<1x128x128xbf16> to vector<128x128xbf16>
    %cst_66 = arith.constant dense<0.000000e+00> : vector<256x128xf32>
    %58 = tpu.matmul %55, %57, %cst_66 {dimension_numbers = #tpu.dot_dimension_numbers<[1], [0], [0], [1], [0, 0, 1, 1], [], []>} : vector<256x128xbf16>, vector<128x128xbf16>, vector<256x128xf32> -> vector<256x128xf32>
    %59 = arith.addf %53, %58 : vector<256x128xf32>
    %c2_67 = arith.constant 2 : index
    %c1_68 = arith.constant 1 : index
    %c0_69 = arith.constant 0 : index
    %60 = vector.load %arg9[%c2_67, %c1_68, %c0_69] : memref<18x18x128xbf16, #tpu.memory_space<vmem>>, vector<16x16x128xbf16>
    %61 = vector.shape_cast %60 : vector<16x16x128xbf16> to vector<256x128xbf16>
    %c7 = arith.constant 7 : index
    %c0_70 = arith.constant 0 : index
    %c0_71 = arith.constant 0 : index
    %62 = vector.load %arg4[%c7, %c0_70, %c0_71] : memref<9x128x128xbf16, #tpu.memory_space<vmem>>, vector<1x128x128xbf16>
    %63 = vector.shape_cast %62 : vector<1x128x128xbf16> to vector<128x128xbf16>
    %cst_72 = arith.constant dense<0.000000e+00> : vector<256x128xf32>
    %64 = tpu.matmul %61, %63, %cst_72 {dimension_numbers = #tpu.dot_dimension_numbers<[1], [0], [0], [1], [0, 0, 1, 1], [], []>} : vector<256x128xbf16>, vector<128x128xbf16>, vector<256x128xf32> -> vector<256x128xf32>
    %65 = arith.addf %59, %64 : vector<256x128xf32>
    %c2_73 = arith.constant 2 : index
    %c2_74 = arith.constant 2 : index
    %c0_75 = arith.constant 0 : index
    %66 = vector.load %arg9[%c2_73, %c2_74, %c0_75] : memref<18x18x128xbf16, #tpu.memory_space<vmem>>, vector<16x16x128xbf16>
    %67 = vector.shape_cast %66 : vector<16x16x128xbf16> to vector<256x128xbf16>
    %c8 = arith.constant 8 : index
    %c0_76 = arith.constant 0 : index
    %c0_77 = arith.constant 0 : index
    %68 = vector.load %arg4[%c8, %c0_76, %c0_77] : memref<9x128x128xbf16, #tpu.memory_space<vmem>>, vector<1x128x128xbf16>
    %69 = vector.shape_cast %68 : vector<1x128x128xbf16> to vector<128x128xbf16>
    %cst_78 = arith.constant dense<0.000000e+00> : vector<256x128xf32>
    %70 = tpu.matmul %67, %69, %cst_78 {dimension_numbers = #tpu.dot_dimension_numbers<[1], [0], [0], [1], [0, 0, 1, 1], [], []>} : vector<256x128xbf16>, vector<128x128xbf16>, vector<256x128xf32> -> vector<256x128xf32>
    %71 = arith.addf %65, %70 : vector<256x128xf32>
    %c0_79 = arith.constant 0 : index
    %c0_80 = arith.constant 0 : index
    %72 = vector.load %arg5[%c0_79, %c0_80] : memref<1x128xf32, #tpu.memory_space<vmem>>, vector<1x128xf32>
    %73 = vector.broadcast %72 : vector<1x128xf32> to vector<256x128xf32>
    %74 = arith.addf %71, %73 : vector<256x128xf32>
    %cst_81 = arith.constant 0.000000e+00 : f32
    %75 = vector.broadcast %cst_81 : f32 to vector<256x128xf32>
    %76 = arith.maximumf %74, %75 : vector<256x128xf32>
    %77 = arith.truncf %76 : vector<256x128xf32> to vector<256x128xbf16>
    %c0_82 = arith.constant 0 : index
    %c0_83 = arith.constant 0 : index
    %78 = vector.load %arg6[%c0_82, %c0_83] : memref<128x32xbf16, #tpu.memory_space<vmem>>, vector<128x32xbf16>
    %cst_84 = arith.constant dense<0.000000e+00> : vector<256x32xf32>
    %79 = tpu.matmul %77, %78, %cst_84 {dimension_numbers = #tpu.dot_dimension_numbers<[1], [0], [0], [1], [0, 0, 1, 1], [], []>} : vector<256x128xbf16>, vector<128x32xbf16>, vector<256x32xf32> -> vector<256x32xf32>
    %c0_85 = arith.constant 0 : index
    %c0_86 = arith.constant 0 : index
    %80 = vector.load %arg7[%c0_85, %c0_86] : memref<1x32xf32, #tpu.memory_space<vmem>>, vector<1x32xf32>
    %81 = vector.broadcast %80 : vector<1x32xf32> to vector<256x32xf32>
    %82 = arith.addf %79, %81 : vector<256x32xf32>
    %83 = arith.extf %2 : vector<256x32xbf16> to vector<256x32xf32>
    %84 = arith.addf %82, %83 : vector<256x32xf32>
    %cst_87 = arith.constant 0.000000e+00 : f32
    %85 = vector.broadcast %cst_87 : f32 to vector<256x32xf32>
    %86 = arith.maximumf %84, %85 : vector<256x32xf32>
    %87 = arith.truncf %86 : vector<256x32xf32> to vector<256x32xbf16>
    %88 = vector.shape_cast %87 : vector<256x32xbf16> to vector<1x16x16x32xbf16>
    %c0_88 = arith.constant 0 : index
    %c0_89 = arith.constant 0 : index
    %c0_90 = arith.constant 0 : index
    %c0_91 = arith.constant 0 : index
    %89 = vector.load %arg8[%c0_88, %c0_89, %c0_90, %c0_91] : memref<1x16x16x32xbf16, #tpu.memory_space<vmem>>, vector<1x16x16x32xbf16>
    tpu.vector_store %arg8[%c0_88, %c0_89, %c0_90, %c0_91], %88 {strides = array<i32>} : memref<1x16x16x32xbf16, #tpu.memory_space<vmem>>, vector<1x16x16x32xbf16>,
    return
  }
  func.func @transform_0(%arg0: i32) -> (i32, i32, i32, i32) {
    %c0_i32 = arith.constant 0 : i32
    %c0_i32_0 = arith.constant 0 : i32
    %c0_i32_1 = arith.constant 0 : i32
    %c0_i32_2 = arith.constant 0 : i32
    return %arg0, %c0_i32, %c0_i32_0, %c0_i32_1 : i32, i32, i32, i32
  }
  func.func @transform_1(%arg0: i32) -> (i32, i32) {
    %c0_i32 = arith.constant 0 : i32
    %c0_i32_0 = arith.constant 0 : i32
    %c0_i32_1 = arith.constant 0 : i32
    return %c0_i32, %c0_i32_0 : i32, i32
  }
  func.func @transform_2(%arg0: i32) -> (i32, i32) {
    %c0_i32 = arith.constant 0 : i32
    %c0_i32_0 = arith.constant 0 : i32
    %c0_i32_1 = arith.constant 0 : i32
    return %c0_i32, %c0_i32_0 : i32, i32
  }
  func.func @transform_3(%arg0: i32) -> (i32, i32, i32) {
    %c0_i32 = arith.constant 0 : i32
    %c0_i32_0 = arith.constant 0 : i32
    %c0_i32_1 = arith.constant 0 : i32
    %c0_i32_2 = arith.constant 0 : i32
    return %c0_i32, %c0_i32_0, %c0_i32_1 : i32, i32, i32
  }
  func.func @transform_4(%arg0: i32) -> (i32, i32) {
    %c0_i32 = arith.constant 0 : i32
    %c0_i32_0 = arith.constant 0 : i32
    %c0_i32_1 = arith.constant 0 : i32
    return %c0_i32, %c0_i32_0 : i32, i32
  }
  func.func @transform_5(%arg0: i32) -> (i32, i32) {
    %c0_i32 = arith.constant 0 : i32
    %c0_i32_0 = arith.constant 0 : i32
    %c0_i32_1 = arith.constant 0 : i32
    return %c0_i32, %c0_i32_0 : i32, i32
  }
  func.func @transform_6(%arg0: i32) -> (i32, i32) {
    %c0_i32 = arith.constant 0 : i32
    %c0_i32_0 = arith.constant 0 : i32
    %c0_i32_1 = arith.constant 0 : i32
    return %c0_i32, %c0_i32_0 : i32, i32
  }
  func.func @transform_7(%arg0: i32) -> (i32, i32, i32, i32) {
    %c0_i32 = arith.constant 0 : i32
    %c0_i32_0 = arith.constant 0 : i32
    %c0_i32_1 = arith.constant 0 : i32
    %c0_i32_2 = arith.constant 0 : i32
    return %arg0, %c0_i32, %c0_i32_0, %c0_i32_1 : i32, i32, i32, i32
  }
}

</mosaic_0001>

<llo_original>
// kernel: tpu_custom_call.1
$region0: #{tpu_custom_call.1}
  #allocation0 [shape = 'u32[]', space=smem, size = 0x4, offset = 0x4, fixed_abs, tag = 'smem constant byte address 0x4 - core index']
  #allocation1 [shape = 'u32[144,128]{1,0:T(1,128)}', space=vmem, size = 0x12000, scoped, tag = 'internal scratch']
  #allocation2 [shape = 'bf16[18,18,128]{2,1,0:T(8,128)(2,1)}', space=vmem, size = 0x1b000, scoped, tag = 'scratch operand']
  %s0 = inlined_call_operand.hbm [shape: bf16[2,16,16,32], index: 0, kind: input, shape index: {}]
  %s1 = inlined_call_operand.vmem [shape: bf16[32,128], index: 1, kind: input, shape index: {}]
  %s2 = inlined_call_operand.vmem [shape: f32[1,128], index: 2, kind: input, shape index: {}]
  %s3 = inlined_call_operand.hbm [shape: bf16[9,128,128], index: 3, kind: input, shape index: {}]
  %s4 = inlined_call_operand.vmem [shape: f32[1,128], index: 4, kind: input, shape index: {}]
  %s5 = inlined_call_operand.vmem [shape: bf16[128,32], index: 5, kind: input, shape index: {}]
  %s6 = inlined_call_operand.vmem [shape: f32[1,32], index: 6, kind: input, shape index: {}]
  %s7 = inlined_call_operand.hbm [shape: bf16[2,16,16,32], index: 7, kind: output, shape index: {}]
  %s8 = sld [smem:[#allocation0]]
  $region69: #{tpu_custom_call.1} parent=0
    _
  %s10 = ssub.s32 1, %s8
  %s11 = scalar_select 0, %s10, %s8
  $region1: #{tpu_custom_call.1} parent=0
    #allocation3 [shape = 'u8[131072]{0}', space=vmem, size = 0x20000, scoped, tag = 'input window, operand 0']
    #allocation4 [shape = 's32[2]{0}', space=sflag, size = 0x8, scoped, tag = 'scoped memory for tpu_custom_call.1']
    #allocation5 [shape = 's32[2]{0}', space=sflag, size = 0x8, scoped, tag = 'scoped memory for tpu_custom_call.1']
    #allocation6 [shape = 'u8[294912]{0}', space=vmem, size = 0x48000, scoped, tag = 'input window, operand 3, single buffered']
    #allocation7 [shape = 's32[1]{0}', space=sflag, size = 0x4, scoped, tag = 'scoped memory for tpu_custom_call.1']
    #allocation8 [shape = 'u8[131072]{0}', space=vmem, size = 0x20000, scoped, tag = 'output window, operand 0']
    %12 = vsyncpa [#allocation4], 0
    %s13 = scalar_lea.sflag [#allocation4], 1
    %14 = vsyncpa %s13, 0
    %15 = vsyncpa [#allocation7], 0
    %16 = vsyncpa [#allocation5], 0
    %s17 = scalar_lea.sflag [#allocation5], 1
    %18 = vsyncpa %s17, 0
    loop: start=0, step=1, limit=4
    $region2: #{tpu_custom_call.1} parent=1 // loop_pre_header
      _
    $region3: #{tpu_custom_call.1} parent=1 // loop_header
      %s20 = sphi 0, %s24
      %p21 = scmp.ge.s32.totalorder %s20, 4
      %s30 = sphi 0, %s32
      %s33 = sphi 0, %s30
      %s34 = sphi 0, %s33
      %s50 = sphi 0, %s34
      %s54 = sphi 0, %s54
      %s56 = sphi 0, %s54
      %s57 = sphi 0, %s56
      %s71 = sphi 0, %s57
      %s75 = sphi 0, %s75
      %s77 = sphi 0, %s75
      %s78 = sphi 0, %s77
      %s92 = sphi 0, %s78
      %s96 = sphi 0, %s96
      %s98 = sphi 0, %s96
      %s99 = sphi 0, %s98
      %s113 = sphi 0, %s99
      %s117 = sphi 0, %s117
      %s119 = sphi 0, %s117
      %s120 = sphi 0, %s119
      %s134 = sphi 0, %s120
      %s138 = sphi 0, %s138
      %s140 = sphi 0, %s138
      %s141 = sphi 0, %s140
      %s155 = sphi 0, %s141
      %s159 = sphi 0, %s159
      %s161 = sphi 0, %s159
      %s162 = sphi 0, %s161
      %s176 = sphi 0, %s162
      %s182 = sphi 0, %s184
      %s185 = sphi 0, %s182
      %s186 = sphi 0, %s185
      %s202 = sphi 0, %s186
    $region4: #{tpu_custom_call.1} parent=1 // loop_header_branch
      %23 = sbr.rel (%p21) target = $region8
    $region5: #{tpu_custom_call.1} parent=1 // loop_body
      %s25 = ssub.s32 %s20, 1
      %s26 = ssub.s32 %s20, 2
      %s27 = sadd.s32 %s20, 1
      %s28 = ssub.s32 %s20, %s27
      %p29 = scmp.eq.s32.totalorder %s28, 0
      %s31 = sadd.s32 %s30, 1
      %s32 = scalar_select %p29, %s30, %s31
      %p35 = pneg %p29
      %p36 = scmp.eq.s32.totalorder %s20, 1
      %p37 = por %p35, %p36
      %p38 = scmp.ne.s32.totalorder %s30, %s33
      %p39 = scmp.eq.s32.totalorder %s20, 0
      %p40 = por %p38, %p39
      %p41 = scmp.ne.s32.totalorder %s30, %s33
      %p42 = scmp.eq.s32.totalorder %s25, 1
      %p43 = por %p41, %p42
      %p44 = scmp.ne.s32.totalorder %s33, %s34
      %p45 = scmp.eq.s32.totalorder %s25, 0
      %p46 = por %p44, %p45
      %p47 = scmp.ne.s32.totalorder %s33, %s34
      %p48 = scmp.eq.s32.totalorder %s26, 1
      %p49 = por %p47, %p48
      %p51 = scmp.ne.s32.totalorder %s34, %s50
      %p52 = scmp.eq.s32.totalorder %s26, 0
      %p53 = por %p51, %p52
      %s55 = sadd.s32 %s54, 1
      %p58 = scmp.eq.s32.totalorder %s20, 1
      %p59 = scmp.ne.s32.totalorder %s54, %s56
      %p60 = scmp.eq.s32.totalorder %s20, 0
      %p61 = por %p59, %p60
      %p62 = scmp.ne.s32.totalorder %s54, %s56
      %p63 = scmp.eq.s32.totalorder %s25, 1
      %p64 = por %p62, %p63
      %p65 = scmp.ne.s32.totalorder %s56, %s57
      %p66 = scmp.eq.s32.totalorder %s25, 0
      %p67 = por %p65, %p66
      %p68 = scmp.ne.s32.totalorder %s56, %s57
      %p69 = scmp.eq.s32.totalorder %s26, 1
      %p70 = por %p68, %p69
      %p72 = scmp.ne.s32.totalorder %s57, %s71
      %p73 = scmp.eq.s32.totalorder %s26, 0
      %p74 = por %p72, %p73
      %s76 = sadd.s32 %s75, 1
      %p79 = scmp.eq.s32.totalorder %s20, 1
      %p80 = scmp.ne.s32.totalorder %s75, %s77
      %p81 = scmp.eq.s32.totalorder %s20, 0
      %p82 = por %p80, %p81
      %p83 = scmp.ne.s32.totalorder %s75, %s77
      %p84 = scmp.eq.s32.totalorder %s25, 1
      %p85 = por %p83, %p84
      %p86 = scmp.ne.s32.totalorder %s77, %s78
      %p87 = scmp.eq.s32.totalorder %s25, 0
      %p88 = por %p86, %p87
      %p89 = scmp.ne.s32.totalorder %s77, %s78
      %p90 = scmp.eq.s32.totalorder %s26, 1
      %p91 = por %p89, %p90
      %p93 = scmp.ne.s32.totalorder %s78, %s92
      %p94 = scmp.eq.s32.totalorder %s26, 0
      %p95 = por %p93, %p94
      %s97 = sadd.s32 %s96, 1
      %p100 = scmp.eq.s32.totalorder %s20, 1
      %p101 = scmp.ne.s32.totalorder %s96, %s98
      %p102 = scmp.eq.s32.totalorder %s20, 0
      %p103 = por %p101, %p102
      %p104 = scmp.ne.s32.totalorder %s96, %s98
      %p105 = scmp.eq.s32.totalorder %s25, 1
      %p106 = por %p104, %p105
      %p107 = scmp.ne.s32.totalorder %s98, %s99
      %p108 = scmp.eq.s32.totalorder %s25, 0
      %p109 = por %p107, %p108
      %p110 = scmp.ne.s32.totalorder %s98, %s99
      %p111 = scmp.eq.s32.totalorder %s26, 1
      %p112 = por %p110, %p111
      %p114 = scmp.ne.s32.totalorder %s99, %s113
      %p115 = scmp.eq.s32.totalorder %s26, 0
      %p116 = por %p114, %p115
      %s118 = sadd.s32 %s117, 1
      %p121 = scmp.eq.s32.totalorder %s20, 1
      %p122 = scmp.ne.s32.totalorder %s117, %s119
      %p123 = scmp.eq.s32.totalorder %s20, 0
      %p124 = por %p122, %p123
      %p125 = scmp.ne.s32.totalorder %s117, %s119
      %p126 = scmp.eq.s32.totalorder %s25, 1
      %p127 = por %p125, %p126
      %p128 = scmp.ne.s32.totalorder %s119, %s120
      %p129 = scmp.eq.s32.totalorder %s25, 0
      %p130 = por %p128, %p129
      %p131 = scmp.ne.s32.totalorder %s119, %s120
      %p132 = scmp.eq.s32.totalorder %s26, 1
      %p133 = por %p131, %p132
      %p135 = scmp.ne.s32.totalorder %s120, %s134
      %p136 = scmp.eq.s32.totalorder %s26, 0
      %p137 = por %p135, %p136
      %s139 = sadd.s32 %s138, 1
      %p142 = scmp.eq.s32.totalorder %s20, 1
      %p143 = scmp.ne.s32.totalorder %s138, %s140
      %p144 = scmp.eq.s32.totalorder %s20, 0
      %p145 = por %p143, %p144
      %p146 = scmp.ne.s32.totalorder %s138, %s140
      %p147 = scmp.eq.s32.totalorder %s25, 1
      %p148 = por %p146, %p147
      %p149 = scmp.ne.s32.totalorder %s140, %s141
      %p150 = scmp.eq.s32.totalorder %s25, 0
      %p151 = por %p149, %p150
      %p152 = scmp.ne.s32.totalorder %s140, %s141
      %p153 = scmp.eq.s32.totalorder %s26, 1
      %p154 = por %p152, %p153
      %p156 = scmp.ne.s32.totalorder %s141, %s155
      %p157 = scmp.eq.s32.totalorder %s26, 0
      %p158 = por %p156, %p157
      %s160 = sadd.s32 %s159, 1
      %p163 = scmp.eq.s32.totalorder %s20, 1
      %p164 = scmp.ne.s32.totalorder %s159, %s161
      %p165 = scmp.eq.s32.totalorder %s20, 0
      %p166 = por %p164, %p165
      %p167 = scmp.ne.s32.totalorder %s159, %s161
      %p168 = scmp.eq.s32.totalorder %s25, 1
      %p169 = por %p167, %p168
      %p170 = scmp.ne.s32.totalorder %s161, %s162
      %p171 = scmp.eq.s32.totalorder %s25, 0
      %p172 = por %p170, %p171
      %p173 = scmp.ne.s32.totalorder %s161, %s162
      %p174 = scmp.eq.s32.totalorder %s26, 1
      %p175 = por %p173, %p174
      %p177 = scmp.ne.s32.totalorder %s162, %s176
      %p178 = scmp.eq.s32.totalorder %s26, 0
      %p179 = por %p177, %p178
      %s180 = ssub.s32 %s20, %s27
      %p181 = scmp.eq.s32.totalorder %s180, 0
      %s183 = sadd.s32 %s182, 1
      %s184 = scalar_select %p181, %s182, %s183
      %p187 = pneg %p181
      %p188 = scmp.eq.s32.totalorder %s20, 1
      %p189 = por %p187, %p188
      %p190 = scmp.ne.s32.totalorder %s182, %s185
      %p191 = scmp.eq.s32.totalorder %s20, 0
      %p192 = por %p190, %p191
      %p193 = scmp.ne.s32.totalorder %s182, %s185
      %p194 = scmp.eq.s32.totalorder %s25, 1
      %p195 = por %p193, %p194
      %p196 = scmp.ne.s32.totalorder %s185, %s186
      %p197 = scmp.eq.s32.totalorder %s25, 0
      %p198 = por %p196, %p197
      %p199 = scmp.ne.s32.totalorder %s185, %s186
      %p200 = scmp.eq.s32.totalorder %s26, 1
      %p201 = por %p199, %p200
      %p203 = scmp.ne.s32.totalorder %s186, %s202
      %p204 = scmp.eq.s32.totalorder %s26, 0
      %p205 = por %p203, %p204
      %p206 = scmp.le.s32.totalorder 1, %s20
      %p207 = scmp.lt.s32.totalorder %s20, 3
      %p208 = pnand %p206, %p207
      %p209 = pneg %p208
      // Predicated region
      $region9: #{tpu_custom_call.1} parent=5 // pred_check
        _
      $region10: #{tpu_custom_call.1} parent=5 // pred_check_branch
        %211 = sbr.rel (%p208) target = $region12
      $region11: #{tpu_custom_call.1} parent=5 // pred_region
        %s212 = ssub.s32 %s20, 1
        // Predicated region
        $region13: #{tpu_custom_call.1} parent=11 // pred_check
          %p213 = pneg %p67
        $region14: #{tpu_custom_call.1} parent=11 // pred_check_branch
          %215 = sbr.rel (%p213) target = $region16
        $region15: #{tpu_custom_call.1} parent=11 // pred_region
          _
        $region16: #{tpu_custom_call.1} parent=11 // pred_fallthru
          _
        // Predicated region
        $region17: #{tpu_custom_call.1} parent=11 // pred_check
          %p216 = pneg %p88
        $region18: #{tpu_custom_call.1} parent=11 // pred_check_branch
          %218 = sbr.rel (%p216) target = $region20
        $region19: #{tpu_custom_call.1} parent=11 // pred_region
          _
        $region20: #{tpu_custom_call.1} parent=11 // pred_fallthru
          _
        // Predicated region
        $region21: #{tpu_custom_call.1} parent=11 // pred_check
          %p219 = pneg %p109
        $region22: #{tpu_custom_call.1} parent=11 // pred_check_branch
          %221 = sbr.rel (%p219) target = $region24
        $region23: #{tpu_custom_call.1} parent=11 // pred_region
          %s223 = ssub.s32 9216, 9216
          %224 = vsyncadd [#allocation7], %s223
          %s225 = sshll.u32 [#allocation6], 4
          %s226 = int_to_ptr.vmem [resolvable:$true] %s225
          %231 = dma.hbm_to_vmem [thread:$0]  %s3, 9216, %s226, [#allocation7], 64, 64, 4
        $region24: #{tpu_custom_call.1} parent=11 // pred_fallthru
          _
        // Predicated region
        $region25: #{tpu_custom_call.1} parent=11 // pred_check
          %p232 = pneg %p130
        $region26: #{tpu_custom_call.1} parent=11 // pred_check_branch
          %234 = sbr.rel (%p232) target = $region28
        $region27: #{tpu_custom_call.1} parent=11 // pred_region
          _
        $region28: #{tpu_custom_call.1} parent=11 // pred_fallthru
          _
        // Predicated region
        $region29: #{tpu_custom_call.1} parent=11 // pred_check
          %p235 = pneg %p151
        $region30: #{tpu_custom_call.1} parent=11 // pred_check_branch
          %237 = sbr.rel (%p235) target = $region32
        $region31: #{tpu_custom_call.1} parent=11 // pred_region
          _
        $region32: #{tpu_custom_call.1} parent=11 // pred_fallthru
          _
        // Predicated region
        $region33: #{tpu_custom_call.1} parent=11 // pred_check
          %p238 = pneg %p172
        $region34: #{tpu_custom_call.1} parent=11 // pred_check_branch
          %240 = sbr.rel (%p238) target = $region36
        $region35: #{tpu_custom_call.1} parent=11 // pred_region
          _
        $region36: #{tpu_custom_call.1} parent=11 // pred_fallthru
          _
      $region12: #{tpu_custom_call.1} parent=5 // pred_fallthru
        _
      %p241 = scmp.lt.s32.totalorder %s20, 2
      // Predicated region
      $region37: #{tpu_custom_call.1} parent=5 // pred_check
        %p242 = pneg %p241
      $region38: #{tpu_custom_call.1} parent=5 // pred_check_branch
        %244 = sbr.rel (%p242) target = $region40
      $region39: #{tpu_custom_call.1} parent=5 // pred_region
        // Predicated region
        $region41: #{tpu_custom_call.1} parent=39 // pred_check
          %p245 = pneg %p40
        $region42: #{tpu_custom_call.1} parent=39 // pred_check_branch
          %247 = sbr.rel (%p245) target = $region44
        $region43: #{tpu_custom_call.1} parent=39 // pred_region
          %s248 = sand.u32 %s30, 1
          %s249 = scalar_lea.sflag [#allocation4], %s248
          %s250 = sand.u32 %s30, 1
          %s251 = smul.addr %s250, 128
          %s252 = scalar_lea.vmem [#allocation3], %s251
          %s254 = ssub.s32 2048, 2048
          %255 = vsyncadd %s249, %s254
          %s256 = smul.addr %s20, 32
          %s257 = smul.addr %s256, 64
          %s258 = scalar_lea.hbm %s0, %s257
          %s259 = sshll.u32 %s252, 4
          %s260 = int_to_ptr.vmem [resolvable:$true] %s259
          %265 = dma.hbm_to_vmem [thread:$0]  %s258, 2048, %s260, %s249, 64, 64, 4
        $region44: #{tpu_custom_call.1} parent=39 // pred_fallthru
          _
      $region40: #{tpu_custom_call.1} parent=5 // pred_fallthru
        _
      %p266 = scmp.le.s32.totalorder 1, %s20
      %p267 = scmp.lt.s32.totalorder %s20, 3
      %p268 = pnand %p266, %p267
      %p269 = pneg %p268
      // Predicated region
      $region45: #{tpu_custom_call.1} parent=5 // pred_check
        _
      $region46: #{tpu_custom_call.1} parent=5 // pred_check_branch
        %271 = sbr.rel (%p268) target = $region48
      $region47: #{tpu_custom_call.1} parent=5 // pred_region
        %s272 = ssub.s32 %s20, 1
        %s273 = sand.u32 %s33, 1
        %s274 = scalar_lea.sflag [#allocation4], %s273
        %s275 = sand.u32 %s33, 1
        %s276 = smul.addr %s275, 128
        %s277 = scalar_lea.vmem [#allocation3], %s276
        // Predicated region
        $region49: #{tpu_custom_call.1} parent=47 // pred_check
          %p278 = pneg %p46
        $region50: #{tpu_custom_call.1} parent=47 // pred_check_branch
          %280 = sbr.rel (%p278) target = $region52
        $region51: #{tpu_custom_call.1} parent=47 // pred_region
          %281 = dma.done %s274, 2048
        $region52: #{tpu_custom_call.1} parent=47 // pred_fallthru
          _
        // Predicated region
        $region53: #{tpu_custom_call.1} parent=47 // pred_check
          %p282 = pneg %p109
        $region54: #{tpu_custom_call.1} parent=47 // pred_check_branch
          %284 = sbr.rel (%p282) target = $region56
        $region55: #{tpu_custom_call.1} parent=47 // pred_region
          %285 = dma.done [#allocation7], 9216
        $region56: #{tpu_custom_call.1} parent=47 // pred_fallthru
          _
        %s286 = sand.u32 %s33, 1
        %s287 = scalar_lea.sflag [#allocation4], %s286
        %s288 = sand.u32 %s33, 1
        %s289 = smul.addr %s288, 128
        %s290 = scalar_lea.vmem [#allocation3], %s289
        %p291 = pneg %p46
        %p292 = pneg %p43
        %p293 = pneg %p67
        %p294 = pneg %p64
        %p295 = pneg %p88
        %p296 = pneg %p85
        %p297 = pneg %p109
        %p298 = pneg %p106
        %p299 = pneg %p130
        %p300 = pneg %p127
        %p301 = pneg %p151
        %p302 = pneg %p148
        %p303 = pneg %p172
        %p304 = pneg %p169
        %p305 = pneg %p198
        %p306 = pneg %p195
        %s307 = sand.u32 %s185, 1
        %s308 = scalar_lea.sflag [#allocation5], %s307
        %s309 = sand.u32 %s185, 1
        %s310 = smul.addr %s309, 128
        %s311 = scalar_lea.vmem [#allocation8], %s310
        %v313 = vld [vmem:[%s277] sm:$0xf]
        %v314 = vld [vmem:[%s277 + $0x4] sm:$0xf]
        %v315 = vld [vmem:[%s277 + $0x8] sm:$0xf]
        %v316 = vld [vmem:[%s277 + $0xc] sm:$0xf]
        %v317 = vld [vmem:[%s277 + $0x10] sm:$0xf]
        %v318 = vld [vmem:[%s277 + $0x14] sm:$0xf]
        %v319 = vld [vmem:[%s277 + $0x18] sm:$0xf]
        %v320 = vld [vmem:[%s277 + $0x1c] sm:$0xf]
        %v321 = vld [vmem:[%s277 + $0x20] sm:$0xf]
        %v322 = vld [vmem:[%s277 + $0x24] sm:$0xf]
        %v323 = vld [vmem:[%s277 + $0x28] sm:$0xf]
        %v324 = vld [vmem:[%s277 + $0x2c] sm:$0xf]
        %v325 = vld [vmem:[%s277 + $0x30] sm:$0xf]
        %v326 = vld [vmem:[%s277 + $0x34] sm:$0xf]
        %v327 = vld [vmem:[%s277 + $0x38] sm:$0xf]
        %v328 = vld [vmem:[%s277 + $0x3c] sm:$0xf]
        %v329 = vld [vmem:[%s277 + $0x40] sm:$0xf]
        %v330 = vld [vmem:[%s277 + $0x44] sm:$0xf]
        %v331 = vld [vmem:[%s277 + $0x48] sm:$0xf]
        %v332 = vld [vmem:[%s277 + $0x4c] sm:$0xf]
        %v333 = vld [vmem:[%s277 + $0x50] sm:$0xf]
        %v334 = vld [vmem:[%s277 + $0x54] sm:$0xf]
        %v335 = vld [vmem:[%s277 + $0x58] sm:$0xf]
        %v336 = vld [vmem:[%s277 + $0x5c] sm:$0xf]
        %v337 = vld [vmem:[%s277 + $0x60] sm:$0xf]
        %v338 = vld [vmem:[%s277 + $0x64] sm:$0xf]
        %v339 = vld [vmem:[%s277 + $0x68] sm:$0xf]
        %v340 = vld [vmem:[%s277 + $0x6c] sm:$0xf]
        %v341 = vld [vmem:[%s277 + $0x70] sm:$0xf]
        %v342 = vld [vmem:[%s277 + $0x74] sm:$0xf]
        %v343 = vld [vmem:[%s277 + $0x78] sm:$0xf]
        %v344 = vld [vmem:[%s277 + $0x7c] sm:$0xf]
        %v345 = vld [vmem:[%s1] sm:$0xf]
        %v346 = vld [vmem:[%s1 + $0x4] sm:$0xf]
        %v347 = vld [vmem:[%s1 + $0x8] sm:$0xf]
        %v348 = vld [vmem:[%s1 + $0xc] sm:$0xf]
        %v349 = vld [vmem:[%s2] sm:$0x1]
        %v351 = vlaneseq
        %v352 = vshrl.u32 %v351, 7
        %v353 = vsub.s32 0, %v352
        %v354 = vrot.slane %v349, %v353
        %v388 = vunpack.c.l.b16 %v313
        %v389 = vunpack.c.l.b16 %v314
        %v390 = vunpack.c.l.b16 %v315
        %v391 = vunpack.c.l.b16 %v316
        %v392 = vunpack.c.l.b16 %v317
        %v393 = vunpack.c.l.b16 %v318
        %v394 = vunpack.c.l.b16 %v319
        %v395 = vunpack.c.l.b16 %v320
        %v396 = vunpack.c.l.b16 %v321
        %v397 = vunpack.c.l.b16 %v322
        %v398 = vunpack.c.l.b16 %v323
        %v399 = vunpack.c.l.b16 %v324
        %v400 = vunpack.c.l.b16 %v325
        %v401 = vunpack.c.l.b16 %v326
        %v402 = vunpack.c.l.b16 %v327
        %v403 = vunpack.c.l.b16 %v328
        %v404 = vunpack.c.l.b16 %v329
        %v405 = vunpack.c.l.b16 %v330
        %v406 = vunpack.c.l.b16 %v331
        %v407 = vunpack.c.l.b16 %v332
        %v408 = vunpack.c.l.b16 %v333
        %v409 = vunpack.c.l.b16 %v334
        %v410 = vunpack.c.l.b16 %v335
        %v411 = vunpack.c.l.b16 %v336
        %v412 = vunpack.c.l.b16 %v337
        %v413 = vunpack.c.l.b16 %v338
        %v414 = vunpack.c.l.b16 %v339
        %v415 = vunpack.c.l.b16 %v340
        %v416 = vunpack.c.l.b16 %v341
        %v417 = vunpack.c.l.b16 %v342
        %v418 = vunpack.c.l.b16 %v343
        %v419 = vunpack.c.l.b16 %v344
        %v420 = vpack.c.b16 %v389, %v388
        %v421 = vpack.c.b16 %v391, %v390
        %v422 = vpack.c.b16 %v393, %v392
        %v423 = vpack.c.b16 %v395, %v394
        %v424 = vpack.c.b16 %v397, %v396
        %v425 = vpack.c.b16 %v399, %v398
        %v426 = vpack.c.b16 %v401, %v400
        %v427 = vpack.c.b16 %v403, %v402
        %v428 = vpack.c.b16 %v405, %v404
        %v429 = vpack.c.b16 %v407, %v406
        %v430 = vpack.c.b16 %v409, %v408
        %v431 = vpack.c.b16 %v411, %v410
        %v432 = vpack.c.b16 %v413, %v412
        %v433 = vpack.c.b16 %v415, %v414
        %v434 = vpack.c.b16 %v417, %v416
        %v435 = vpack.c.b16 %v419, %v418
        %v440 = vunpack.c.l.b16 %v345
        %v441 = vunpack.c.l.b16 %v346
        %v442 = vunpack.c.l.b16 %v347
        %v443 = vunpack.c.l.b16 %v348
        %v444 = vpack.c.b16 %v441, %v440
        %v445 = vpack.c.b16 %v443, %v442
        %vm448 = vcmask 261120
        %v450 = vsel %vm448, %v420, 0
        %v453 = vsel %vm448, %v421, 0
        %v456 = vsel %vm448, %v422, 0
        %v459 = vsel %vm448, %v423, 0
        %v462 = vsel %vm448, %v424, 0
        %v465 = vsel %vm448, %v425, 0
        %v468 = vsel %vm448, %v426, 0
        %v471 = vsel %vm448, %v427, 0
        %v474 = vsel %vm448, %v428, 0
        %v477 = vsel %vm448, %v429, 0
        %v480 = vsel %vm448, %v430, 0
        %v483 = vsel %vm448, %v431, 0
        %v486 = vsel %vm448, %v432, 0
        %v489 = vsel %vm448, %v433, 0
        %v492 = vsel %vm448, %v434, 0
        %v495 = vsel %vm448, %v435, 0
        %497 = vmatprep.subr.bf16.mxu0 0
        %498 = vmatpush1.bf16.msra.mxu0 %v444
        %499 = vmatprep.subr.bf16.mxu0 0
        %500 = vmatpush1.bf16.msra.mxu0 %v445
        %501 = vmatprep.subr.bf16.mxu0 0
        %502 = vmatpush1.bf16.msra.mxu0 0
        %503 = vmatprep.subr.bf16.mxu0 0
        %504 = vmatpush1.bf16.msra.mxu0 0
        %505 = vmatprep.subr.bf16.mxu0 0
        %506 = vmatpush1.bf16.msra.mxu0 0
        %507 = vmatprep.subr.bf16.mxu0 0
        %508 = vmatpush1.bf16.msra.mxu0 0
        %509 = vmatprep.subr.bf16.mxu0 0
        %510 = vmatpush1.bf16.msra.mxu0 0
        %511 = vmatprep.subr.bf16.mxu0 0
        %512 = vmatpush1.bf16.msra.mxu0 0
        %513 = vmatprep.subr.bf16.mxu0 0
        %514 = vmatpush1.bf16.msra.mxu0 0
        %515 = vmatprep.subr.bf16.mxu0 0
        %516 = vmatpush1.bf16.msra.mxu0 0
        %517 = vmatprep.subr.bf16.mxu0 0
        %518 = vmatpush1.bf16.msra.mxu0 0
        %519 = vmatprep.subr.bf16.mxu0 0
        %520 = vmatpush1.bf16.msra.mxu0 0
        %521 = vmatprep.subr.bf16.mxu0 0
        %522 = vmatpush1.bf16.msra.mxu0 0
        %523 = vmatprep.subr.bf16.mxu0 0
        %524 = vmatpush1.bf16.msra.mxu0 0
        %525 = vmatprep.subr.bf16.mxu0 0
        %526 = vmatpush1.bf16.msra.mxu0 0
        %527 = vmatprep.subr.bf16.mxu0 0
        %528 = vmatpush1.bf16.msra.mxu0 0
        %529 = vmatprep.mubr.bf16.mxu0 0
        %530 = vmatmul.mubr.bf16.gmra.mrb[0].mxu0 %v450
        %v531 = vpop.f32.mrb[0].mxu0
        %v532 = vadd.f32 %v354, %v531
        %v533 = vpop.f32.mrb[0].mxu0
        %v534 = vpop.f32.mrb[0].mxu0
        %v535 = vadd.f32 %v354, %v534
        %v536 = vpop.f32.mrb[0].mxu0
        %537 = vmatprep.mubr.bf16.mxu0 0
        %538 = vmatmul.mubr.bf16.gmra.mrb[0].mxu0 %v453
        %v539 = vpop.f32.mrb[0].mxu0
        %v540 = vadd.f32 %v354, %v539
        %v541 = vpop.f32.mrb[0].mxu0
        %v542 = vpop.f32.mrb[0].mxu0
        %v543 = vadd.f32 %v354, %v542
        %v544 = vpop.f32.mrb[0].mxu0
        %545 = vmatprep.mubr.bf16.mxu0 0
        %546 = vmatmul.mubr.bf16.gmra.mrb[0].mxu0 %v456
        %v547 = vpop.f32.mrb[0].mxu0
        %v548 = vadd.f32 %v354, %v547
        %v549 = vpop.f32.mrb[0].mxu0
        %v550 = vpop.f32.mrb[0].mxu0
        %v551 = vadd.f32 %v354, %v550
        %v552 = vpop.f32.mrb[0].mxu0
        %553 = vmatprep.mubr.bf16.mxu0 0
        %554 = vmatmul.mubr.bf16.gmra.mrb[0].mxu0 %v459
        %v555 = vpop.f32.mrb[0].mxu0
        %v556 = vadd.f32 %v354, %v555
        %v557 = vpop.f32.mrb[0].mxu0
        %v558 = vpop.f32.mrb[0].mxu0
        %v559 = vadd.f32 %v354, %v558
        %v560 = vpop.f32.mrb[0].mxu0
        %561 = vmatprep.mubr.bf16.mxu0 0
        %562 = vmatmul.mubr.bf16.gmra.mrb[0].mxu0 %v462
        %v563 = vpop.f32.mrb[0].mxu0
        %v564 = vadd.f32 %v354, %v563
        %v565 = vpop.f32.mrb[0].mxu0
        %v566 = vpop.f32.mrb[0].mxu0
        %v567 = vadd.f32 %v354, %v566
        %v568 = vpop.f32.mrb[0].mxu0
        %569 = vmatprep.mubr.bf16.mxu0 0
        %570 = vmatmul.mubr.bf16.gmra.mrb[0].mxu0 %v465
        %v571 = vpop.f32.mrb[0].mxu0
        %v572 = vadd.f32 %v354, %v571
        %v573 = vpop.f32.mrb[0].mxu0
        %v574 = vpop.f32.mrb[0].mxu0
        %v575 = vadd.f32 %v354, %v574
        %v576 = vpop.f32.mrb[0].mxu0
        %577 = vmatprep.mubr.bf16.mxu0 0
        %578 = vmatmul.mubr.bf16.gmra.mrb[0].mxu0 %v468
        %v579 = vpop.f32.mrb[0].mxu0
        %v580 = vadd.f32 %v354, %v579
        %v581 = vpop.f32.mrb[0].mxu0
        %v582 = vpop.f32.mrb[0].mxu0
        %v583 = vadd.f32 %v354, %v582
        %v584 = vpop.f32.mrb[0].mxu0
        %585 = vmatprep.mubr.bf16.mxu0 0
        %586 = vmatmul.mubr.bf16.gmra.mrb[0].mxu0 %v471
        %v587 = vpop.f32.mrb[0].mxu0
        %v588 = vadd.f32 %v354, %v587
        %v589 = vpop.f32.mrb[0].mxu0
        %v590 = vpop.f32.mrb[0].mxu0
        %v591 = vadd.f32 %v354, %v590
        %v592 = vpop.f32.mrb[0].mxu0
        %593 = vmatprep.mubr.bf16.mxu0 0
        %594 = vmatmul.mubr.bf16.gmra.mrb[0].mxu0 %v474
        %v595 = vpop.f32.mrb[0].mxu0
        %v596 = vadd.f32 %v354, %v595
        %v597 = vpop.f32.mrb[0].mxu0
        %v598 = vpop.f32.mrb[0].mxu0
        %v599 = vadd.f32 %v354, %v598
        %v600 = vpop.f32.mrb[0].mxu0
        %601 = vmatprep.mubr.bf16.mxu0 0
        %602 = vmatmul.mubr.bf16.gmra.mrb[0].mxu0 %v477
        %v603 = vpop.f32.mrb[0].mxu0
        %v604 = vadd.f32 %v354, %v603
        %v605 = vpop.f32.mrb[0].mxu0
        %v606 = vpop.f32.mrb[0].mxu0
        %v607 = vadd.f32 %v354, %v606
        %v608 = vpop.f32.mrb[0].mxu0
        %609 = vmatprep.mubr.bf16.mxu0 0
        %610 = vmatmul.mubr.bf16.gmra.mrb[0].mxu0 %v480
        %v611 = vpop.f32.mrb[0].mxu0
        %v612 = vadd.f32 %v354, %v611
        %v613 = vpop.f32.mrb[0].mxu0
        %v614 = vpop.f32.mrb[0].mxu0
        %v615 = vadd.f32 %v354, %v614
        %v616 = vpop.f32.mrb[0].mxu0
        %617 = vmatprep.mubr.bf16.mxu0 0
        %618 = vmatmul.mubr.bf16.gmra.mrb[0].mxu0 %v483
        %v619 = vpop.f32.mrb[0].mxu0
        %v620 = vadd.f32 %v354, %v619
        %v621 = vpop.f32.mrb[0].mxu0
        %v622 = vpop.f32.mrb[0].mxu0
        %v623 = vadd.f32 %v354, %v622
        %v624 = vpop.f32.mrb[0].mxu0
        %625 = vmatprep.mubr.bf16.mxu0 0
        %626 = vmatmul.mubr.bf16.gmra.mrb[0].mxu0 %v486
        %v627 = vpop.f32.mrb[0].mxu0
        %v628 = vadd.f32 %v354, %v627
        %v629 = vpop.f32.mrb[0].mxu0
        %v630 = vpop.f32.mrb[0].mxu0
        %v631 = vadd.f32 %v354, %v630
        %v632 = vpop.f32.mrb[0].mxu0
        %633 = vmatprep.mubr.bf16.mxu0 0
        %634 = vmatmul.mubr.bf16.gmra.mrb[0].mxu0 %v489
        %v635 = vpop.f32.mrb[0].mxu0
        %v636 = vadd.f32 %v354, %v635
        %v637 = vpop.f32.mrb[0].mxu0
        %v638 = vpop.f32.mrb[0].mxu0
        %v639 = vadd.f32 %v354, %v638
        %v640 = vpop.f32.mrb[0].mxu0
        %641 = vmatprep.mubr.bf16.mxu0 0
        %642 = vmatmul.mubr.bf16.gmra.mrb[0].mxu0 %v492
        %v643 = vpop.f32.mrb[0].mxu0
        %v644 = vadd.f32 %v354, %v643
        %v645 = vpop.f32.mrb[0].mxu0
        %v646 = vpop.f32.mrb[0].mxu0
        %v647 = vadd.f32 %v354, %v646
        %v648 = vpop.f32.mrb[0].mxu0
        %649 = vmatprep.mubr.bf16.mxu0 0
        %650 = vmatmul.mubr.bf16.gmra.mrb[0].mxu0 %v495
        %v651 = vpop.f32.mrb[0].mxu0
        %v652 = vadd.f32 %v354, %v651
        %v653 = vpop.f32.mrb[0].mxu0
        %v654 = vpop.f32.mrb[0].mxu0
        %v655 = vadd.f32 %v354, %v654
        %v656 = vpop.f32.mrb[0].mxu0
        %657 = vdwg.mxu0
        %v658 = vmax.f32 %v532, 0.0
        %v659 = vmax.f32 %v535, 0.0
        %v660 = vmax.f32 %v540, 0.0
        %v661 = vmax.f32 %v543, 0.0
        %v662 = vmax.f32 %v548, 0.0
        %v663 = vmax.f32 %v551, 0.0
        %v664 = vmax.f32 %v556, 0.0
        %v665 = vmax.f32 %v559, 0.0
        %v666 = vmax.f32 %v564, 0.0
        %v667 = vmax.f32 %v567, 0.0
        %v668 = vmax.f32 %v572, 0.0
        %v669 = vmax.f32 %v575, 0.0
        %v670 = vmax.f32 %v580, 0.0
        %v671 = vmax.f32 %v583, 0.0
        %v672 = vmax.f32 %v588, 0.0
        %v673 = vmax.f32 %v591, 0.0
        %v674 = vmax.f32 %v596, 0.0
        %v675 = vmax.f32 %v599, 0.0
        %v676 = vmax.f32 %v604, 0.0
        %v677 = vmax.f32 %v607, 0.0
        %v678 = vmax.f32 %v612, 0.0
        %v679 = vmax.f32 %v615, 0.0
        %v680 = vmax.f32 %v620, 0.0
        %v681 = vmax.f32 %v623, 0.0
        %v682 = vmax.f32 %v628, 0.0
        %v683 = vmax.f32 %v631, 0.0
        %v684 = vmax.f32 %v636, 0.0
        %v685 = vmax.f32 %v639, 0.0
        %v686 = vmax.f32 %v644, 0.0
        %v687 = vmax.f32 %v647, 0.0
        %v688 = vmax.f32 %v652, 0.0
        %v689 = vmax.f32 %v655, 0.0
        %v690 = vpack.c.bf16 %v659, %v658
        %v691 = vpack.c.bf16 %v661, %v660
        %v692 = vpack.c.bf16 %v663, %v662
        %v693 = vpack.c.bf16 %v665, %v664
        %v694 = vpack.c.bf16 %v667, %v666
        %v695 = vpack.c.bf16 %v669, %v668
        %v696 = vpack.c.bf16 %v671, %v670
        %v697 = vpack.c.bf16 %v673, %v672
        %v698 = vpack.c.bf16 %v675, %v674
        %v699 = vpack.c.bf16 %v677, %v676
        %v700 = vpack.c.bf16 %v679, %v678
        %v701 = vpack.c.bf16 %v681, %v680
        %v702 = vpack.c.bf16 %v683, %v682
        %v703 = vpack.c.bf16 %v685, %v684
        %v704 = vpack.c.bf16 %v687, %v686
        %v705 = vpack.c.bf16 %v689, %v688
        %706 = vst [vmem:[#allocation2] sm:$0xf] 0
        %707 = vst [vmem:[#allocation2 + $0x4] sm:$0xf] 0
        %708 = vst [vmem:[#allocation2 + $0x8] sm:$0x1] 0
        %s709 = scalar_lea.vmem [#allocation2], 204
        %710 = vst [vmem:[%s709] sm:$0xf] 0
        %711 = vst [vmem:[%s709 + $0x4] sm:$0xf] 0
        %712 = vst [vmem:[%s709 + $0x8] sm:$0x1] 0
        %s713 = scalar_lea.vmem [#allocation2], 12
        %vm714 = vcmask 1040384
        %vm715 = vsmask.f32 256
        %vm716 = vmand %vm714, %vm715
        %v717 = vld [vmem:[%s713] sm:$0x1]
        %v718 = vsel %vm716, 0, %v717
        %719 = vst [vmem:[%s713] sm:$0x1] %v718
        %v720 = vld [vmem:[%s713 + $0xc] sm:$0x1]
        %v721 = vsel %vm716, 0, %v720
        %722 = vst [vmem:[%s713 + $0xc] sm:$0x1] %v721
        %v723 = vld [vmem:[%s713 + $0x18] sm:$0x1]
        %v724 = vsel %vm716, 0, %v723
        %725 = vst [vmem:[%s713 + $0x18] sm:$0x1] %v724
        %v726 = vld [vmem:[%s713 + $0x24] sm:$0x1]
        %v727 = vsel %vm716, 0, %v726
        %728 = vst [vmem:[%s713 + $0x24] sm:$0x1] %v727
        %v729 = vld [vmem:[%s713 + $0x30] sm:$0x1]
        %v730 = vsel %vm716, 0, %v729
        %731 = vst [vmem:[%s713 + $0x30] sm:$0x1] %v730
        %v732 = vld [vmem:[%s713 + $0x3c] sm:$0x1]
        %v733 = vsel %vm716, 0, %v732
        %734 = vst [vmem:[%s713 + $0x3c] sm:$0x1] %v733
        %v735 = vld [vmem:[%s713 + $0x48] sm:$0x1]
        %v736 = vsel %vm716, 0, %v735
        %737 = vst [vmem:[%s713 + $0x48] sm:$0x1] %v736
        %v738 = vld [vmem:[%s713 + $0x54] sm:$0x1]
        %v739 = vsel %vm716, 0, %v738
        %740 = vst [vmem:[%s713 + $0x54] sm:$0x1] %v739
        %v741 = vld [vmem:[%s713 + $0x60] sm:$0x1]
        %v742 = vsel %vm716, 0, %v741
        %743 = vst [vmem:[%s713 + $0x60] sm:$0x1] %v742
        %v744 = vld [vmem:[%s713 + $0x6c] sm:$0x1]
        %v745 = vsel %vm716, 0, %v744
        %746 = vst [vmem:[%s713 + $0x6c] sm:$0x1] %v745
        %v747 = vld [vmem:[%s713 + $0x78] sm:$0x1]
        %v748 = vsel %vm716, 0, %v747
        %749 = vst [vmem:[%s713 + $0x78] sm:$0x1] %v748
        %v750 = vld [vmem:[%s713 + $0x84] sm:$0x1]
        %v751 = vsel %vm716, 0, %v750
        %752 = vst [vmem:[%s713 + $0x84] sm:$0x1] %v751
        %v753 = vld [vmem:[%s713 + $0x90] sm:$0x1]
        %v754 = vsel %vm716, 0, %v753
        %755 = vst [vmem:[%s713 + $0x90] sm:$0x1] %v754
        %v756 = vld [vmem:[%s713 + $0x9c] sm:$0x1]
        %v757 = vsel %vm716, 0, %v756
        %758 = vst [vmem:[%s713 + $0x9c] sm:$0x1] %v757
        %v759 = vld [vmem:[%s713 + $0xa8] sm:$0x1]
        %v760 = vsel %vm716, 0, %v759
        %761 = vst [vmem:[%s713 + $0xa8] sm:$0x1] %v760
        %v762 = vld [vmem:[%s713 + $0xb4] sm:$0x1]
        %v763 = vsel %vm716, 0, %v762
        %764 = vst [vmem:[%s713 + $0xb4] sm:$0x1] %v763
        %vm765 = vsmask.f32 7938
        %vm766 = vmand %vm714, %vm765
        %v767 = vld [vmem:[%s713 + $0x8] sm:$0x1]
        %v768 = vsel %vm766, 0, %v767
        %769 = vst [vmem:[%s713 + $0x8] sm:$0x1] %v768
        %v770 = vld [vmem:[%s713 + $0x14] sm:$0x1]
        %v771 = vsel %vm766, 0, %v770
        %772 = vst [vmem:[%s713 + $0x14] sm:$0x1] %v771
        %v773 = vld [vmem:[%s713 + $0x20] sm:$0x1]
        %v774 = vsel %vm766, 0, %v773
        %775 = vst [vmem:[%s713 + $0x20] sm:$0x1] %v774
        %v776 = vld [vmem:[%s713 + $0x2c] sm:$0x1]
        %v777 = vsel %vm766, 0, %v776
        %778 = vst [vmem:[%s713 + $0x2c] sm:$0x1] %v777
        %v779 = vld [vmem:[%s713 + $0x38] sm:$0x1]
        %v780 = vsel %vm766, 0, %v779
        %781 = vst [vmem:[%s713 + $0x38] sm:$0x1] %v780
        %v782 = vld [vmem:[%s713 + $0x44] sm:$0x1]
        %v783 = vsel %vm766, 0, %v782
        %784 = vst [vmem:[%s713 + $0x44] sm:$0x1] %v783
        %v785 = vld [vmem:[%s713 + $0x50] sm:$0x1]
        %v786 = vsel %vm766, 0, %v785
        %787 = vst [vmem:[%s713 + $0x50] sm:$0x1] %v786
        %v788 = vld [vmem:[%s713 + $0x5c] sm:$0x1]
        %v789 = vsel %vm766, 0, %v788
        %790 = vst [vmem:[%s713 + $0x5c] sm:$0x1] %v789
        %v791 = vld [vmem:[%s713 + $0x68] sm:$0x1]
        %v792 = vsel %vm766, 0, %v791
        %793 = vst [vmem:[%s713 + $0x68] sm:$0x1] %v792
        %v794 = vld [vmem:[%s713 + $0x74] sm:$0x1]
        %v795 = vsel %vm766, 0, %v794
        %796 = vst [vmem:[%s713 + $0x74] sm:$0x1] %v795
        %v797 = vld [vmem:[%s713 + $0x80] sm:$0x1]
        %v798 = vsel %vm766, 0, %v797
        %799 = vst [vmem:[%s713 + $0x80] sm:$0x1] %v798
        %v800 = vld [vmem:[%s713 + $0x8c] sm:$0x1]
        %v801 = vsel %vm766, 0, %v800
        %802 = vst [vmem:[%s713 + $0x8c] sm:$0x1] %v801
        %v803 = vld [vmem:[%s713 + $0x98] sm:$0x1]
        %v804 = vsel %vm766, 0, %v803
        %805 = vst [vmem:[%s713 + $0x98] sm:$0x1] %v804
        %v806 = vld [vmem:[%s713 + $0xa4] sm:$0x1]
        %v807 = vsel %vm766, 0, %v806
        %808 = vst [vmem:[%s713 + $0xa4] sm:$0x1] %v807
        %v809 = vld [vmem:[%s713 + $0xb0] sm:$0x1]
        %v810 = vsel %vm766, 0, %v809
        %811 = vst [vmem:[%s713 + $0xb0] sm:$0x1] %v810
        %v812 = vld [vmem:[%s713 + $0xbc] sm:$0x1]
        %v813 = vsel %vm766, 0, %v812
        %814 = vst [vmem:[%s713 + $0xbc] sm:$0x1] %v813
        %v831 = vunpack.c.l.b16 %v690
        %v832 = vunpack.c.h.b16 %v690
        %v833 = vunpack.c.l.b16 %v691
        %v834 = vunpack.c.h.b16 %v691
        %v835 = vunpack.c.l.b16 %v692
        %v836 = vunpack.c.h.b16 %v692
        %v837 = vunpack.c.l.b16 %v693
        %v838 = vunpack.c.h.b16 %v693
        %v839 = vunpack.c.l.b16 %v694
        %v840 = vunpack.c.h.b16 %v694
        %v841 = vunpack.c.l.b16 %v695
        %v842 = vunpack.c.h.b16 %v695
        %v843 = vunpack.c.l.b16 %v696
        %v844 = vunpack.c.h.b16 %v696
        %v845 = vunpack.c.l.b16 %v697
        %v846 = vunpack.c.h.b16 %v697
        %v847 = vunpack.c.l.b16 %v698
        %v848 = vunpack.c.h.b16 %v698
        %v849 = vunpack.c.l.b16 %v699
        %v850 = vunpack.c.h.b16 %v699
        %v851 = vunpack.c.l.b16 %v700
        %v852 = vunpack.c.h.b16 %v700
        %v853 = vunpack.c.l.b16 %v701
        %v854 = vunpack.c.h.b16 %v701
        %v855 = vunpack.c.l.b16 %v702
        %v856 = vunpack.c.h.b16 %v702
        %v857 = vunpack.c.l.b16 %v703
        %v858 = vunpack.c.h.b16 %v703
        %v859 = vunpack.c.l.b16 %v704
        %v860 = vunpack.c.h.b16 %v704
        %v861 = vunpack.c.l.b16 %v705
        %v862 = vunpack.c.h.b16 %v705
        %v863 = vpack.c.b16 %v831, %v831
        %v864 = vpack.c.b16 %v832, %v832
        %v865 = vpack.c.b16 %v833, %v833
        %v866 = vpack.c.b16 %v834, %v834
        %v867 = vpack.c.b16 %v835, %v835
        %v868 = vpack.c.b16 %v836, %v836
        %v869 = vpack.c.b16 %v837, %v837
        %v870 = vpack.c.b16 %v838, %v838
        %v871 = vpack.c.b16 %v839, %v839
        %v872 = vpack.c.b16 %v840, %v840
        %v873 = vpack.c.b16 %v841, %v841
        %v874 = vpack.c.b16 %v842, %v842
        %v875 = vpack.c.b16 %v843, %v843
        %v876 = vpack.c.b16 %v844, %v844
        %v877 = vpack.c.b16 %v845, %v845
        %v878 = vpack.c.b16 %v846, %v846
        %v879 = vpack.c.b16 %v847, %v847
        %v880 = vpack.c.b16 %v848, %v848
        %v881 = vpack.c.b16 %v849, %v849
        %v882 = vpack.c.b16 %v850, %v850
        %v883 = vpack.c.b16 %v851, %v851
        %v884 = vpack.c.b16 %v852, %v852
        %v885 = vpack.c.b16 %v853, %v853
        %v886 = vpack.c.b16 %v854, %v854
        %v887 = vpack.c.b16 %v855, %v855
        %v888 = vpack.c.b16 %v856, %v856
        %v889 = vpack.c.b16 %v857, %v857
        %v890 = vpack.c.b16 %v858, %v858
        %v891 = vpack.c.b16 %v859, %v859
        %v892 = vpack.c.b16 %v860, %v860
        %v893 = vpack.c.b16 %v861, %v861
        %v894 = vpack.c.b16 %v862, %v862
        %vm895 = vsmask.f32 4368
        %vm896 = vmor %vm715, %vm895
        %v898 = vshrl.u32 %v863, 16
        %v900 = vrot.slane %v898, 7
        %v901 = vshll.u32 %v863, 16
        %v903 = vor.u32 %v900, %v901
        %v904 = vrot.slane %v900, 4
        %v906 = vshrl.u32 %v864, 16
        %v908 = vrot.slane %v906, 7
        %v909 = vshll.u32 %v864, 16
        %v911 = vor.u32 %v908, %v909
        %v912 = vsel %vm896, %v904, %v911
        %v913 = vrot.slane %v908, 4
        %v915 = vshrl.u32 %v865, 16
        %v917 = vrot.slane %v915, 7
        %v918 = vshll.u32 %v865, 16
        %v920 = vor.u32 %v917, %v918
        %v921 = vrot.slane %v917, 4
        %v923 = vshrl.u32 %v866, 16
        %v925 = vrot.slane %v923, 7
        %v926 = vshll.u32 %v866, 16
        %v928 = vor.u32 %v925, %v926
        %v929 = vsel %vm896, %v921, %v928
        %v930 = vrot.slane %v925, 4
        %v932 = vshrl.u32 %v867, 16
        %v934 = vrot.slane %v932, 7
        %v935 = vshll.u32 %v867, 16
        %v937 = vor.u32 %v934, %v935
        %v938 = vrot.slane %v934, 4
        %v940 = vshrl.u32 %v868, 16
        %v942 = vrot.slane %v940, 7
        %v943 = vshll.u32 %v868, 16
        %v945 = vor.u32 %v942, %v943
        %v946 = vsel %vm896, %v938, %v945
        %v947 = vrot.slane %v942, 4
        %v949 = vshrl.u32 %v869, 16
        %v951 = vrot.slane %v949, 7
        %v952 = vshll.u32 %v869, 16
        %v954 = vor.u32 %v951, %v952
        %v955 = vrot.slane %v951, 4
        %v957 = vshrl.u32 %v870, 16
        %v959 = vrot.slane %v957, 7
        %v960 = vshll.u32 %v870, 16
        %v962 = vor.u32 %v959, %v960
        %v963 = vsel %vm896, %v955, %v962
        %v964 = vrot.slane %v959, 4
        %v966 = vshrl.u32 %v871, 16
        %v968 = vrot.slane %v966, 7
        %v969 = vshll.u32 %v871, 16
        %v971 = vor.u32 %v968, %v969
        %v972 = vrot.slane %v968, 4
        %v974 = vshrl.u32 %v872, 16
        %v976 = vrot.slane %v974, 7
        %v977 = vshll.u32 %v872, 16
        %v979 = vor.u32 %v976, %v977
        %v980 = vsel %vm896, %v972, %v979
        %v981 = vrot.slane %v976, 4
        %v983 = vshrl.u32 %v873, 16
        %v985 = vrot.slane %v983, 7
        %v986 = vshll.u32 %v873, 16
        %v988 = vor.u32 %v985, %v986
        %v989 = vrot.slane %v985, 4
        %v991 = vshrl.u32 %v874, 16
        %v993 = vrot.slane %v991, 7
        %v994 = vshll.u32 %v874, 16
        %v996 = vor.u32 %v993, %v994
        %v997 = vsel %vm896, %v989, %v996
        %v998 = vrot.slane %v993, 4
        %v1000 = vshrl.u32 %v875, 16
        %v1002 = vrot.slane %v1000, 7
        %v1003 = vshll.u32 %v875, 16
        %v1005 = vor.u32 %v1002, %v1003
        %v1006 = vrot.slane %v1002, 4
        %v1008 = vshrl.u32 %v876, 16
        %v1010 = vrot.slane %v1008, 7
        %v1011 = vshll.u32 %v876, 16
        %v1013 = vor.u32 %v1010, %v1011
        %v1014 = vsel %vm896, %v1006, %v1013
        %v1015 = vrot.slane %v1010, 4
        %v1017 = vshrl.u32 %v877, 16
        %v1019 = vrot.slane %v1017, 7
        %v1020 = vshll.u32 %v877, 16
        %v1022 = vor.u32 %v1019, %v1020
        %v1023 = vrot.slane %v1019, 4
        %v1025 = vshrl.u32 %v878, 16
        %v1027 = vrot.slane %v1025, 7
        %v1028 = vshll.u32 %v878, 16
        %v1030 = vor.u32 %v1027, %v1028
        %v1031 = vsel %vm896, %v1023, %v1030
        %v1032 = vrot.slane %v1027, 4
        %v1034 = vshrl.u32 %v879, 16
        %v1036 = vrot.slane %v1034, 7
        %v1037 = vshll.u32 %v879, 16
        %v1039 = vor.u32 %v1036, %v1037
        %v1040 = vrot.slane %v1036, 4
        %v1042 = vshrl.u32 %v880, 16
        %v1044 = vrot.slane %v1042, 7
        %v1045 = vshll.u32 %v880, 16
        %v1047 = vor.u32 %v1044, %v1045
        %v1048 = vsel %vm896, %v1040, %v1047
        %v1049 = vrot.slane %v1044, 4
        %v1051 = vshrl.u32 %v881, 16
        %v1053 = vrot.slane %v1051, 7
        %v1054 = vshll.u32 %v881, 16
        %v1056 = vor.u32 %v1053, %v1054
        %v1057 = vrot.slane %v1053, 4
        %v1059 = vshrl.u32 %v882, 16
        %v1061 = vrot.slane %v1059, 7
        %v1062 = vshll.u32 %v882, 16
        %v1064 = vor.u32 %v1061, %v1062
        %v1065 = vsel %vm896, %v1057, %v1064
        %v1066 = vrot.slane %v1061, 4
        %v1068 = vshrl.u32 %v883, 16
        %v1070 = vrot.slane %v1068, 7
        %v1071 = vshll.u32 %v883, 16
        %v1073 = vor.u32 %v1070, %v1071
        %v1074 = vrot.slane %v1070, 4
        %v1076 = vshrl.u32 %v884, 16
        %v1078 = vrot.slane %v1076, 7
        %v1079 = vshll.u32 %v884, 16
        %v1081 = vor.u32 %v1078, %v1079
        %v1082 = vsel %vm896, %v1074, %v1081
        %v1083 = vrot.slane %v1078, 4
        %v1085 = vshrl.u32 %v885, 16
        %v1087 = vrot.slane %v1085, 7
        %v1088 = vshll.u32 %v885, 16
        %v1090 = vor.u32 %v1087, %v1088
        %v1091 = vrot.slane %v1087, 4
        %v1093 = vshrl.u32 %v886, 16
        %v1095 = vrot.slane %v1093, 7
        %v1096 = vshll.u32 %v886, 16
        %v1098 = vor.u32 %v1095, %v1096
        %v1099 = vsel %vm896, %v1091, %v1098
        %v1100 = vrot.slane %v1095, 4
        %v1102 = vshrl.u32 %v887, 16
        %v1104 = vrot.slane %v1102, 7
        %v1105 = vshll.u32 %v887, 16
        %v1107 = vor.u32 %v1104, %v1105
        %v1108 = vrot.slane %v1104, 4
        %v1110 = vshrl.u32 %v888, 16
        %v1112 = vrot.slane %v1110, 7
        %v1113 = vshll.u32 %v888, 16
        %v1115 = vor.u32 %v1112, %v1113
        %v1116 = vsel %vm896, %v1108, %v1115
        %v1117 = vrot.slane %v1112, 4
        %v1119 = vshrl.u32 %v889, 16
        %v1121 = vrot.slane %v1119, 7
        %v1122 = vshll.u32 %v889, 16
        %v1124 = vor.u32 %v1121, %v1122
        %v1125 = vrot.slane %v1121, 4
        %v1127 = vshrl.u32 %v890, 16
        %v1129 = vrot.slane %v1127, 7
        %v1130 = vshll.u32 %v890, 16
        %v1132 = vor.u32 %v1129, %v1130
        %v1133 = vsel %vm896, %v1125, %v1132
        %v1134 = vrot.slane %v1129, 4
        %v1136 = vshrl.u32 %v891, 16
        %v1138 = vrot.slane %v1136, 7
        %v1139 = vshll.u32 %v891, 16
        %v1141 = vor.u32 %v1138, %v1139
        %v1142 = vrot.slane %v1138, 4
        %v1144 = vshrl.u32 %v892, 16
        %v1146 = vrot.slane %v1144, 7
        %v1147 = vshll.u32 %v892, 16
        %v1149 = vor.u32 %v1146, %v1147
        %v1150 = vsel %vm896, %v1142, %v1149
        %v1151 = vrot.slane %v1146, 4
        %v1153 = vshrl.u32 %v893, 16
        %v1155 = vrot.slane %v1153, 7
        %v1156 = vshll.u32 %v893, 16
        %v1158 = vor.u32 %v1155, %v1156
        %v1159 = vrot.slane %v1155, 4
        %v1161 = vshrl.u32 %v894, 16
        %v1163 = vrot.slane %v1161, 7
        %v1164 = vshll.u32 %v894, 16
        %v1166 = vor.u32 %v1163, %v1164
        %v1167 = vsel %vm896, %v1159, %v1166
        %v1168 = vrot.slane %v1163, 4
        %vm1217 = vcmask 1043456
        %vm1218 = vmand %vm1217, %vm765
        %v1219 = vld [vmem:[%s713] sm:$0xf]
        %v1220 = vsel %vm1218, %v903, %v1219
        %1221 = vst [vmem:[%s713] sm:$0xf] %v1220
        %1222 = vst [vmem:[%s713 + $0x4] sm:$0xf] %v912
        %v1223 = vld [vmem:[%s713 + $0x8] sm:$0x1]
        %v1224 = vsel %vm716, %v913, %v1223
        %1225 = vst [vmem:[%s713 + $0x8] sm:$0x1] %v1224
        %v1226 = vld [vmem:[%s713 + $0xc] sm:$0xf]
        %v1227 = vsel %vm1218, %v920, %v1226
        %1228 = vst [vmem:[%s713 + $0xc] sm:$0xf] %v1227
        %1229 = vst [vmem:[%s713 + $0x10] sm:$0xf] %v929
        %v1230 = vld [vmem:[%s713 + $0x14] sm:$0x1]
        %v1231 = vsel %vm716, %v930, %v1230
        %1232 = vst [vmem:[%s713 + $0x14] sm:$0x1] %v1231
        %v1233 = vld [vmem:[%s713 + $0x18] sm:$0xf]
        %v1234 = vsel %vm1218, %v937, %v1233
        %1235 = vst [vmem:[%s713 + $0x18] sm:$0xf] %v1234
        %1236 = vst [vmem:[%s713 + $0x1c] sm:$0xf] %v946
        %v1237 = vld [vmem:[%s713 + $0x20] sm:$0x1]
        %v1238 = vsel %vm716, %v947, %v1237
        %1239 = vst [vmem:[%s713 + $0x20] sm:$0x1] %v1238
        %v1240 = vld [vmem:[%s713 + $0x24] sm:$0xf]
        %v1241 = vsel %vm1218, %v954, %v1240
        %1242 = vst [vmem:[%s713 + $0x24] sm:$0xf] %v1241
        %1243 = vst [vmem:[%s713 + $0x28] sm:$0xf] %v963
        %v1244 = vld [vmem:[%s713 + $0x2c] sm:$0x1]
        %v1245 = vsel %vm716, %v964, %v1244
        %1246 = vst [vmem:[%s713 + $0x2c] sm:$0x1] %v1245
        %v1247 = vld [vmem:[%s713 + $0x30] sm:$0xf]
        %v1248 = vsel %vm1218, %v971, %v1247
        %1249 = vst [vmem:[%s713 + $0x30] sm:$0xf] %v1248
        %1250 = vst [vmem:[%s713 + $0x34] sm:$0xf] %v980
        %v1251 = vld [vmem:[%s713 + $0x38] sm:$0x1]
        %v1252 = vsel %vm716, %v981, %v1251
        %1253 = vst [vmem:[%s713 + $0x38] sm:$0x1] %v1252
        %v1254 = vld [vmem:[%s713 + $0x3c] sm:$0xf]
        %v1255 = vsel %vm1218, %v988, %v1254
        %1256 = vst [vmem:[%s713 + $0x3c] sm:$0xf] %v1255
        %1257 = vst [vmem:[%s713 + $0x40] sm:$0xf] %v997
        %v1258 = vld [vmem:[%s713 + $0x44] sm:$0x1]
        %v1259 = vsel %vm716, %v998, %v1258
        %1260 = vst [vmem:[%s713 + $0x44] sm:$0x1] %v1259
        %v1261 = vld [vmem:[%s713 + $0x48] sm:$0xf]
        %v1262 = vsel %vm1218, %v1005, %v1261
        %1263 = vst [vmem:[%s713 + $0x48] sm:$0xf] %v1262
        %1264 = vst [vmem:[%s713 + $0x4c] sm:$0xf] %v1014
        %v1265 = vld [vmem:[%s713 + $0x50] sm:$0x1]
        %v1266 = vsel %vm716, %v1015, %v1265
        %1267 = vst [vmem:[%s713 + $0x50] sm:$0x1] %v1266
        %v1268 = vld [vmem:[%s713 + $0x54] sm:$0xf]
        %v1269 = vsel %vm1218, %v1022, %v1268
        %1270 = vst [vmem:[%s713 + $0x54] sm:$0xf] %v1269
        %1271 = vst [vmem:[%s713 + $0x58] sm:$0xf] %v1031
        %v1272 = vld [vmem:[%s713 + $0x5c] sm:$0x1]
        %v1273 = vsel %vm716, %v1032, %v1272
        %1274 = vst [vmem:[%s713 + $0x5c] sm:$0x1] %v1273
        %v1275 = vld [vmem:[%s713 + $0x60] sm:$0xf]
        %v1276 = vsel %vm1218, %v1039, %v1275
        %1277 = vst [vmem:[%s713 + $0x60] sm:$0xf] %v1276
        %1278 = vst [vmem:[%s713 + $0x64] sm:$0xf] %v1048
        %v1279 = vld [vmem:[%s713 + $0x68] sm:$0x1]
        %v1280 = vsel %vm716, %v1049, %v1279
        %1281 = vst [vmem:[%s713 + $0x68] sm:$0x1] %v1280
        %v1282 = vld [vmem:[%s713 + $0x6c] sm:$0xf]
        %v1283 = vsel %vm1218, %v1056, %v1282
        %1284 = vst [vmem:[%s713 + $0x6c] sm:$0xf] %v1283
        %1285 = vst [vmem:[%s713 + $0x70] sm:$0xf] %v1065
        %v1286 = vld [vmem:[%s713 + $0x74] sm:$0x1]
        %v1287 = vsel %vm716, %v1066, %v1286
        %1288 = vst [vmem:[%s713 + $0x74] sm:$0x1] %v1287
        %v1289 = vld [vmem:[%s713 + $0x78] sm:$0xf]
        %v1290 = vsel %vm1218, %v1073, %v1289
        %1291 = vst [vmem:[%s713 + $0x78] sm:$0xf] %v1290
        %1292 = vst [vmem:[%s713 + $0x7c] sm:$0xf] %v1082
        %v1293 = vld [vmem:[%s713 + $0x80] sm:$0x1]
        %v1294 = vsel %vm716, %v1083, %v1293
        %1295 = vst [vmem:[%s713 + $0x80] sm:$0x1] %v1294
        %v1296 = vld [vmem:[%s713 + $0x84] sm:$0xf]
        %v1297 = vsel %vm1218, %v1090, %v1296
        %1298 = vst [vmem:[%s713 + $0x84] sm:$0xf] %v1297
        %1299 = vst [vmem:[%s713 + $0x88] sm:$0xf] %v1099
        %v1300 = vld [vmem:[%s713 + $0x8c] sm:$0x1]
        %v1301 = vsel %vm716, %v1100, %v1300
        %1302 = vst [vmem:[%s713 + $0x8c] sm:$0x1] %v1301
        %v1303 = vld [vmem:[%s713 + $0x90] sm:$0xf]
        %v1304 = vsel %vm1218, %v1107, %v1303
        %1305 = vst [vmem:[%s713 + $0x90] sm:$0xf] %v1304
        %1306 = vst [vmem:[%s713 + $0x94] sm:$0xf] %v1116
        %v1307 = vld [vmem:[%s713 + $0x98] sm:$0x1]
        %v1308 = vsel %vm716, %v1117, %v1307
        %1309 = vst [vmem:[%s713 + $0x98] sm:$0x1] %v1308
        %v1310 = vld [vmem:[%s713 + $0x9c] sm:$0xf]
        %v1311 = vsel %vm1218, %v1124, %v1310
        %1312 = vst [vmem:[%s713 + $0x9c] sm:$0xf] %v1311
        %1313 = vst [vmem:[%s713 + $0xa0] sm:$0xf] %v1133
        %v1314 = vld [vmem:[%s713 + $0xa4] sm:$0x1]
        %v1315 = vsel %vm716, %v1134, %v1314
        %1316 = vst [vmem:[%s713 + $0xa4] sm:$0x1] %v1315
        %v1317 = vld [vmem:[%s713 + $0xa8] sm:$0xf]
        %v1318 = vsel %vm1218, %v1141, %v1317
        %1319 = vst [vmem:[%s713 + $0xa8] sm:$0xf] %v1318
        %1320 = vst [vmem:[%s713 + $0xac] sm:$0xf] %v1150
        %v1321 = vld [vmem:[%s713 + $0xb0] sm:$0x1]
        %v1322 = vsel %vm716, %v1151, %v1321
        %1323 = vst [vmem:[%s713 + $0xb0] sm:$0x1] %v1322
        %v1324 = vld [vmem:[%s713 + $0xb4] sm:$0xf]
        %v1325 = vsel %vm1218, %v1158, %v1324
        %1326 = vst [vmem:[%s713 + $0xb4] sm:$0xf] %v1325
        %1327 = vst [vmem:[%s713 + $0xb8] sm:$0xf] %v1167
        %v1328 = vld [vmem:[%s713 + $0xbc] sm:$0x1]
        %v1329 = vsel %vm716, %v1168, %v1328
        %1330 = vst [vmem:[%s713 + $0xbc] sm:$0x1] %v1329
        %v1331 = vld [vmem:[#allocation2] sm:$0xf]
        %v1332 = vld [vmem:[#allocation2 + $0x4] sm:$0xf]
        %v1333 = vld [vmem:[#allocation2 + $0xc] sm:$0xf]
        %v1334 = vld [vmem:[#allocation2 + $0x10] sm:$0xf]
        %v1335 = vld [vmem:[#allocation2 + $0x18] sm:$0xf]
        %v1336 = vld [vmem:[#allocation2 + $0x1c] sm:$0xf]
        %v1337 = vld [vmem:[#allocation2 + $0x24] sm:$0xf]
        %v1338 = vld [vmem:[#allocation2 + $0x28] sm:$0xf]
        %v1339 = vld [vmem:[#allocation2 + $0x30] sm:$0xf]
        %v1340 = vld [vmem:[#allocation2 + $0x34] sm:$0xf]
        %v1341 = vld [vmem:[#allocation2 + $0x3c] sm:$0xf]
        %v1342 = vld [vmem:[#allocation2 + $0x40] sm:$0xf]
        %v1343 = vld [vmem:[#allocation2 + $0x48] sm:$0xf]
        %v1344 = vld [vmem:[#allocation2 + $0x4c] sm:$0xf]
        %v1345 = vld [vmem:[#allocation2 + $0x54] sm:$0xf]
        %v1346 = vld [vmem:[#allocation2 + $0x58] sm:$0xf]
        %v1347 = vld [vmem:[#allocation2 + $0x60] sm:$0xf]
        %v1348 = vld [vmem:[#allocation2 + $0x64] sm:$0xf]
        %v1349 = vld [vmem:[#allocation2 + $0x6c] sm:$0xf]
        %v1350 = vld [vmem:[#allocation2 + $0x70] sm:$0xf]
        %v1351 = vld [vmem:[#allocation2 + $0x78] sm:$0xf]
        %v1352 = vld [vmem:[#allocation2 + $0x7c] sm:$0xf]
        %v1353 = vld [vmem:[#allocation2 + $0x84] sm:$0xf]
        %v1354 = vld [vmem:[#allocation2 + $0x88] sm:$0xf]
        %v1355 = vld [vmem:[#allocation2 + $0x90] sm:$0xf]
        %v1356 = vld [vmem:[#allocation2 + $0x94] sm:$0xf]
        %v1357 = vld [vmem:[#allocation2 + $0x9c] sm:$0xf]
        %v1358 = vld [vmem:[#allocation2 + $0xa0] sm:$0xf]
        %v1359 = vld [vmem:[#allocation2 + $0xa8] sm:$0xf]
        %v1360 = vld [vmem:[#allocation2 + $0xac] sm:$0xf]
        %v1361 = vld [vmem:[#allocation2 + $0xb4] sm:$0xf]
        %v1362 = vld [vmem:[#allocation2 + $0xb8] sm:$0xf]
        %v1363 = vld [vmem:[#allocation6] sm:$0xf]
        %v1364 = vld [vmem:[#allocation6 + $0x4] sm:$0xf]
        %v1365 = vld [vmem:[#allocation6 + $0x8] sm:$0xf]
        %v1366 = vld [vmem:[#allocation6 + $0xc] sm:$0xf]
        %v1367 = vld [vmem:[#allocation6 + $0x10] sm:$0xf]
        %v1368 = vld [vmem:[#allocation6 + $0x14] sm:$0xf]
        %v1369 = vld [vmem:[#allocation6 + $0x18] sm:$0xf]
        %v1370 = vld [vmem:[#allocation6 + $0x1c] sm:$0xf]
        %v1371 = vld [vmem:[#allocation6 + $0x20] sm:$0xf]
        %v1372 = vld [vmem:[#allocation6 + $0x24] sm:$0xf]
        %v1373 = vld [vmem:[#allocation6 + $0x28] sm:$0xf]
        %v1374 = vld [vmem:[#allocation6 + $0x2c] sm:$0xf]
        %v1375 = vld [vmem:[#allocation6 + $0x30] sm:$0xf]
        %v1376 = vld [vmem:[#allocation6 + $0x34] sm:$0xf]
        %v1377 = vld [vmem:[#allocation6 + $0x38] sm:$0xf]
        %v1378 = vld [vmem:[#allocation6 + $0x3c] sm:$0xf]
        %v1379 = vld [vmem:[#allocation2 + $0x8] sm:$0x1]
        %v1380 = vld [vmem:[#allocation2 + $0x14] sm:$0x1]
        %v1381 = vld [vmem:[#allocation2 + $0x20] sm:$0x1]
        %v1382 = vld [vmem:[#allocation2 + $0x2c] sm:$0x1]
        %v1383 = vld [vmem:[#allocation2 + $0x38] sm:$0x1]
        %v1384 = vld [vmem:[#allocation2 + $0x44] sm:$0x1]
        %v1385 = vld [vmem:[#allocation2 + $0x50] sm:$0x1]
        %v1386 = vld [vmem:[#allocation2 + $0x5c] sm:$0x1]
        %v1387 = vld [vmem:[#allocation2 + $0x68] sm:$0x1]
        %v1388 = vld [vmem:[#allocation2 + $0x74] sm:$0x1]
        %v1389 = vld [vmem:[#allocation2 + $0x80] sm:$0x1]
        %v1390 = vld [vmem:[#allocation2 + $0x8c] sm:$0x1]
        %v1391 = vld [vmem:[#allocation2 + $0x98] sm:$0x1]
        %v1392 = vld [vmem:[#allocation2 + $0xa4] sm:$0x1]
        %v1393 = vld [vmem:[#allocation2 + $0xb0] sm:$0x1]
        %v1394 = vld [vmem:[#allocation2 + $0xbc] sm:$0x1]
        %vm1395 = vsmask.f32 3328
        %vm1396 = vsmask.f32 7440
        %vm1397 = vmor %vm1395, %vm1396
        %v1399 = vshrl.u32 %v1331, 16
        %v1401 = vrot.slane %v1399, 4
        %v1402 = vshll.u32 %v1331, 16
        %v1404 = vrot.slane %v1402, 5
        %v1405 = vor.u32 %v1401, %v1404
        %v1406 = vrot.slane %v1405, 4
        %v1408 = vshll.u32 %v1332, 16
        %v1410 = vrot.slane %v1408, 5
        %v1411 = vsel %vm1397, %v1406, %v1410
        %v1412 = vshrl.u32 %v1332, 16
        %v1414 = vrot.slane %v1412, 4
        %v1415 = vor.u32 %v1414, %v1410
        %v1416 = vrot.slane %v1415, 4
        %v1418 = vshll.u32 %v1379, 16
        %v1420 = vrot.slane %v1418, 5
        %v1421 = vsel %vm1397, %v1416, %v1420
        %v1423 = vshrl.u32 %v1333, 16
        %v1425 = vrot.slane %v1423, 4
        %v1426 = vshll.u32 %v1333, 16
        %v1428 = vrot.slane %v1426, 5
        %v1429 = vor.u32 %v1425, %v1428
        %v1430 = vrot.slane %v1429, 4
        %v1432 = vshll.u32 %v1334, 16
        %v1434 = vrot.slane %v1432, 5
        %v1435 = vsel %vm1397, %v1430, %v1434
        %v1436 = vshrl.u32 %v1334, 16
        %v1438 = vrot.slane %v1436, 4
        %v1439 = vor.u32 %v1438, %v1434
        %v1440 = vrot.slane %v1439, 4
        %v1442 = vshll.u32 %v1380, 16
        %v1444 = vrot.slane %v1442, 5
        %v1445 = vsel %vm1397, %v1440, %v1444
        %v1447 = vshrl.u32 %v1335, 16
        %v1449 = vrot.slane %v1447, 4
        %v1450 = vshll.u32 %v1335, 16
        %v1452 = vrot.slane %v1450, 5
        %v1453 = vor.u32 %v1449, %v1452
        %v1454 = vrot.slane %v1453, 4
        %v1456 = vshll.u32 %v1336, 16
        %v1458 = vrot.slane %v1456, 5
        %v1459 = vsel %vm1397, %v1454, %v1458
        %v1460 = vshrl.u32 %v1336, 16
        %v1462 = vrot.slane %v1460, 4
        %v1463 = vor.u32 %v1462, %v1458
        %v1464 = vrot.slane %v1463, 4
        %v1466 = vshll.u32 %v1381, 16
        %v1468 = vrot.slane %v1466, 5
        %v1469 = vsel %vm1397, %v1464, %v1468
        %v1471 = vshrl.u32 %v1337, 16
        %v1473 = vrot.slane %v1471, 4
        %v1474 = vshll.u32 %v1337, 16
        %v1476 = vrot.slane %v1474, 5
        %v1477 = vor.u32 %v1473, %v1476
        %v1478 = vrot.slane %v1477, 4
        %v1480 = vshll.u32 %v1338, 16
        %v1482 = vrot.slane %v1480, 5
        %v1483 = vsel %vm1397, %v1478, %v1482
        %v1484 = vshrl.u32 %v1338, 16
        %v1486 = vrot.slane %v1484, 4
        %v1487 = vor.u32 %v1486, %v1482
        %v1488 = vrot.slane %v1487, 4
        %v1490 = vshll.u32 %v1382, 16
        %v1492 = vrot.slane %v1490, 5
        %v1493 = vsel %vm1397, %v1488, %v1492
        %v1495 = vshrl.u32 %v1339, 16
        %v1497 = vrot.slane %v1495, 4
        %v1498 = vshll.u32 %v1339, 16
        %v1500 = vrot.slane %v1498, 5
        %v1501 = vor.u32 %v1497, %v1500
        %v1502 = vrot.slane %v1501, 4
        %v1504 = vshll.u32 %v1340, 16
        %v1506 = vrot.slane %v1504, 5
        %v1507 = vsel %vm1397, %v1502, %v1506
        %v1508 = vshrl.u32 %v1340, 16
        %v1510 = vrot.slane %v1508, 4
        %v1511 = vor.u32 %v1510, %v1506
        %v1512 = vrot.slane %v1511, 4
        %v1514 = vshll.u32 %v1383, 16
        %v1516 = vrot.slane %v1514, 5
        %v1517 = vsel %vm1397, %v1512, %v1516
        %v1519 = vshrl.u32 %v1341, 16
        %v1521 = vrot.slane %v1519, 4
        %v1522 = vshll.u32 %v1341, 16
        %v1524 = vrot.slane %v1522, 5
        %v1525 = vor.u32 %v1521, %v1524
        %v1526 = vrot.slane %v1525, 4
        %v1528 = vshll.u32 %v1342, 16
        %v1530 = vrot.slane %v1528, 5
        %v1531 = vsel %vm1397, %v1526, %v1530
        %v1532 = vshrl.u32 %v1342, 16
        %v1534 = vrot.slane %v1532, 4
        %v1535 = vor.u32 %v1534, %v1530
        %v1536 = vrot.slane %v1535, 4
        %v1538 = vshll.u32 %v1384, 16
        %v1540 = vrot.slane %v1538, 5
        %v1541 = vsel %vm1397, %v1536, %v1540
        %v1543 = vshrl.u32 %v1343, 16
        %v1545 = vrot.slane %v1543, 4
        %v1546 = vshll.u32 %v1343, 16
        %v1548 = vrot.slane %v1546, 5
        %v1549 = vor.u32 %v1545, %v1548
        %v1550 = vrot.slane %v1549, 4
        %v1552 = vshll.u32 %v1344, 16
        %v1554 = vrot.slane %v1552, 5
        %v1555 = vsel %vm1397, %v1550, %v1554
        %v1556 = vshrl.u32 %v1344, 16
        %v1558 = vrot.slane %v1556, 4
        %v1559 = vor.u32 %v1558, %v1554
        %v1560 = vrot.slane %v1559, 4
        %v1562 = vshll.u32 %v1385, 16
        %v1564 = vrot.slane %v1562, 5
        %v1565 = vsel %vm1397, %v1560, %v1564
        %v1567 = vshrl.u32 %v1345, 16
        %v1569 = vrot.slane %v1567, 4
        %v1570 = vshll.u32 %v1345, 16
        %v1572 = vrot.slane %v1570, 5
        %v1573 = vor.u32 %v1569, %v1572
        %v1574 = vrot.slane %v1573, 4
        %v1576 = vshll.u32 %v1346, 16
        %v1578 = vrot.slane %v1576, 5
        %v1579 = vsel %vm1397, %v1574, %v1578
        %v1580 = vshrl.u32 %v1346, 16
        %v1582 = vrot.slane %v1580, 4
        %v1583 = vor.u32 %v1582, %v1578
        %v1584 = vrot.slane %v1583, 4
        %v1586 = vshll.u32 %v1386, 16
        %v1588 = vrot.slane %v1586, 5
        %v1589 = vsel %vm1397, %v1584, %v1588
        %v1591 = vshrl.u32 %v1347, 16
        %v1593 = vrot.slane %v1591, 4
        %v1594 = vshll.u32 %v1347, 16
        %v1596 = vrot.slane %v1594, 5
        %v1597 = vor.u32 %v1593, %v1596
        %v1598 = vrot.slane %v1597, 4
        %v1600 = vshll.u32 %v1348, 16
        %v1602 = vrot.slane %v1600, 5
        %v1603 = vsel %vm1397, %v1598, %v1602
        %v1604 = vshrl.u32 %v1348, 16
        %v1606 = vrot.slane %v1604, 4
        %v1607 = vor.u32 %v1606, %v1602
        %v1608 = vrot.slane %v1607, 4
        %v1610 = vshll.u32 %v1387, 16
        %v1612 = vrot.slane %v1610, 5
        %v1613 = vsel %vm1397, %v1608, %v1612
        %v1615 = vshrl.u32 %v1349, 16
        %v1617 = vrot.slane %v1615, 4
        %v1618 = vshll.u32 %v1349, 16
        %v1620 = vrot.slane %v1618, 5
        %v1621 = vor.u32 %v1617, %v1620
        %v1622 = vrot.slane %v1621, 4
        %v1624 = vshll.u32 %v1350, 16
        %v1626 = vrot.slane %v1624, 5
        %v1627 = vsel %vm1397, %v1622, %v1626
        %v1628 = vshrl.u32 %v1350, 16
        %v1630 = vrot.slane %v1628, 4
        %v1631 = vor.u32 %v1630, %v1626
        %v1632 = vrot.slane %v1631, 4
        %v1634 = vshll.u32 %v1388, 16
        %v1636 = vrot.slane %v1634, 5
        %v1637 = vsel %vm1397, %v1632, %v1636
        %v1639 = vshrl.u32 %v1351, 16
        %v1641 = vrot.slane %v1639, 4
        %v1642 = vshll.u32 %v1351, 16
        %v1644 = vrot.slane %v1642, 5
        %v1645 = vor.u32 %v1641, %v1644
        %v1646 = vrot.slane %v1645, 4
        %v1648 = vshll.u32 %v1352, 16
        %v1650 = vrot.slane %v1648, 5
        %v1651 = vsel %vm1397, %v1646, %v1650
        %v1652 = vshrl.u32 %v1352, 16
        %v1654 = vrot.slane %v1652, 4
        %v1655 = vor.u32 %v1654, %v1650
        %v1656 = vrot.slane %v1655, 4
        %v1658 = vshll.u32 %v1389, 16
        %v1660 = vrot.slane %v1658, 5
        %v1661 = vsel %vm1397, %v1656, %v1660
        %v1663 = vshrl.u32 %v1353, 16
        %v1665 = vrot.slane %v1663, 4
        %v1666 = vshll.u32 %v1353, 16
        %v1668 = vrot.slane %v1666, 5
        %v1669 = vor.u32 %v1665, %v1668
        %v1670 = vrot.slane %v1669, 4
        %v1672 = vshll.u32 %v1354, 16
        %v1674 = vrot.slane %v1672, 5
        %v1675 = vsel %vm1397, %v1670, %v1674
        %v1676 = vshrl.u32 %v1354, 16
        %v1678 = vrot.slane %v1676, 4
        %v1679 = vor.u32 %v1678, %v1674
        %v1680 = vrot.slane %v1679, 4
        %v1682 = vshll.u32 %v1390, 16
        %v1684 = vrot.slane %v1682, 5
        %v1685 = vsel %vm1397, %v1680, %v1684
        %v1687 = vshrl.u32 %v1355, 16
        %v1689 = vrot.slane %v1687, 4
        %v1690 = vshll.u32 %v1355, 16
        %v1692 = vrot.slane %v1690, 5
        %v1693 = vor.u32 %v1689, %v1692
        %v1694 = vrot.slane %v1693, 4
        %v1696 = vshll.u32 %v1356, 16
        %v1698 = vrot.slane %v1696, 5
        %v1699 = vsel %vm1397, %v1694, %v1698
        %v1700 = vshrl.u32 %v1356, 16
        %v1702 = vrot.slane %v1700, 4
        %v1703 = vor.u32 %v1702, %v1698
        %v1704 = vrot.slane %v1703, 4
        %v1706 = vshll.u32 %v1391, 16
        %v1708 = vrot.slane %v1706, 5
        %v1709 = vsel %vm1397, %v1704, %v1708
        %v1711 = vshrl.u32 %v1357, 16
        %v1713 = vrot.slane %v1711, 4
        %v1714 = vshll.u32 %v1357, 16
        %v1716 = vrot.slane %v1714, 5
        %v1717 = vor.u32 %v1713, %v1716
        %v1718 = vrot.slane %v1717, 4
        %v1720 = vshll.u32 %v1358, 16
        %v1722 = vrot.slane %v1720, 5
        %v1723 = vsel %vm1397, %v1718, %v1722
        %v1724 = vshrl.u32 %v1358, 16
        %v1726 = vrot.slane %v1724, 4
        %v1727 = vor.u32 %v1726, %v1722
        %v1728 = vrot.slane %v1727, 4
        %v1730 = vshll.u32 %v1392, 16
        %v1732 = vrot.slane %v1730, 5
        %v1733 = vsel %vm1397, %v1728, %v1732
        %v1735 = vshrl.u32 %v1359, 16
        %v1737 = vrot.slane %v1735, 4
        %v1738 = vshll.u32 %v1359, 16
        %v1740 = vrot.slane %v1738, 5
        %v1741 = vor.u32 %v1737, %v1740
        %v1742 = vrot.slane %v1741, 4
        %v1744 = vshll.u32 %v1360, 16
        %v1746 = vrot.slane %v1744, 5
        %v1747 = vsel %vm1397, %v1742, %v1746
        %v1748 = vshrl.u32 %v1360, 16
        %v1750 = vrot.slane %v1748, 4
        %v1751 = vor.u32 %v1750, %v1746
        %v1752 = vrot.slane %v1751, 4
        %v1754 = vshll.u32 %v1393, 16
        %v1756 = vrot.slane %v1754, 5
        %v1757 = vsel %vm1397, %v1752, %v1756
        %v1759 = vshrl.u32 %v1361, 16
        %v1761 = vrot.slane %v1759, 4
        %v1762 = vshll.u32 %v1361, 16
        %v1764 = vrot.slane %v1762, 5
        %v1765 = vor.u32 %v1761, %v1764
        %v1766 = vrot.slane %v1765, 4
        %v1768 = vshll.u32 %v1362, 16
        %v1770 = vrot.slane %v1768, 5
        %v1771 = vsel %vm1397, %v1766, %v1770
        %v1772 = vshrl.u32 %v1362, 16
        %v1774 = vrot.slane %v1772, 4
        %v1775 = vor.u32 %v1774, %v1770
        %v1776 = vrot.slane %v1775, 4
        %v1778 = vshll.u32 %v1394, 16
        %v1780 = vrot.slane %v1778, 5
        %v1781 = vsel %vm1397, %v1776, %v1780
        %s1782 = scalar_lea.vmem [#allocation6], 64
        %v1783 = vld [vmem:[%s1782] sm:$0xf]
        %v1784 = vld [vmem:[%s1782 + $0x4] sm:$0xf]
        %v1785 = vld [vmem:[%s1782 + $0x8] sm:$0xf]
        %v1786 = vld [vmem:[%s1782 + $0xc] sm:$0xf]
        %v1787 = vld [vmem:[%s1782 + $0x10] sm:$0xf]
        %v1788 = vld [vmem:[%s1782 + $0x14] sm:$0xf]
        %v1789 = vld [vmem:[%s1782 + $0x18] sm:$0xf]
        %v1790 = vld [vmem:[%s1782 + $0x1c] sm:$0xf]
        %v1791 = vld [vmem:[%s1782 + $0x20] sm:$0xf]
        %v1792 = vld [vmem:[%s1782 + $0x24] sm:$0xf]
        %v1793 = vld [vmem:[%s1782 + $0x28] sm:$0xf]
        %v1794 = vld [vmem:[%s1782 + $0x2c] sm:$0xf]
        %v1795 = vld [vmem:[%s1782 + $0x30] sm:$0xf]
        %v1796 = vld [vmem:[%s1782 + $0x34] sm:$0xf]
        %v1797 = vld [vmem:[%s1782 + $0x38] sm:$0xf]
        %v1798 = vld [vmem:[%s1782 + $0x3c] sm:$0xf]
        %v1799 = vunpack.c.l.b16 %v1411
        %v1800 = vunpack.c.l.b16 %v1421
        %v1801 = vunpack.c.l.b16 %v1435
        %v1802 = vunpack.c.l.b16 %v1445
        %v1803 = vunpack.c.l.b16 %v1459
        %v1804 = vunpack.c.l.b16 %v1469
        %v1805 = vunpack.c.l.b16 %v1483
        %v1806 = vunpack.c.l.b16 %v1493
        %v1807 = vunpack.c.l.b16 %v1507
        %v1808 = vunpack.c.l.b16 %v1517
        %v1809 = vunpack.c.l.b16 %v1531
        %v1810 = vunpack.c.l.b16 %v1541
        %v1811 = vunpack.c.l.b16 %v1555
        %v1812 = vunpack.c.l.b16 %v1565
        %v1813 = vunpack.c.l.b16 %v1579
        %v1814 = vunpack.c.l.b16 %v1589
        %v1815 = vunpack.c.l.b16 %v1603
        %v1816 = vunpack.c.l.b16 %v1613
        %v1817 = vunpack.c.l.b16 %v1627
        %v1818 = vunpack.c.l.b16 %v1637
        %v1819 = vunpack.c.l.b16 %v1651
        %v1820 = vunpack.c.l.b16 %v1661
        %v1821 = vunpack.c.l.b16 %v1675
        %v1822 = vunpack.c.l.b16 %v1685
        %v1823 = vunpack.c.l.b16 %v1699
        %v1824 = vunpack.c.l.b16 %v1709
        %v1825 = vunpack.c.l.b16 %v1723
        %v1826 = vunpack.c.l.b16 %v1733
        %v1827 = vunpack.c.l.b16 %v1747
        %v1828 = vunpack.c.l.b16 %v1757
        %v1829 = vunpack.c.l.b16 %v1771
        %v1830 = vunpack.c.l.b16 %v1781
        %v1831 = vpack.c.b16 %v1800, %v1799
        %v1832 = vpack.c.b16 %v1802, %v1801
        %v1833 = vpack.c.b16 %v1804, %v1803
        %v1834 = vpack.c.b16 %v1806, %v1805
        %v1835 = vpack.c.b16 %v1808, %v1807
        %v1836 = vpack.c.b16 %v1810, %v1809
        %v1837 = vpack.c.b16 %v1812, %v1811
        %v1838 = vpack.c.b16 %v1814, %v1813
        %v1839 = vpack.c.b16 %v1816, %v1815
        %v1840 = vpack.c.b16 %v1818, %v1817
        %v1841 = vpack.c.b16 %v1820, %v1819
        %v1842 = vpack.c.b16 %v1822, %v1821
        %v1843 = vpack.c.b16 %v1824, %v1823
        %v1844 = vpack.c.b16 %v1826, %v1825
        %v1845 = vpack.c.b16 %v1828, %v1827
        %v1846 = vpack.c.b16 %v1830, %v1829
        %v1879 = vunpack.c.l.b16 %v1783
        %v1880 = vunpack.c.l.b16 %v1784
        %v1881 = vunpack.c.l.b16 %v1785
        %v1882 = vunpack.c.l.b16 %v1786
        %v1883 = vunpack.c.l.b16 %v1787
        %v1884 = vunpack.c.l.b16 %v1788
        %v1885 = vunpack.c.l.b16 %v1789
        %v1886 = vunpack.c.l.b16 %v1790
        %v1887 = vunpack.c.l.b16 %v1791
        %v1888 = vunpack.c.l.b16 %v1792
        %v1889 = vunpack.c.l.b16 %v1793
        %v1890 = vunpack.c.l.b16 %v1794
        %v1891 = vunpack.c.l.b16 %v1795
        %v1892 = vunpack.c.l.b16 %v1796
        %v1893 = vunpack.c.l.b16 %v1797
        %v1894 = vunpack.c.l.b16 %v1798
        %v1895 = vpack.c.b16 %v1880, %v1879
        %v1896 = vpack.c.b16 %v1882, %v1881
        %v1897 = vpack.c.b16 %v1884, %v1883
        %v1898 = vpack.c.b16 %v1886, %v1885
        %v1899 = vpack.c.b16 %v1888, %v1887
        %v1900 = vpack.c.b16 %v1890, %v1889
        %v1901 = vpack.c.b16 %v1892, %v1891
        %v1902 = vpack.c.b16 %v1894, %v1893
        %1911 = vmatprep.subr.bf16.mxu0 0
        %1912 = vmatpush1.bf16.msra.mxu0 %v1895
        %1913 = vmatprep.subr.bf16.mxu0 0
        %1914 = vmatpush1.bf16.msra.mxu0 %v1896
        %1915 = vmatprep.subr.bf16.mxu0 0
        %1916 = vmatpush1.bf16.msra.mxu0 %v1897
        %1917 = vmatprep.subr.bf16.mxu0 0
        %1918 = vmatpush1.bf16.msra.mxu0 %v1898
        %1919 = vmatprep.subr.bf16.mxu0 0
        %1920 = vmatpush1.bf16.msra.mxu0 %v1899
        %1921 = vmatprep.subr.bf16.mxu0 0
        %1922 = vmatpush1.bf16.msra.mxu0 %v1900
        %1923 = vmatprep.subr.bf16.mxu0 0
        %1924 = vmatpush1.bf16.msra.mxu0 %v1901
        %1925 = vmatprep.subr.bf16.mxu0 0
        %1926 = vmatpush1.bf16.msra.mxu0 %v1902
        %1927 = vmatprep.subr.bf16.mxu0 0
        %1928 = vmatpush1.bf16.msra.mxu0 0
        %1929 = vmatprep.subr.bf16.mxu0 0
        %1930 = vmatpush1.bf16.msra.mxu0 0
        %1931 = vmatprep.subr.bf16.mxu0 0
        %1932 = vmatpush1.bf16.msra.mxu0 0
        %1933 = vmatprep.subr.bf16.mxu0 0
        %1934 = vmatpush1.bf16.msra.mxu0 0
        %1935 = vmatprep.subr.bf16.mxu0 0
        %1936 = vmatpush1.bf16.msra.mxu0 0
        %1937 = vmatprep.subr.bf16.mxu0 0
        %1938 = vmatpush1.bf16.msra.mxu0 0
        %1939 = vmatprep.subr.bf16.mxu0 0
        %1940 = vmatpush1.bf16.msra.mxu0 0
        %1941 = vmatprep.subr.bf16.mxu0 0
        %1942 = vmatpush1.bf16.msra.mxu0 0
        %1943 = vmatprep.mubr.bf16.mxu0 0
        %1944 = vmatmul.mubr.bf16.gmra.mrb[0].mxu0 %v1831
        %v1945 = vpop.f32.mrb[0].mxu0
        %v1946 = vadd.f32 0.0, %v1945
        %v1947 = vpop.f32.mrb[0].mxu0
        %v1948 = vpop.f32.mrb[0].mxu0
        %v1949 = vadd.f32 0.0, %v1948
        %v1950 = vpop.f32.mrb[0].mxu0
        %1951 = vmatprep.mubr.bf16.mxu0 0
        %1952 = vmatmul.mubr.bf16.gmra.mrb[0].mxu0 %v1832
        %v1953 = vpop.f32.mrb[0].mxu0
        %v1954 = vadd.f32 0.0, %v1953
        %v1955 = vpop.f32.mrb[0].mxu0
        %v1956 = vpop.f32.mrb[0].mxu0
        %v1957 = vadd.f32 0.0, %v1956
        %v1958 = vpop.f32.mrb[0].mxu0
        %1959 = vmatprep.mubr.bf16.mxu0 0
        %1960 = vmatmul.mubr.bf16.gmra.mrb[0].mxu0 %v1833
        %v1961 = vpop.f32.mrb[0].mxu0
        %v1962 = vadd.f32 0.0, %v1961
        %v1963 = vpop.f32.mrb[0].mxu0
        %v1964 = vpop.f32.mrb[0].mxu0
        %v1965 = vadd.f32 0.0, %v1964
        %v1966 = vpop.f32.mrb[0].mxu0
        %1967 = vmatprep.mubr.bf16.mxu0 0
        %1968 = vmatmul.mubr.bf16.gmra.mrb[0].mxu0 %v1834
        %v1969 = vpop.f32.mrb[0].mxu0
        %v1970 = vadd.f32 0.0, %v1969
        %v1971 = vpop.f32.mrb[0].mxu0
        %v1972 = vpop.f32.mrb[0].mxu0
        %v1973 = vadd.f32 0.0, %v1972
        %v1974 = vpop.f32.mrb[0].mxu0
        %1975 = vmatprep.mubr.bf16.mxu0 0
        %1976 = vmatmul.mubr.bf16.gmra.mrb[0].mxu0 %v1835
        %v1977 = vpop.f32.mrb[0].mxu0
        %v1978 = vadd.f32 0.0, %v1977
        %v1979 = vpop.f32.mrb[0].mxu0
        %v1980 = vpop.f32.mrb[0].mxu0
        %v1981 = vadd.f32 0.0, %v1980
        %v1982 = vpop.f32.mrb[0].mxu0
        %1983 = vmatprep.mubr.bf16.mxu0 0
        %1984 = vmatmul.mubr.bf16.gmra.mrb[0].mxu0 %v1836
        %v1985 = vpop.f32.mrb[0].mxu0
        %v1986 = vadd.f32 0.0, %v1985
        %v1987 = vpop.f32.mrb[0].mxu0
        %v1988 = vpop.f32.mrb[0].mxu0
        %v1989 = vadd.f32 0.0, %v1988
        %v1990 = vpop.f32.mrb[0].mxu0
        %1991 = vmatprep.mubr.bf16.mxu0 0
        %1992 = vmatmul.mubr.bf16.gmra.mrb[0].mxu0 %v1837
        %v1993 = vpop.f32.mrb[0].mxu0
        %v1994 = vadd.f32 0.0, %v1993
        %v1995 = vpop.f32.mrb[0].mxu0
        %v1996 = vpop.f32.mrb[0].mxu0
        %v1997 = vadd.f32 0.0, %v1996
        %v1998 = vpop.f32.mrb[0].mxu0
        %1999 = vmatprep.mubr.bf16.mxu0 0
        %2000 = vmatmul.mubr.bf16.gmra.mrb[0].mxu0 %v1838
        %v2001 = vpop.f32.mrb[0].mxu0
        %v2002 = vadd.f32 0.0, %v2001
        %v2003 = vpop.f32.mrb[0].mxu0
        %v2004 = vpop.f32.mrb[0].mxu0
        %v2005 = vadd.f32 0.0, %v2004
        %v2006 = vpop.f32.mrb[0].mxu0
        %2007 = vmatprep.mubr.bf16.mxu0 0
        %2008 = vmatmul.mubr.bf16.gmra.mrb[0].mxu0 %v1839
        %v2009 = vpop.f32.mrb[0].mxu0
        %v2010 = vadd.f32 0.0, %v2009
        %v2011 = vpop.f32.mrb[0].mxu0
        %v2012 = vpop.f32.mrb[0].mxu0
        %v2013 = vadd.f32 0.0, %v2012
        %v2014 = vpop.f32.mrb[0].mxu0
        %2015 = vmatprep.mubr.bf16.mxu0 0
        %2016 = vmatmul.mubr.bf16.gmra.mrb[0].mxu0 %v1840
        %v2017 = vpop.f32.mrb[0].mxu0
        %v2018 = vadd.f32 0.0, %v2017
        %v2019 = vpop.f32.mrb[0].mxu0
        %v2020 = vpop.f32.mrb[0].mxu0
        %v2021 = vadd.f32 0.0, %v2020
        %v2022 = vpop.f32.mrb[0].mxu0
        %2023 = vmatprep.mubr.bf16.mxu0 0
        %2024 = vmatmul.mubr.bf16.gmra.mrb[0].mxu0 %v1841
        %v2025 = vpop.f32.mrb[0].mxu0
        %v2026 = vadd.f32 0.0, %v2025
        %v2027 = vpop.f32.mrb[0].mxu0
        %v2028 = vpop.f32.mrb[0].mxu0
        %v2029 = vadd.f32 0.0, %v2028
        %v2030 = vpop.f32.mrb[0].mxu0
        %2031 = vmatprep.mubr.bf16.mxu0 0
        %2032 = vmatmul.mubr.bf16.gmra.mrb[0].mxu0 %v1842
        %v2033 = vpop.f32.mrb[0].mxu0
        %v2034 = vadd.f32 0.0, %v2033
        %v2035 = vpop.f32.mrb[0].mxu0
        %v2036 = vpop.f32.mrb[0].mxu0
        %v2037 = vadd.f32 0.0, %v2036
        %v2038 = vpop.f32.mrb[0].mxu0
        %2039 = vmatprep.mubr.bf16.mxu0 0
        %2040 = vmatmul.mubr.bf16.gmra.mrb[0].mxu0 %v1843
        %v2041 = vpop.f32.mrb[0].mxu0
        %v2042 = vadd.f32 0.0, %v2041
        %v2043 = vpop.f32.mrb[0].mxu0
        %v2044 = vpop.f32.mrb[0].mxu0
        %v2045 = vadd.f32 0.0, %v2044
        %v2046 = vpop.f32.mrb[0].mxu0
        %2047 = vmatprep.mubr.bf16.mxu0 0
        %2048 = vmatmul.mubr.bf16.gmra.mrb[0].mxu0 %v1844
        %v2049 = vpop.f32.mrb[0].mxu0
        %v2050 = vadd.f32 0.0, %v2049
        %v2051 = vpop.f32.mrb[0].mxu0
        %v2052 = vpop.f32.mrb[0].mxu0
        %v2053 = vadd.f32 0.0, %v2052
        %v2054 = vpop.f32.mrb[0].mxu0
        %2055 = vmatprep.mubr.bf16.mxu0 0
        %2056 = vmatmul.mubr.bf16.gmra.mrb[0].mxu0 %v1845
        %v2057 = vpop.f32.mrb[0].mxu0
        %v2058 = vadd.f32 0.0, %v2057
        %v2059 = vpop.f32.mrb[0].mxu0
        %v2060 = vpop.f32.mrb[0].mxu0
        %v2061 = vadd.f32 0.0, %v2060
        %v2062 = vpop.f32.mrb[0].mxu0
        %2063 = vmatprep.mubr.bf16.mxu0 0
        %2064 = vmatmul.mubr.bf16.gmra.mrb[0].mxu0 %v1846
        %v2065 = vpop.f32.mrb[0].mxu0
        %v2066 = vadd.f32 0.0, %v2065
        %v2067 = vpop.f32.mrb[0].mxu0
        %v2068 = vpop.f32.mrb[0].mxu0
        %v2069 = vadd.f32 0.0, %v2068
        %v2070 = vpop.f32.mrb[0].mxu0
        %2071 = vdwg.mxu0
        %v2104 = vunpack.c.l.b16 %v1331
        %v2105 = vunpack.c.l.b16 %v1332
        %v2106 = vunpack.c.l.b16 %v1333
        %v2107 = vunpack.c.l.b16 %v1334
        %v2108 = vunpack.c.l.b16 %v1335
        %v2109 = vunpack.c.l.b16 %v1336
        %v2110 = vunpack.c.l.b16 %v1337
        %v2111 = vunpack.c.l.b16 %v1338
        %v2112 = vunpack.c.l.b16 %v1339
        %v2113 = vunpack.c.l.b16 %v1340
        %v2114 = vunpack.c.l.b16 %v1341
        %v2115 = vunpack.c.l.b16 %v1342
        %v2116 = vunpack.c.l.b16 %v1343
        %v2117 = vunpack.c.l.b16 %v1344
        %v2118 = vunpack.c.l.b16 %v1345
        %v2119 = vunpack.c.l.b16 %v1346
        %v2120 = vunpack.c.l.b16 %v1347
        %v2121 = vunpack.c.l.b16 %v1348
        %v2122 = vunpack.c.l.b16 %v1349
        %v2123 = vunpack.c.l.b16 %v1350
        %v2124 = vunpack.c.l.b16 %v1351
        %v2125 = vunpack.c.l.b16 %v1352
        %v2126 = vunpack.c.l.b16 %v1353
        %v2127 = vunpack.c.l.b16 %v1354
        %v2128 = vunpack.c.l.b16 %v1355
        %v2129 = vunpack.c.l.b16 %v1356
        %v2130 = vunpack.c.l.b16 %v1357
        %v2131 = vunpack.c.l.b16 %v1358
        %v2132 = vunpack.c.l.b16 %v1359
        %v2133 = vunpack.c.l.b16 %v1360
        %v2134 = vunpack.c.l.b16 %v1361
        %v2135 = vunpack.c.l.b16 %v1362
        %v2136 = vpack.c.b16 %v2105, %v2104
        %v2137 = vpack.c.b16 %v2107, %v2106
        %v2138 = vpack.c.b16 %v2109, %v2108
        %v2139 = vpack.c.b16 %v2111, %v2110
        %v2140 = vpack.c.b16 %v2113, %v2112
        %v2141 = vpack.c.b16 %v2115, %v2114
        %v2142 = vpack.c.b16 %v2117, %v2116
        %v2143 = vpack.c.b16 %v2119, %v2118
        %v2144 = vpack.c.b16 %v2121, %v2120
        %v2145 = vpack.c.b16 %v2123, %v2122
        %v2146 = vpack.c.b16 %v2125, %v2124
        %v2147 = vpack.c.b16 %v2127, %v2126
        %v2148 = vpack.c.b16 %v2129, %v2128
        %v2149 = vpack.c.b16 %v2131, %v2130
        %v2150 = vpack.c.b16 %v2133, %v2132
        %v2151 = vpack.c.b16 %v2135, %v2134
        %v2184 = vunpack.c.l.b16 %v1363
        %v2185 = vunpack.c.l.b16 %v1364
        %v2186 = vunpack.c.l.b16 %v1365
        %v2187 = vunpack.c.l.b16 %v1366
        %v2188 = vunpack.c.l.b16 %v1367
        %v2189 = vunpack.c.l.b16 %v1368
        %v2190 = vunpack.c.l.b16 %v1369
        %v2191 = vunpack.c.l.b16 %v1370
        %v2192 = vunpack.c.l.b16 %v1371
        %v2193 = vunpack.c.l.b16 %v1372
        %v2194 = vunpack.c.l.b16 %v1373
        %v2195 = vunpack.c.l.b16 %v1374
        %v2196 = vunpack.c.l.b16 %v1375
        %v2197 = vunpack.c.l.b16 %v1376
        %v2198 = vunpack.c.l.b16 %v1377
        %v2199 = vunpack.c.l.b16 %v1378
        %v2200 = vpack.c.b16 %v2185, %v2184
        %v2201 = vpack.c.b16 %v2187, %v2186
        %v2202 = vpack.c.b16 %v2189, %v2188
        %v2203 = vpack.c.b16 %v2191, %v2190
        %v2204 = vpack.c.b16 %v2193, %v2192
        %v2205 = vpack.c.b16 %v2195, %v2194
        %v2206 = vpack.c.b16 %v2197, %v2196
        %v2207 = vpack.c.b16 %v2199, %v2198
        %2216 = vmatprep.subr.bf16.mxu0 0
        %2217 = vmatpush1.bf16.msra.mxu0 %v2200
        %2218 = vmatprep.subr.bf16.mxu0 0
        %2219 = vmatpush1.bf16.msra.mxu0 %v2201
        %2220 = vmatprep.subr.bf16.mxu0 0
        %2221 = vmatpush1.bf16.msra.mxu0 %v2202
        %2222 = vmatprep.subr.bf16.mxu0 0
        %2223 = vmatpush1.bf16.msra.mxu0 %v2203
        %2224 = vmatprep.subr.bf16.mxu0 0
        %2225 = vmatpush1.bf16.msra.mxu0 %v2204
        %2226 = vmatprep.subr.bf16.mxu0 0
        %2227 = vmatpush1.bf16.msra.mxu0 %v2205
        %2228 = vmatprep.subr.bf16.mxu0 0
        %2229 = vmatpush1.bf16.msra.mxu0 %v2206
        %2230 = vmatprep.subr.bf16.mxu0 0
        %2231 = vmatpush1.bf16.msra.mxu0 %v2207
        %2232 = vmatprep.subr.bf16.mxu0 0
        %2233 = vmatpush1.bf16.msra.mxu0 0
        %2234 = vmatprep.subr.bf16.mxu0 0
        %2235 = vmatpush1.bf16.msra.mxu0 0
        %2236 = vmatprep.subr.bf16.mxu0 0
        %2237 = vmatpush1.bf16.msra.mxu0 0
        %2238 = vmatprep.subr.bf16.mxu0 0
        %2239 = vmatpush1.bf16.msra.mxu0 0
        %2240 = vmatprep.subr.bf16.mxu0 0
        %2241 = vmatpush1.bf16.msra.mxu0 0
        %2242 = vmatprep.subr.bf16.mxu0 0
        %2243 = vmatpush1.bf16.msra.mxu0 0
        %2244 = vmatprep.subr.bf16.mxu0 0
        %2245 = vmatpush1.bf16.msra.mxu0 0
        %2246 = vmatprep.subr.bf16.mxu0 0
        %2247 = vmatpush1.bf16.msra.mxu0 0
        %2248 = vmatprep.mubr.bf16.mxu0 0
        %2249 = vmatmul.mubr.bf16.gmra.mrb[0].mxu0 %v2136
        %v2250 = vpop.f32.mrb[0].mxu0
        %v2251 = vadd.f32 %v1946, %v2250
        %v2252 = vpop.f32.mrb[0].mxu0
        %v2253 = vpop.f32.mrb[0].mxu0
        %v2254 = vadd.f32 %v1949, %v2253
        %v2255 = vpop.f32.mrb[0].mxu0
        %2256 = vmatprep.mubr.bf16.mxu0 0
        %2257 = vmatmul.mubr.bf16.gmra.mrb[0].mxu0 %v2137
        %v2258 = vpop.f32.mrb[0].mxu0
        %v2259 = vadd.f32 %v1954, %v2258
        %v2260 = vpop.f32.mrb[0].mxu0
        %v2261 = vpop.f32.mrb[0].mxu0
        %v2262 = vadd.f32 %v1957, %v2261
        %v2263 = vpop.f32.mrb[0].mxu0
        %2264 = vmatprep.mubr.bf16.mxu0 0
        %2265 = vmatmul.mubr.bf16.gmra.mrb[0].mxu0 %v2138
        %v2266 = vpop.f32.mrb[0].mxu0
        %v2267 = vadd.f32 %v1962, %v2266
        %v2268 = vpop.f32.mrb[0].mxu0
        %v2269 = vpop.f32.mrb[0].mxu0
        %v2270 = vadd.f32 %v1965, %v2269
        %v2271 = vpop.f32.mrb[0].mxu0
        %2272 = vmatprep.mubr.bf16.mxu0 0
        %2273 = vmatmul.mubr.bf16.gmra.mrb[0].mxu0 %v2139
        %v2274 = vpop.f32.mrb[0].mxu0
        %v2275 = vadd.f32 %v1970, %v2274
        %v2276 = vpop.f32.mrb[0].mxu0
        %v2277 = vpop.f32.mrb[0].mxu0
        %v2278 = vadd.f32 %v1973, %v2277
        %v2279 = vpop.f32.mrb[0].mxu0
        %2280 = vmatprep.mubr.bf16.mxu0 0
        %2281 = vmatmul.mubr.bf16.gmra.mrb[0].mxu0 %v2140
        %v2282 = vpop.f32.mrb[0].mxu0
        %v2283 = vadd.f32 %v1978, %v2282
        %v2284 = vpop.f32.mrb[0].mxu0
        %v2285 = vpop.f32.mrb[0].mxu0
        %v2286 = vadd.f32 %v1981, %v2285
        %v2287 = vpop.f32.mrb[0].mxu0
        %2288 = vmatprep.mubr.bf16.mxu0 0
        %2289 = vmatmul.mubr.bf16.gmra.mrb[0].mxu0 %v2141
        %v2290 = vpop.f32.mrb[0].mxu0
        %v2291 = vadd.f32 %v1986, %v2290
        %v2292 = vpop.f32.mrb[0].mxu0
        %v2293 = vpop.f32.mrb[0].mxu0
        %v2294 = vadd.f32 %v1989, %v2293
        %v2295 = vpop.f32.mrb[0].mxu0
        %2296 = vmatprep.mubr.bf16.mxu0 0
        %2297 = vmatmul.mubr.bf16.gmra.mrb[0].mxu0 %v2142
        %v2298 = vpop.f32.mrb[0].mxu0
        %v2299 = vadd.f32 %v1994, %v2298
        %v2300 = vpop.f32.mrb[0].mxu0
        %v2301 = vpop.f32.mrb[0].mxu0
        %v2302 = vadd.f32 %v1997, %v2301
        %v2303 = vpop.f32.mrb[0].mxu0
        %2304 = vmatprep.mubr.bf16.mxu0 0
        %2305 = vmatmul.mubr.bf16.gmra.mrb[0].mxu0 %v2143
        %v2306 = vpop.f32.mrb[0].mxu0
        %v2307 = vadd.f32 %v2002, %v2306
        %v2308 = vpop.f32.mrb[0].mxu0
        %v2309 = vpop.f32.mrb[0].mxu0
        %v2310 = vadd.f32 %v2005, %v2309
        %v2311 = vpop.f32.mrb[0].mxu0
        %2312 = vmatprep.mubr.bf16.mxu0 0
        %2313 = vmatmul.mubr.bf16.gmra.mrb[0].mxu0 %v2144
        %v2314 = vpop.f32.mrb[0].mxu0
        %v2315 = vadd.f32 %v2010, %v2314
        %v2316 = vpop.f32.mrb[0].mxu0
        %v2317 = vpop.f32.mrb[0].mxu0
        %v2318 = vadd.f32 %v2013, %v2317
        %v2319 = vpop.f32.mrb[0].mxu0
        %2320 = vmatprep.mubr.bf16.mxu0 0
        %2321 = vmatmul.mubr.bf16.gmra.mrb[0].mxu0 %v2145
        %v2322 = vpop.f32.mrb[0].mxu0
        %v2323 = vadd.f32 %v2018, %v2322
        %v2324 = vpop.f32.mrb[0].mxu0
        %v2325 = vpop.f32.mrb[0].mxu0
        %v2326 = vadd.f32 %v2021, %v2325
        %v2327 = vpop.f32.mrb[0].mxu0
        %2328 = vmatprep.mubr.bf16.mxu0 0
        %2329 = vmatmul.mubr.bf16.gmra.mrb[0].mxu0 %v2146
        %v2330 = vpop.f32.mrb[0].mxu0
        %v2331 = vadd.f32 %v2026, %v2330
        %v2332 = vpop.f32.mrb[0].mxu0
        %v2333 = vpop.f32.mrb[0].mxu0
        %v2334 = vadd.f32 %v2029, %v2333
        %v2335 = vpop.f32.mrb[0].mxu0
        %2336 = vmatprep.mubr.bf16.mxu0 0
        %2337 = vmatmul.mubr.bf16.gmra.mrb[0].mxu0 %v2147
        %v2338 = vpop.f32.mrb[0].mxu0
        %v2339 = vadd.f32 %v2034, %v2338
        %v2340 = vpop.f32.mrb[0].mxu0
        %v2341 = vpop.f32.mrb[0].mxu0
        %v2342 = vadd.f32 %v2037, %v2341
        %v2343 = vpop.f32.mrb[0].mxu0
        %2344 = vmatprep.mubr.bf16.mxu0 0
        %2345 = vmatmul.mubr.bf16.gmra.mrb[0].mxu0 %v2148
        %v2346 = vpop.f32.mrb[0].mxu0
        %v2347 = vadd.f32 %v2042, %v2346
        %v2348 = vpop.f32.mrb[0].mxu0
        %v2349 = vpop.f32.mrb[0].mxu0
        %v2350 = vadd.f32 %v2045, %v2349
        %v2351 = vpop.f32.mrb[0].mxu0
        %2352 = vmatprep.mubr.bf16.mxu0 0
        %2353 = vmatmul.mubr.bf16.gmra.mrb[0].mxu0 %v2149
        %v2354 = vpop.f32.mrb[0].mxu0
        %v2355 = vadd.f32 %v2050, %v2354
        %v2356 = vpop.f32.mrb[0].mxu0
        %v2357 = vpop.f32.mrb[0].mxu0
        %v2358 = vadd.f32 %v2053, %v2357
        %v2359 = vpop.f32.mrb[0].mxu0
        %2360 = vmatprep.mubr.bf16.mxu0 0
        %2361 = vmatmul.mubr.bf16.gmra.mrb[0].mxu0 %v2150
        %v2362 = vpop.f32.mrb[0].mxu0
        %v2363 = vadd.f32 %v2058, %v2362
        %v2364 = vpop.f32.mrb[0].mxu0
        %v2365 = vpop.f32.mrb[0].mxu0
        %v2366 = vadd.f32 %v2061, %v2365
        %v2367 = vpop.f32.mrb[0].mxu0
        %2368 = vmatprep.mubr.bf16.mxu0 0
        %2369 = vmatmul.mubr.bf16.gmra.mrb[0].mxu0 %v2151
        %v2370 = vpop.f32.mrb[0].mxu0
        %v2371 = vadd.f32 %v2066, %v2370
        %v2372 = vpop.f32.mrb[0].mxu0
        %v2373 = vpop.f32.mrb[0].mxu0
        %v2374 = vadd.f32 %v2069, %v2373
        %v2375 = vpop.f32.mrb[0].mxu0
        %2376 = vdwg.mxu0
        %v2377 = vld [vmem:[#allocation2] sm:$0xe]
        %v2378 = vld [vmem:[#allocation2 + $0xc] sm:$0xe]
        %v2379 = vld [vmem:[#allocation2 + $0x18] sm:$0xe]
        %v2380 = vld [vmem:[#allocation2 + $0x24] sm:$0xe]
        %v2381 = vld [vmem:[#allocation2 + $0x30] sm:$0xe]
        %v2382 = vld [vmem:[#allocation2 + $0x3c] sm:$0xe]
        %v2383 = vld [vmem:[#allocation2 + $0x48] sm:$0xe]
        %v2384 = vld [vmem:[#allocation2 + $0x54] sm:$0xe]
        %v2385 = vld [vmem:[#allocation2 + $0x60] sm:$0xe]
        %v2386 = vld [vmem:[#allocation2 + $0x6c] sm:$0xe]
        %v2387 = vld [vmem:[#allocation2 + $0x78] sm:$0xe]
        %v2388 = vld [vmem:[#allocation2 + $0x84] sm:$0xe]
        %v2389 = vld [vmem:[#allocation2 + $0x90] sm:$0xe]
        %v2390 = vld [vmem:[#allocation2 + $0x9c] sm:$0xe]
        %v2391 = vld [vmem:[#allocation2 + $0xa8] sm:$0xe]
        %v2392 = vld [vmem:[#allocation2 + $0xb4] sm:$0xe]
        %vm2425 = vcmask 1042432
        %vm2426 = vcmask 1046532
        %vm2427 = vmor %vm2425, %vm2426
        %v2428 = vrot.slane %v2377, 5
        %v2429 = vrot.slane %v2428, 4
        %v2430 = vrot.slane %v1332, 5
        %v2431 = vsel %vm2427, %v2429, %v2430
        %v2432 = vrot.slane %v2430, 4
        %v2433 = vrot.slane %v1379, 5
        %v2434 = vsel %vm2427, %v2432, %v2433
        %v2435 = vrot.slane %v2378, 5
        %v2436 = vrot.slane %v2435, 4
        %v2437 = vrot.slane %v1334, 5
        %v2438 = vsel %vm2427, %v2436, %v2437
        %v2439 = vrot.slane %v2437, 4
        %v2440 = vrot.slane %v1380, 5
        %v2441 = vsel %vm2427, %v2439, %v2440
        %v2442 = vrot.slane %v2379, 5
        %v2443 = vrot.slane %v2442, 4
        %v2444 = vrot.slane %v1336, 5
        %v2445 = vsel %vm2427, %v2443, %v2444
        %v2446 = vrot.slane %v2444, 4
        %v2447 = vrot.slane %v1381, 5
        %v2448 = vsel %vm2427, %v2446, %v2447
        %v2449 = vrot.slane %v2380, 5
        %v2450 = vrot.slane %v2449, 4
        %v2451 = vrot.slane %v1338, 5
        %v2452 = vsel %vm2427, %v2450, %v2451
        %v2453 = vrot.slane %v2451, 4
        %v2454 = vrot.slane %v1382, 5
        %v2455 = vsel %vm2427, %v2453, %v2454
        %v2456 = vrot.slane %v2381, 5
        %v2457 = vrot.slane %v2456, 4
        %v2458 = vrot.slane %v1340, 5
        %v2459 = vsel %vm2427, %v2457, %v2458
        %v2460 = vrot.slane %v2458, 4
        %v2461 = vrot.slane %v1383, 5
        %v2462 = vsel %vm2427, %v2460, %v2461
        %v2463 = vrot.slane %v2382, 5
        %v2464 = vrot.slane %v2463, 4
        %v2465 = vrot.slane %v1342, 5
        %v2466 = vsel %vm2427, %v2464, %v2465
        %v2467 = vrot.slane %v2465, 4
        %v2468 = vrot.slane %v1384, 5
        %v2469 = vsel %vm2427, %v2467, %v2468
        %v2470 = vrot.slane %v2383, 5
        %v2471 = vrot.slane %v2470, 4
        %v2472 = vrot.slane %v1344, 5
        %v2473 = vsel %vm2427, %v2471, %v2472
        %v2474 = vrot.slane %v2472, 4
        %v2475 = vrot.slane %v1385, 5
        %v2476 = vsel %vm2427, %v2474, %v2475
        %v2477 = vrot.slane %v2384, 5
        %v2478 = vrot.slane %v2477, 4
        %v2479 = vrot.slane %v1346, 5
        %v2480 = vsel %vm2427, %v2478, %v2479
        %v2481 = vrot.slane %v2479, 4
        %v2482 = vrot.slane %v1386, 5
        %v2483 = vsel %vm2427, %v2481, %v2482
        %v2484 = vrot.slane %v2385, 5
        %v2485 = vrot.slane %v2484, 4
        %v2486 = vrot.slane %v1348, 5
        %v2487 = vsel %vm2427, %v2485, %v2486
        %v2488 = vrot.slane %v2486, 4
        %v2489 = vrot.slane %v1387, 5
        %v2490 = vsel %vm2427, %v2488, %v2489
        %v2491 = vrot.slane %v2386, 5
        %v2492 = vrot.slane %v2491, 4
        %v2493 = vrot.slane %v1350, 5
        %v2494 = vsel %vm2427, %v2492, %v2493
        %v2495 = vrot.slane %v2493, 4
        %v2496 = vrot.slane %v1388, 5
        %v2497 = vsel %vm2427, %v2495, %v2496
        %v2498 = vrot.slane %v2387, 5
        %v2499 = vrot.slane %v2498, 4
        %v2500 = vrot.slane %v1352, 5
        %v2501 = vsel %vm2427, %v2499, %v2500
        %v2502 = vrot.slane %v2500, 4
        %v2503 = vrot.slane %v1389, 5
        %v2504 = vsel %vm2427, %v2502, %v2503
        %v2505 = vrot.slane %v2388, 5
        %v2506 = vrot.slane %v2505, 4
        %v2507 = vrot.slane %v1354, 5
        %v2508 = vsel %vm2427, %v2506, %v2507
        %v2509 = vrot.slane %v2507, 4
        %v2510 = vrot.slane %v1390, 5
        %v2511 = vsel %vm2427, %v2509, %v2510
        %v2512 = vrot.slane %v2389, 5
        %v2513 = vrot.slane %v2512, 4
        %v2514 = vrot.slane %v1356, 5
        %v2515 = vsel %vm2427, %v2513, %v2514
        %v2516 = vrot.slane %v2514, 4
        %v2517 = vrot.slane %v1391, 5
        %v2518 = vsel %vm2427, %v2516, %v2517
        %v2519 = vrot.slane %v2390, 5
        %v2520 = vrot.slane %v2519, 4
        %v2521 = vrot.slane %v1358, 5
        %v2522 = vsel %vm2427, %v2520, %v2521
        %v2523 = vrot.slane %v2521, 4
        %v2524 = vrot.slane %v1392, 5
        %v2525 = vsel %vm2427, %v2523, %v2524
        %v2526 = vrot.slane %v2391, 5
        %v2527 = vrot.slane %v2526, 4
        %v2528 = vrot.slane %v1360, 5
        %v2529 = vsel %vm2427, %v2527, %v2528
        %v2530 = vrot.slane %v2528, 4
        %v2531 = vrot.slane %v1393, 5
        %v2532 = vsel %vm2427, %v2530, %v2531
        %v2533 = vrot.slane %v2392, 5
        %v2534 = vrot.slane %v2533, 4
        %v2535 = vrot.slane %v1362, 5
        %v2536 = vsel %vm2427, %v2534, %v2535
        %v2537 = vrot.slane %v2535, 4
        %v2538 = vrot.slane %v1394, 5
        %v2539 = vsel %vm2427, %v2537, %v2538
        %s2540 = scalar_lea.vmem [#allocation6], 128
        %v2541 = vld [vmem:[%s2540] sm:$0xf]
        %v2542 = vld [vmem:[%s2540 + $0x4] sm:$0xf]
        %v2543 = vld [vmem:[%s2540 + $0x8] sm:$0xf]
        %v2544 = vld [vmem:[%s2540 + $0xc] sm:$0xf]
        %v2545 = vld [vmem:[%s2540 + $0x10] sm:$0xf]
        %v2546 = vld [vmem:[%s2540 + $0x14] sm:$0xf]
        %v2547 = vld [vmem:[%s2540 + $0x18] sm:$0xf]
        %v2548 = vld [vmem:[%s2540 + $0x1c] sm:$0xf]
        %v2549 = vld [vmem:[%s2540 + $0x20] sm:$0xf]
        %v2550 = vld [vmem:[%s2540 + $0x24] sm:$0xf]
        %v2551 = vld [vmem:[%s2540 + $0x28] sm:$0xf]
        %v2552 = vld [vmem:[%s2540 + $0x2c] sm:$0xf]
        %v2553 = vld [vmem:[%s2540 + $0x30] sm:$0xf]
        %v2554 = vld [vmem:[%s2540 + $0x34] sm:$0xf]
        %v2555 = vld [vmem:[%s2540 + $0x38] sm:$0xf]
        %v2556 = vld [vmem:[%s2540 + $0x3c] sm:$0xf]
        %v2557 = vunpack.c.l.b16 %v2431
        %v2558 = vunpack.c.l.b16 %v2434
        %v2559 = vunpack.c.l.b16 %v2438
        %v2560 = vunpack.c.l.b16 %v2441
        %v2561 = vunpack.c.l.b16 %v2445
        %v2562 = vunpack.c.l.b16 %v2448
        %v2563 = vunpack.c.l.b16 %v2452
        %v2564 = vunpack.c.l.b16 %v2455
        %v2565 = vunpack.c.l.b16 %v2459
        %v2566 = vunpack.c.l.b16 %v2462
        %v2567 = vunpack.c.l.b16 %v2466
        %v2568 = vunpack.c.l.b16 %v2469
        %v2569 = vunpack.c.l.b16 %v2473
        %v2570 = vunpack.c.l.b16 %v2476
        %v2571 = vunpack.c.l.b16 %v2480
        %v2572 = vunpack.c.l.b16 %v2483
        %v2573 = vunpack.c.l.b16 %v2487
        %v2574 = vunpack.c.l.b16 %v2490
        %v2575 = vunpack.c.l.b16 %v2494
        %v2576 = vunpack.c.l.b16 %v2497
        %v2577 = vunpack.c.l.b16 %v2501
        %v2578 = vunpack.c.l.b16 %v2504
        %v2579 = vunpack.c.l.b16 %v2508
        %v2580 = vunpack.c.l.b16 %v2511
        %v2581 = vunpack.c.l.b16 %v2515
        %v2582 = vunpack.c.l.b16 %v2518
        %v2583 = vunpack.c.l.b16 %v2522
        %v2584 = vunpack.c.l.b16 %v2525
        %v2585 = vunpack.c.l.b16 %v2529
        %v2586 = vunpack.c.l.b16 %v2532
        %v2587 = vunpack.c.l.b16 %v2536
        %v2588 = vunpack.c.l.b16 %v2539
        %v2589 = vpack.c.b16 %v2558, %v2557
        %v2590 = vpack.c.b16 %v2560, %v2559
        %v2591 = vpack.c.b16 %v2562, %v2561
        %v2592 = vpack.c.b16 %v2564, %v2563
        %v2593 = vpack.c.b16 %v2566, %v2565
        %v2594 = vpack.c.b16 %v2568, %v2567
        %v2595 = vpack.c.b16 %v2570, %v2569
        %v2596 = vpack.c.b16 %v2572, %v2571
        %v2597 = vpack.c.b16 %v2574, %v2573
        %v2598 = vpack.c.b16 %v2576, %v2575
        %v2599 = vpack.c.b16 %v2578, %v2577
        %v2600 = vpack.c.b16 %v2580, %v2579
        %v2601 = vpack.c.b16 %v2582, %v2581
        %v2602 = vpack.c.b16 %v2584, %v2583
        %v2603 = vpack.c.b16 %v2586, %v2585
        %v2604 = vpack.c.b16 %v2588, %v2587
        %v2637 = vunpack.c.l.b16 %v2541
        %v2638 = vunpack.c.l.b16 %v2542
        %v2639 = vunpack.c.l.b16 %v2543
        %v2640 = vunpack.c.l.b16 %v2544
        %v2641 = vunpack.c.l.b16 %v2545
        %v2642 = vunpack.c.l.b16 %v2546
        %v2643 = vunpack.c.l.b16 %v2547
        %v2644 = vunpack.c.l.b16 %v2548
        %v2645 = vunpack.c.l.b16 %v2549
        %v2646 = vunpack.c.l.b16 %v2550
        %v2647 = vunpack.c.l.b16 %v2551
        %v2648 = vunpack.c.l.b16 %v2552
        %v2649 = vunpack.c.l.b16 %v2553
        %v2650 = vunpack.c.l.b16 %v2554
        %v2651 = vunpack.c.l.b16 %v2555
        %v2652 = vunpack.c.l.b16 %v2556
        %v2653 = vpack.c.b16 %v2638, %v2637
        %v2654 = vpack.c.b16 %v2640, %v2639
        %v2655 = vpack.c.b16 %v2642, %v2641
        %v2656 = vpack.c.b16 %v2644, %v2643
        %v2657 = vpack.c.b16 %v2646, %v2645
        %v2658 = vpack.c.b16 %v2648, %v2647
        %v2659 = vpack.c.b16 %v2650, %v2649
        %v2660 = vpack.c.b16 %v2652, %v2651
        %2669 = vmatprep.subr.bf16.mxu0 0
        %2670 = vmatpush1.bf16.msra.mxu0 %v2653
        %2671 = vmatprep.subr.bf16.mxu0 0
        %2672 = vmatpush1.bf16.msra.mxu0 %v2654
        %2673 = vmatprep.subr.bf16.mxu0 0
        %2674 = vmatpush1.bf16.msra.mxu0 %v2655
        %2675 = vmatprep.subr.bf16.mxu0 0
        %2676 = vmatpush1.bf16.msra.mxu0 %v2656
        %2677 = vmatprep.subr.bf16.mxu0 0
        %2678 = vmatpush1.bf16.msra.mxu0 %v2657
        %2679 = vmatprep.subr.bf16.mxu0 0
        %2680 = vmatpush1.bf16.msra.mxu0 %v2658
        %2681 = vmatprep.subr.bf16.mxu0 0
        %2682 = vmatpush1.bf16.msra.mxu0 %v2659
        %2683 = vmatprep.subr.bf16.mxu0 0
        %2684 = vmatpush1.bf16.msra.mxu0 %v2660
        %2685 = vmatprep.subr.bf16.mxu0 0
        %2686 = vmatpush1.bf16.msra.mxu0 0
        %2687 = vmatprep.subr.bf16.mxu0 0
        %2688 = vmatpush1.bf16.msra.mxu0 0
        %2689 = vmatprep.subr.bf16.mxu0 0
        %2690 = vmatpush1.bf16.msra.mxu0 0
        %2691 = vmatprep.subr.bf16.mxu0 0
        %2692 = vmatpush1.bf16.msra.mxu0 0
        %2693 = vmatprep.subr.bf16.mxu0 0
        %2694 = vmatpush1.bf16.msra.mxu0 0
        %2695 = vmatprep.subr.bf16.mxu0 0
        %2696 = vmatpush1.bf16.msra.mxu0 0
        %2697 = vmatprep.subr.bf16.mxu0 0
        %2698 = vmatpush1.bf16.msra.mxu0 0
        %2699 = vmatprep.subr.bf16.mxu0 0
        %2700 = vmatpush1.bf16.msra.mxu0 0
        %2701 = vmatprep.mubr.bf16.mxu0 0
        %2702 = vmatmul.mubr.bf16.gmra.mrb[0].mxu0 %v2589
        %v2703 = vpop.f32.mrb[0].mxu0
        %v2704 = vadd.f32 0.0, %v2703
        %v2705 = vpop.f32.mrb[0].mxu0
        %v2706 = vpop.f32.mrb[0].mxu0
        %v2707 = vadd.f32 0.0, %v2706
        %v2708 = vpop.f32.mrb[0].mxu0
        %2709 = vmatprep.mubr.bf16.mxu0 0
        %2710 = vmatmul.mubr.bf16.gmra.mrb[0].mxu0 %v2590
        %v2711 = vpop.f32.mrb[0].mxu0
        %v2712 = vadd.f32 0.0, %v2711
        %v2713 = vpop.f32.mrb[0].mxu0
        %v2714 = vpop.f32.mrb[0].mxu0
        %v2715 = vadd.f32 0.0, %v2714
        %v2716 = vpop.f32.mrb[0].mxu0
        %2717 = vmatprep.mubr.bf16.mxu0 0
        %2718 = vmatmul.mubr.bf16.gmra.mrb[0].mxu0 %v2591
        %v2719 = vpop.f32.mrb[0].mxu0
        %v2720 = vadd.f32 0.0, %v2719
        %v2721 = vpop.f32.mrb[0].mxu0
        %v2722 = vpop.f32.mrb[0].mxu0
        %v2723 = vadd.f32 0.0, %v2722
        %v2724 = vpop.f32.mrb[0].mxu0
        %2725 = vmatprep.mubr.bf16.mxu0 0
        %2726 = vmatmul.mubr.bf16.gmra.mrb[0].mxu0 %v2592
        %v2727 = vpop.f32.mrb[0].mxu0
        %v2728 = vadd.f32 0.0, %v2727
        %v2729 = vpop.f32.mrb[0].mxu0
        %v2730 = vpop.f32.mrb[0].mxu0
        %v2731 = vadd.f32 0.0, %v2730
        %v2732 = vpop.f32.mrb[0].mxu0
        %2733 = vmatprep.mubr.bf16.mxu0 0
        %2734 = vmatmul.mubr.bf16.gmra.mrb[0].mxu0 %v2593
        %v2735 = vpop.f32.mrb[0].mxu0
        %v2736 = vadd.f32 0.0, %v2735
        %v2737 = vpop.f32.mrb[0].mxu0
        %v2738 = vpop.f32.mrb[0].mxu0
        %v2739 = vadd.f32 0.0, %v2738
        %v2740 = vpop.f32.mrb[0].mxu0
        %2741 = vmatprep.mubr.bf16.mxu0 0
        %2742 = vmatmul.mubr.bf16.gmra.mrb[0].mxu0 %v2594
        %v2743 = vpop.f32.mrb[0].mxu0
        %v2744 = vadd.f32 0.0, %v2743
        %v2745 = vpop.f32.mrb[0].mxu0
        %v2746 = vpop.f32.mrb[0].mxu0
        %v2747 = vadd.f32 0.0, %v2746
        %v2748 = vpop.f32.mrb[0].mxu0
        %2749 = vmatprep.mubr.bf16.mxu0 0
        %2750 = vmatmul.mubr.bf16.gmra.mrb[0].mxu0 %v2595
        %v2751 = vpop.f32.mrb[0].mxu0
        %v2752 = vadd.f32 0.0, %v2751
        %v2753 = vpop.f32.mrb[0].mxu0
        %v2754 = vpop.f32.mrb[0].mxu0
        %v2755 = vadd.f32 0.0, %v2754
        %v2756 = vpop.f32.mrb[0].mxu0
        %2757 = vmatprep.mubr.bf16.mxu0 0
        %2758 = vmatmul.mubr.bf16.gmra.mrb[0].mxu0 %v2596
        %v2759 = vpop.f32.mrb[0].mxu0
        %v2760 = vadd.f32 0.0, %v2759
        %v2761 = vpop.f32.mrb[0].mxu0
        %v2762 = vpop.f32.mrb[0].mxu0
        %v2763 = vadd.f32 0.0, %v2762
        %v2764 = vpop.f32.mrb[0].mxu0
        %2765 = vmatprep.mubr.bf16.mxu0 0
        %2766 = vmatmul.mubr.bf16.gmra.mrb[0].mxu0 %v2597
        %v2767 = vpop.f32.mrb[0].mxu0
        %v2768 = vadd.f32 0.0, %v2767
        %v2769 = vpop.f32.mrb[0].mxu0
        %v2770 = vpop.f32.mrb[0].mxu0
        %v2771 = vadd.f32 0.0, %v2770
        %v2772 = vpop.f32.mrb[0].mxu0
        %2773 = vmatprep.mubr.bf16.mxu0 0
        %2774 = vmatmul.mubr.bf16.gmra.mrb[0].mxu0 %v2598
        %v2775 = vpop.f32.mrb[0].mxu0
        %v2776 = vadd.f32 0.0, %v2775
        %v2777 = vpop.f32.mrb[0].mxu0
        %v2778 = vpop.f32.mrb[0].mxu0
        %v2779 = vadd.f32 0.0, %v2778
        %v2780 = vpop.f32.mrb[0].mxu0
        %2781 = vmatprep.mubr.bf16.mxu0 0
        %2782 = vmatmul.mubr.bf16.gmra.mrb[0].mxu0 %v2599
        %v2783 = vpop.f32.mrb[0].mxu0
        %v2784 = vadd.f32 0.0, %v2783
        %v2785 = vpop.f32.mrb[0].mxu0
        %v2786 = vpop.f32.mrb[0].mxu0
        %v2787 = vadd.f32 0.0, %v2786
        %v2788 = vpop.f32.mrb[0].mxu0
        %2789 = vmatprep.mubr.bf16.mxu0 0
        %2790 = vmatmul.mubr.bf16.gmra.mrb[0].mxu0 %v2600
        %v2791 = vpop.f32.mrb[0].mxu0
        %v2792 = vadd.f32 0.0, %v2791
        %v2793 = vpop.f32.mrb[0].mxu0
        %v2794 = vpop.f32.mrb[0].mxu0
        %v2795 = vadd.f32 0.0, %v2794
        %v2796 = vpop.f32.mrb[0].mxu0
        %2797 = vmatprep.mubr.bf16.mxu0 0
        %2798 = vmatmul.mubr.bf16.gmra.mrb[0].mxu0 %v2601
        %v2799 = vpop.f32.mrb[0].mxu0
        %v2800 = vadd.f32 0.0, %v2799
        %v2801 = vpop.f32.mrb[0].mxu0
        %v2802 = vpop.f32.mrb[0].mxu0
        %v2803 = vadd.f32 0.0, %v2802
        %v2804 = vpop.f32.mrb[0].mxu0
        %2805 = vmatprep.mubr.bf16.mxu0 0
        %2806 = vmatmul.mubr.bf16.gmra.mrb[0].mxu0 %v2602
        %v2807 = vpop.f32.mrb[0].mxu0
        %v2808 = vadd.f32 0.0, %v2807
        %v2809 = vpop.f32.mrb[0].mxu0
        %v2810 = vpop.f32.mrb[0].mxu0
        %v2811 = vadd.f32 0.0, %v2810
        %v2812 = vpop.f32.mrb[0].mxu0
        %2813 = vmatprep.mubr.bf16.mxu0 0
        %2814 = vmatmul.mubr.bf16.gmra.mrb[0].mxu0 %v2603
        %v2815 = vpop.f32.mrb[0].mxu0
        %v2816 = vadd.f32 0.0, %v2815
        %v2817 = vpop.f32.mrb[0].mxu0
        %v2818 = vpop.f32.mrb[0].mxu0
        %v2819 = vadd.f32 0.0, %v2818
        %v2820 = vpop.f32.mrb[0].mxu0
        %2821 = vmatprep.mubr.bf16.mxu0 0
        %2822 = vmatmul.mubr.bf16.gmra.mrb[0].mxu0 %v2604
        %v2823 = vpop.f32.mrb[0].mxu0
        %v2824 = vadd.f32 0.0, %v2823
        %v2825 = vpop.f32.mrb[0].mxu0
        %v2826 = vpop.f32.mrb[0].mxu0
        %v2827 = vadd.f32 0.0, %v2826
        %v2828 = vpop.f32.mrb[0].mxu0
        %2829 = vdwg.mxu0
        %v2830 = vadd.f32 %v2251, %v2704
        %v2831 = vadd.f32 %v2254, %v2707
        %v2832 = vadd.f32 %v2259, %v2712
        %v2833 = vadd.f32 %v2262, %v2715
        %v2834 = vadd.f32 %v2267, %v2720
        %v2835 = vadd.f32 %v2270, %v2723
        %v2836 = vadd.f32 %v2275, %v2728
        %v2837 = vadd.f32 %v2278, %v2731
        %v2838 = vadd.f32 %v2283, %v2736
        %v2839 = vadd.f32 %v2286, %v2739
        %v2840 = vadd.f32 %v2291, %v2744
        %v2841 = vadd.f32 %v2294, %v2747
        %v2842 = vadd.f32 %v2299, %v2752
        %v2843 = vadd.f32 %v2302, %v2755
        %v2844 = vadd.f32 %v2307, %v2760
        %v2845 = vadd.f32 %v2310, %v2763
        %v2846 = vadd.f32 %v2315, %v2768
        %v2847 = vadd.f32 %v2318, %v2771
        %v2848 = vadd.f32 %v2323, %v2776
        %v2849 = vadd.f32 %v2326, %v2779
        %v2850 = vadd.f32 %v2331, %v2784
        %v2851 = vadd.f32 %v2334, %v2787
        %v2852 = vadd.f32 %v2339, %v2792
        %v2853 = vadd.f32 %v2342, %v2795
        %v2854 = vadd.f32 %v2347, %v2800
        %v2855 = vadd.f32 %v2350, %v2803
        %v2856 = vadd.f32 %v2355, %v2808
        %v2857 = vadd.f32 %v2358, %v2811
        %v2858 = vadd.f32 %v2363, %v2816
        %v2859 = vadd.f32 %v2366, %v2819
        %v2860 = vadd.f32 %v2371, %v2824
        %v2861 = vadd.f32 %v2374, %v2827
        %v2862 = vld [vmem:[%s713] sm:$0xf]
        %v2863 = vld [vmem:[%s713 + $0x4] sm:$0xf]
        %v2864 = vld [vmem:[%s713 + $0xc] sm:$0xf]
        %v2865 = vld [vmem:[%s713 + $0x10] sm:$0xf]
        %v2866 = vld [vmem:[%s713 + $0x18] sm:$0xf]
        %v2867 = vld [vmem:[%s713 + $0x1c] sm:$0xf]
        %v2868 = vld [vmem:[%s713 + $0x24] sm:$0xf]
        %v2869 = vld [vmem:[%s713 + $0x28] sm:$0xf]
        %v2870 = vld [vmem:[%s713 + $0x30] sm:$0xf]
        %v2871 = vld [vmem:[%s713 + $0x34] sm:$0xf]
        %v2872 = vld [vmem:[%s713 + $0x3c] sm:$0xf]
        %v2873 = vld [vmem:[%s713 + $0x40] sm:$0xf]
        %v2874 = vld [vmem:[%s713 + $0x48] sm:$0xf]
        %v2875 = vld [vmem:[%s713 + $0x4c] sm:$0xf]
        %v2876 = vld [vmem:[%s713 + $0x54] sm:$0xf]
        %v2877 = vld [vmem:[%s713 + $0x58] sm:$0xf]
        %v2878 = vld [vmem:[%s713 + $0x60] sm:$0xf]
        %v2879 = vld [vmem:[%s713 + $0x64] sm:$0xf]
        %v2880 = vld [vmem:[%s713 + $0x6c] sm:$0xf]
        %v2881 = vld [vmem:[%s713 + $0x70] sm:$0xf]
        %v2882 = vld [vmem:[%s713 + $0x78] sm:$0xf]
        %v2883 = vld [vmem:[%s713 + $0x7c] sm:$0xf]
        %v2884 = vld [vmem:[%s713 + $0x84] sm:$0xf]
        %v2885 = vld [vmem:[%s713 + $0x88] sm:$0xf]
        %v2886 = vld [vmem:[%s713 + $0x90] sm:$0xf]
        %v2887 = vld [vmem:[%s713 + $0x94] sm:$0xf]
        %v2888 = vld [vmem:[%s713 + $0x9c] sm:$0xf]
        %v2889 = vld [vmem:[%s713 + $0xa0] sm:$0xf]
        %v2890 = vld [vmem:[%s713 + $0xa8] sm:$0xf]
        %v2891 = vld [vmem:[%s713 + $0xac] sm:$0xf]
        %v2892 = vld [vmem:[%s713 + $0xb4] sm:$0xf]
        %v2893 = vld [vmem:[%s713 + $0xb8] sm:$0xf]
        %s2894 = scalar_lea.vmem [#allocation6], 192
        %v2895 = vld [vmem:[%s2894] sm:$0xf]
        %v2896 = vld [vmem:[%s2894 + $0x4] sm:$0xf]
        %v2897 = vld [vmem:[%s2894 + $0x8] sm:$0xf]
        %v2898 = vld [vmem:[%s2894 + $0xc] sm:$0xf]
        %v2899 = vld [vmem:[%s2894 + $0x10] sm:$0xf]
        %v2900 = vld [vmem:[%s2894 + $0x14] sm:$0xf]
        %v2901 = vld [vmem:[%s2894 + $0x18] sm:$0xf]
        %v2902 = vld [vmem:[%s2894 + $0x1c] sm:$0xf]
        %v2903 = vld [vmem:[%s2894 + $0x20] sm:$0xf]
        %v2904 = vld [vmem:[%s2894 + $0x24] sm:$0xf]
        %v2905 = vld [vmem:[%s2894 + $0x28] sm:$0xf]
        %v2906 = vld [vmem:[%s2894 + $0x2c] sm:$0xf]
        %v2907 = vld [vmem:[%s2894 + $0x30] sm:$0xf]
        %v2908 = vld [vmem:[%s2894 + $0x34] sm:$0xf]
        %v2909 = vld [vmem:[%s2894 + $0x38] sm:$0xf]
        %v2910 = vld [vmem:[%s2894 + $0x3c] sm:$0xf]
        %v2943 = vunpack.c.l.b16 %v2862
        %v2944 = vunpack.c.l.b16 %v2863
        %v2945 = vunpack.c.l.b16 %v2864
        %v2946 = vunpack.c.l.b16 %v2865
        %v2947 = vunpack.c.l.b16 %v2866
        %v2948 = vunpack.c.l.b16 %v2867
        %v2949 = vunpack.c.l.b16 %v2868
        %v2950 = vunpack.c.l.b16 %v2869
        %v2951 = vunpack.c.l.b16 %v2870
        %v2952 = vunpack.c.l.b16 %v2871
        %v2953 = vunpack.c.l.b16 %v2872
        %v2954 = vunpack.c.l.b16 %v2873
        %v2955 = vunpack.c.l.b16 %v2874
        %v2956 = vunpack.c.l.b16 %v2875
        %v2957 = vunpack.c.l.b16 %v2876
        %v2958 = vunpack.c.l.b16 %v2877
        %v2959 = vunpack.c.l.b16 %v2878
        %v2960 = vunpack.c.l.b16 %v2879
        %v2961 = vunpack.c.l.b16 %v2880
        %v2962 = vunpack.c.l.b16 %v2881
        %v2963 = vunpack.c.l.b16 %v2882
        %v2964 = vunpack.c.l.b16 %v2883
        %v2965 = vunpack.c.l.b16 %v2884
        %v2966 = vunpack.c.l.b16 %v2885
        %v2967 = vunpack.c.l.b16 %v2886
        %v2968 = vunpack.c.l.b16 %v2887
        %v2969 = vunpack.c.l.b16 %v2888
        %v2970 = vunpack.c.l.b16 %v2889
        %v2971 = vunpack.c.l.b16 %v2890
        %v2972 = vunpack.c.l.b16 %v2891
        %v2973 = vunpack.c.l.b16 %v2892
        %v2974 = vunpack.c.l.b16 %v2893
        %v2975 = vpack.c.b16 %v2944, %v2943
        %v2976 = vpack.c.b16 %v2946, %v2945
        %v2977 = vpack.c.b16 %v2948, %v2947
        %v2978 = vpack.c.b16 %v2950, %v2949
        %v2979 = vpack.c.b16 %v2952, %v2951
        %v2980 = vpack.c.b16 %v2954, %v2953
        %v2981 = vpack.c.b16 %v2956, %v2955
        %v2982 = vpack.c.b16 %v2958, %v2957
        %v2983 = vpack.c.b16 %v2960, %v2959
        %v2984 = vpack.c.b16 %v2962, %v2961
        %v2985 = vpack.c.b16 %v2964, %v2963
        %v2986 = vpack.c.b16 %v2966, %v2965
        %v2987 = vpack.c.b16 %v2968, %v2967
        %v2988 = vpack.c.b16 %v2970, %v2969
        %v2989 = vpack.c.b16 %v2972, %v2971
        %v2990 = vpack.c.b16 %v2974, %v2973
        %v3023 = vunpack.c.l.b16 %v2895
        %v3024 = vunpack.c.l.b16 %v2896
        %v3025 = vunpack.c.l.b16 %v2897
        %v3026 = vunpack.c.l.b16 %v2898
        %v3027 = vunpack.c.l.b16 %v2899
        %v3028 = vunpack.c.l.b16 %v2900
        %v3029 = vunpack.c.l.b16 %v2901
        %v3030 = vunpack.c.l.b16 %v2902
        %v3031 = vunpack.c.l.b16 %v2903
        %v3032 = vunpack.c.l.b16 %v2904
        %v3033 = vunpack.c.l.b16 %v2905
        %v3034 = vunpack.c.l.b16 %v2906
        %v3035 = vunpack.c.l.b16 %v2907
        %v3036 = vunpack.c.l.b16 %v2908
        %v3037 = vunpack.c.l.b16 %v2909
        %v3038 = vunpack.c.l.b16 %v2910
        %v3039 = vpack.c.b16 %v3024, %v3023
        %v3040 = vpack.c.b16 %v3026, %v3025
        %v3041 = vpack.c.b16 %v3028, %v3027
        %v3042 = vpack.c.b16 %v3030, %v3029
        %v3043 = vpack.c.b16 %v3032, %v3031
        %v3044 = vpack.c.b16 %v3034, %v3033
        %v3045 = vpack.c.b16 %v3036, %v3035
        %v3046 = vpack.c.b16 %v3038, %v3037
        %3055 = vmatprep.subr.bf16.mxu0 0
        %3056 = vmatpush1.bf16.msra.mxu0 %v3039
        %3057 = vmatprep.subr.bf16.mxu0 0
        %3058 = vmatpush1.bf16.msra.mxu0 %v3040
        %3059 = vmatprep.subr.bf16.mxu0 0
        %3060 = vmatpush1.bf16.msra.mxu0 %v3041
        %3061 = vmatprep.subr.bf16.mxu0 0
        %3062 = vmatpush1.bf16.msra.mxu0 %v3042
        %3063 = vmatprep.subr.bf16.mxu0 0
        %3064 = vmatpush1.bf16.msra.mxu0 %v3043
        %3065 = vmatprep.subr.bf16.mxu0 0
        %3066 = vmatpush1.bf16.msra.mxu0 %v3044
        %3067 = vmatprep.subr.bf16.mxu0 0
        %3068 = vmatpush1.bf16.msra.mxu0 %v3045
        %3069 = vmatprep.subr.bf16.mxu0 0
        %3070 = vmatpush1.bf16.msra.mxu0 %v3046
        %3071 = vmatprep.subr.bf16.mxu0 0
        %3072 = vmatpush1.bf16.msra.mxu0 0
        %3073 = vmatprep.subr.bf16.mxu0 0
        %3074 = vmatpush1.bf16.msra.mxu0 0
        %3075 = vmatprep.subr.bf16.mxu0 0
        %3076 = vmatpush1.bf16.msra.mxu0 0
        %3077 = vmatprep.subr.bf16.mxu0 0
        %3078 = vmatpush1.bf16.msra.mxu0 0
        %3079 = vmatprep.subr.bf16.mxu0 0
        %3080 = vmatpush1.bf16.msra.mxu0 0
        %3081 = vmatprep.subr.bf16.mxu0 0
        %3082 = vmatpush1.bf16.msra.mxu0 0
        %3083 = vmatprep.subr.bf16.mxu0 0
        %3084 = vmatpush1.bf16.msra.mxu0 0
        %3085 = vmatprep.subr.bf16.mxu0 0
        %3086 = vmatpush1.bf16.msra.mxu0 0
        %3087 = vmatprep.mubr.bf16.mxu0 0
        %3088 = vmatmul.mubr.bf16.gmra.mrb[0].mxu0 %v2975
        %v3089 = vpop.f32.mrb[0].mxu0
        %v3090 = vadd.f32 0.0, %v3089
        %v3091 = vpop.f32.mrb[0].mxu0
        %v3092 = vpop.f32.mrb[0].mxu0
        %v3093 = vadd.f32 0.0, %v3092
        %v3094 = vpop.f32.mrb[0].mxu0
        %3095 = vmatprep.mubr.bf16.mxu0 0
        %3096 = vmatmul.mubr.bf16.gmra.mrb[0].mxu0 %v2976
        %v3097 = vpop.f32.mrb[0].mxu0
        %v3098 = vadd.f32 0.0, %v3097
        %v3099 = vpop.f32.mrb[0].mxu0
        %v3100 = vpop.f32.mrb[0].mxu0
        %v3101 = vadd.f32 0.0, %v3100
        %v3102 = vpop.f32.mrb[0].mxu0
        %3103 = vmatprep.mubr.bf16.mxu0 0
        %3104 = vmatmul.mubr.bf16.gmra.mrb[0].mxu0 %v2977
        %v3105 = vpop.f32.mrb[0].mxu0
        %v3106 = vadd.f32 0.0, %v3105
        %v3107 = vpop.f32.mrb[0].mxu0
        %v3108 = vpop.f32.mrb[0].mxu0
        %v3109 = vadd.f32 0.0, %v3108
        %v3110 = vpop.f32.mrb[0].mxu0
        %3111 = vmatprep.mubr.bf16.mxu0 0
        %3112 = vmatmul.mubr.bf16.gmra.mrb[0].mxu0 %v2978
        %v3113 = vpop.f32.mrb[0].mxu0
        %v3114 = vadd.f32 0.0, %v3113
        %v3115 = vpop.f32.mrb[0].mxu0
        %v3116 = vpop.f32.mrb[0].mxu0
        %v3117 = vadd.f32 0.0, %v3116
        %v3118 = vpop.f32.mrb[0].mxu0
        %3119 = vmatprep.mubr.bf16.mxu0 0
        %3120 = vmatmul.mubr.bf16.gmra.mrb[0].mxu0 %v2979
        %v3121 = vpop.f32.mrb[0].mxu0
        %v3122 = vadd.f32 0.0, %v3121
        %v3123 = vpop.f32.mrb[0].mxu0
        %v3124 = vpop.f32.mrb[0].mxu0
        %v3125 = vadd.f32 0.0, %v3124
        %v3126 = vpop.f32.mrb[0].mxu0
        %3127 = vmatprep.mubr.bf16.mxu0 0
        %3128 = vmatmul.mubr.bf16.gmra.mrb[0].mxu0 %v2980
        %v3129 = vpop.f32.mrb[0].mxu0
        %v3130 = vadd.f32 0.0, %v3129
        %v3131 = vpop.f32.mrb[0].mxu0
        %v3132 = vpop.f32.mrb[0].mxu0
        %v3133 = vadd.f32 0.0, %v3132
        %v3134 = vpop.f32.mrb[0].mxu0
        %3135 = vmatprep.mubr.bf16.mxu0 0
        %3136 = vmatmul.mubr.bf16.gmra.mrb[0].mxu0 %v2981
        %v3137 = vpop.f32.mrb[0].mxu0
        %v3138 = vadd.f32 0.0, %v3137
        %v3139 = vpop.f32.mrb[0].mxu0
        %v3140 = vpop.f32.mrb[0].mxu0
        %v3141 = vadd.f32 0.0, %v3140
        %v3142 = vpop.f32.mrb[0].mxu0
        %3143 = vmatprep.mubr.bf16.mxu0 0
        %3144 = vmatmul.mubr.bf16.gmra.mrb[0].mxu0 %v2982
        %v3145 = vpop.f32.mrb[0].mxu0
        %v3146 = vadd.f32 0.0, %v3145
        %v3147 = vpop.f32.mrb[0].mxu0
        %v3148 = vpop.f32.mrb[0].mxu0
        %v3149 = vadd.f32 0.0, %v3148
        %v3150 = vpop.f32.mrb[0].mxu0
        %3151 = vmatprep.mubr.bf16.mxu0 0
        %3152 = vmatmul.mubr.bf16.gmra.mrb[0].mxu0 %v2983
        %v3153 = vpop.f32.mrb[0].mxu0
        %v3154 = vadd.f32 0.0, %v3153
        %v3155 = vpop.f32.mrb[0].mxu0
        %v3156 = vpop.f32.mrb[0].mxu0
        %v3157 = vadd.f32 0.0, %v3156
        %v3158 = vpop.f32.mrb[0].mxu0
        %3159 = vmatprep.mubr.bf16.mxu0 0
        %3160 = vmatmul.mubr.bf16.gmra.mrb[0].mxu0 %v2984
        %v3161 = vpop.f32.mrb[0].mxu0
        %v3162 = vadd.f32 0.0, %v3161
        %v3163 = vpop.f32.mrb[0].mxu0
        %v3164 = vpop.f32.mrb[0].mxu0
        %v3165 = vadd.f32 0.0, %v3164
        %v3166 = vpop.f32.mrb[0].mxu0
        %3167 = vmatprep.mubr.bf16.mxu0 0
        %3168 = vmatmul.mubr.bf16.gmra.mrb[0].mxu0 %v2985
        %v3169 = vpop.f32.mrb[0].mxu0
        %v3170 = vadd.f32 0.0, %v3169
        %v3171 = vpop.f32.mrb[0].mxu0
        %v3172 = vpop.f32.mrb[0].mxu0
        %v3173 = vadd.f32 0.0, %v3172
        %v3174 = vpop.f32.mrb[0].mxu0
        %3175 = vmatprep.mubr.bf16.mxu0 0
        %3176 = vmatmul.mubr.bf16.gmra.mrb[0].mxu0 %v2986
        %v3177 = vpop.f32.mrb[0].mxu0
        %v3178 = vadd.f32 0.0, %v3177
        %v3179 = vpop.f32.mrb[0].mxu0
        %v3180 = vpop.f32.mrb[0].mxu0
        %v3181 = vadd.f32 0.0, %v3180
        %v3182 = vpop.f32.mrb[0].mxu0
        %3183 = vmatprep.mubr.bf16.mxu0 0
        %3184 = vmatmul.mubr.bf16.gmra.mrb[0].mxu0 %v2987
        %v3185 = vpop.f32.mrb[0].mxu0
        %v3186 = vadd.f32 0.0, %v3185
        %v3187 = vpop.f32.mrb[0].mxu0
        %v3188 = vpop.f32.mrb[0].mxu0
        %v3189 = vadd.f32 0.0, %v3188
        %v3190 = vpop.f32.mrb[0].mxu0
        %3191 = vmatprep.mubr.bf16.mxu0 0
        %3192 = vmatmul.mubr.bf16.gmra.mrb[0].mxu0 %v2988
        %v3193 = vpop.f32.mrb[0].mxu0
        %v3194 = vadd.f32 0.0, %v3193
        %v3195 = vpop.f32.mrb[0].mxu0
        %v3196 = vpop.f32.mrb[0].mxu0
        %v3197 = vadd.f32 0.0, %v3196
        %v3198 = vpop.f32.mrb[0].mxu0
        %3199 = vmatprep.mubr.bf16.mxu0 0
        %3200 = vmatmul.mubr.bf16.gmra.mrb[0].mxu0 %v2989
        %v3201 = vpop.f32.mrb[0].mxu0
        %v3202 = vadd.f32 0.0, %v3201
        %v3203 = vpop.f32.mrb[0].mxu0
        %v3204 = vpop.f32.mrb[0].mxu0
        %v3205 = vadd.f32 0.0, %v3204
        %v3206 = vpop.f32.mrb[0].mxu0
        %3207 = vmatprep.mubr.bf16.mxu0 0
        %3208 = vmatmul.mubr.bf16.gmra.mrb[0].mxu0 %v2990
        %v3209 = vpop.f32.mrb[0].mxu0
        %v3210 = vadd.f32 0.0, %v3209
        %v3211 = vpop.f32.mrb[0].mxu0
        %v3212 = vpop.f32.mrb[0].mxu0
        %v3213 = vadd.f32 0.0, %v3212
        %v3214 = vpop.f32.mrb[0].mxu0
        %3215 = vdwg.mxu0
        %v3216 = vadd.f32 %v2830, %v3090
        %v3217 = vadd.f32 %v2831, %v3093
        %v3218 = vadd.f32 %v2832, %v3098
        %v3219 = vadd.f32 %v2833, %v3101
        %v3220 = vadd.f32 %v2834, %v3106
        %v3221 = vadd.f32 %v2835, %v3109
        %v3222 = vadd.f32 %v2836, %v3114
        %v3223 = vadd.f32 %v2837, %v3117
        %v3224 = vadd.f32 %v2838, %v3122
        %v3225 = vadd.f32 %v2839, %v3125
        %v3226 = vadd.f32 %v2840, %v3130
        %v3227 = vadd.f32 %v2841, %v3133
        %v3228 = vadd.f32 %v2842, %v3138
        %v3229 = vadd.f32 %v2843, %v3141
        %v3230 = vadd.f32 %v2844, %v3146
        %v3231 = vadd.f32 %v2845, %v3149
        %v3232 = vadd.f32 %v2846, %v3154
        %v3233 = vadd.f32 %v2847, %v3157
        %v3234 = vadd.f32 %v2848, %v3162
        %v3235 = vadd.f32 %v2849, %v3165
        %v3236 = vadd.f32 %v2850, %v3170
        %v3237 = vadd.f32 %v2851, %v3173
        %v3238 = vadd.f32 %v2852, %v3178
        %v3239 = vadd.f32 %v2853, %v3181
        %v3240 = vadd.f32 %v2854, %v3186
        %v3241 = vadd.f32 %v2855, %v3189
        %v3242 = vadd.f32 %v2856, %v3194
        %v3243 = vadd.f32 %v2857, %v3197
        %v3244 = vadd.f32 %v2858, %v3202
        %v3245 = vadd.f32 %v2859, %v3205
        %v3246 = vadd.f32 %v2860, %v3210
        %v3247 = vadd.f32 %v2861, %v3213
        %v3248 = vld [vmem:[%s713] sm:$0xf]
        %v3249 = vld [vmem:[%s713 + $0x4] sm:$0xf]
        %v3250 = vld [vmem:[%s713 + $0x8] sm:$0x1]
        %v3251 = vld [vmem:[%s713 + $0xc] sm:$0xf]
        %v3252 = vld [vmem:[%s713 + $0x10] sm:$0xf]
        %v3253 = vld [vmem:[%s713 + $0x14] sm:$0x1]
        %v3254 = vld [vmem:[%s713 + $0x18] sm:$0xf]
        %v3255 = vld [vmem:[%s713 + $0x1c] sm:$0xf]
        %v3256 = vld [vmem:[%s713 + $0x20] sm:$0x1]
        %v3257 = vld [vmem:[%s713 + $0x24] sm:$0xf]
        %v3258 = vld [vmem:[%s713 + $0x28] sm:$0xf]
        %v3259 = vld [vmem:[%s713 + $0x2c] sm:$0x1]
        %v3260 = vld [vmem:[%s713 + $0x30] sm:$0xf]
        %v3261 = vld [vmem:[%s713 + $0x34] sm:$0xf]
        %v3262 = vld [vmem:[%s713 + $0x38] sm:$0x1]
        %v3263 = vld [vmem:[%s713 + $0x3c] sm:$0xf]
        %v3264 = vld [vmem:[%s713 + $0x40] sm:$0xf]
        %v3265 = vld [vmem:[%s713 + $0x44] sm:$0x1]
        %v3266 = vld [vmem:[%s713 + $0x48] sm:$0xf]
        %v3267 = vld [vmem:[%s713 + $0x4c] sm:$0xf]
        %v3268 = vld [vmem:[%s713 + $0x50] sm:$0x1]
        %v3269 = vld [vmem:[%s713 + $0x54] sm:$0xf]
        %v3270 = vld [vmem:[%s713 + $0x58] sm:$0xf]
        %v3271 = vld [vmem:[%s713 + $0x5c] sm:$0x1]
        %v3272 = vld [vmem:[%s713 + $0x60] sm:$0xf]
        %v3273 = vld [vmem:[%s713 + $0x64] sm:$0xf]
        %v3274 = vld [vmem:[%s713 + $0x68] sm:$0x1]
        %v3275 = vld [vmem:[%s713 + $0x6c] sm:$0xf]
        %v3276 = vld [vmem:[%s713 + $0x70] sm:$0xf]
        %v3277 = vld [vmem:[%s713 + $0x74] sm:$0x1]
        %v3278 = vld [vmem:[%s713 + $0x78] sm:$0xf]
        %v3279 = vld [vmem:[%s713 + $0x7c] sm:$0xf]
        %v3280 = vld [vmem:[%s713 + $0x80] sm:$0x1]
        %v3281 = vld [vmem:[%s713 + $0x84] sm:$0xf]
        %v3282 = vld [vmem:[%s713 + $0x88] sm:$0xf]
        %v3283 = vld [vmem:[%s713 + $0x8c] sm:$0x1]
        %v3284 = vld [vmem:[%s713 + $0x90] sm:$0xf]
        %v3285 = vld [vmem:[%s713 + $0x94] sm:$0xf]
        %v3286 = vld [vmem:[%s713 + $0x98] sm:$0x1]
        %v3287 = vld [vmem:[%s713 + $0x9c] sm:$0xf]
        %v3288 = vld [vmem:[%s713 + $0xa0] sm:$0xf]
        %v3289 = vld [vmem:[%s713 + $0xa4] sm:$0x1]
        %v3290 = vld [vmem:[%s713 + $0xa8] sm:$0xf]
        %v3291 = vld [vmem:[%s713 + $0xac] sm:$0xf]
        %v3292 = vld [vmem:[%s713 + $0xb0] sm:$0x1]
        %v3293 = vld [vmem:[%s713 + $0xb4] sm:$0xf]
        %v3294 = vld [vmem:[%s713 + $0xb8] sm:$0xf]
        %v3295 = vld [vmem:[%s713 + $0xbc] sm:$0x1]
        %v3297 = vshrl.u32 %v3248, 16
        %v3299 = vrot.slane %v3297, 4
        %v3300 = vshll.u32 %v3248, 16
        %v3302 = vrot.slane %v3300, 5
        %v3303 = vor.u32 %v3299, %v3302
        %v3304 = vrot.slane %v3303, 4
        %v3306 = vshll.u32 %v3249, 16
        %v3308 = vrot.slane %v3306, 5
        %v3309 = vsel %vm1397, %v3304, %v3308
        %v3310 = vshrl.u32 %v3249, 16
        %v3312 = vrot.slane %v3310, 4
        %v3313 = vor.u32 %v3312, %v3308
        %v3314 = vrot.slane %v3313, 4
        %v3316 = vshll.u32 %v3250, 16
        %v3318 = vrot.slane %v3316, 5
        %v3319 = vsel %vm1397, %v3314, %v3318
        %v3321 = vshrl.u32 %v3251, 16
        %v3323 = vrot.slane %v3321, 4
        %v3324 = vshll.u32 %v3251, 16
        %v3326 = vrot.slane %v3324, 5
        %v3327 = vor.u32 %v3323, %v3326
        %v3328 = vrot.slane %v3327, 4
        %v3330 = vshll.u32 %v3252, 16
        %v3332 = vrot.slane %v3330, 5
        %v3333 = vsel %vm1397, %v3328, %v3332
        %v3334 = vshrl.u32 %v3252, 16
        %v3336 = vrot.slane %v3334, 4
        %v3337 = vor.u32 %v3336, %v3332
        %v3338 = vrot.slane %v3337, 4
        %v3340 = vshll.u32 %v3253, 16
        %v3342 = vrot.slane %v3340, 5
        %v3343 = vsel %vm1397, %v3338, %v3342
        %v3345 = vshrl.u32 %v3254, 16
        %v3347 = vrot.slane %v3345, 4
        %v3348 = vshll.u32 %v3254, 16
        %v3350 = vrot.slane %v3348, 5
        %v3351 = vor.u32 %v3347, %v3350
        %v3352 = vrot.slane %v3351, 4
        %v3354 = vshll.u32 %v3255, 16
        %v3356 = vrot.slane %v3354, 5
        %v3357 = vsel %vm1397, %v3352, %v3356
        %v3358 = vshrl.u32 %v3255, 16
        %v3360 = vrot.slane %v3358, 4
        %v3361 = vor.u32 %v3360, %v3356
        %v3362 = vrot.slane %v3361, 4
        %v3364 = vshll.u32 %v3256, 16
        %v3366 = vrot.slane %v3364, 5
        %v3367 = vsel %vm1397, %v3362, %v3366
        %v3369 = vshrl.u32 %v3257, 16
        %v3371 = vrot.slane %v3369, 4
        %v3372 = vshll.u32 %v3257, 16
        %v3374 = vrot.slane %v3372, 5
        %v3375 = vor.u32 %v3371, %v3374
        %v3376 = vrot.slane %v3375, 4
        %v3378 = vshll.u32 %v3258, 16
        %v3380 = vrot.slane %v3378, 5
        %v3381 = vsel %vm1397, %v3376, %v3380
        %v3382 = vshrl.u32 %v3258, 16
        %v3384 = vrot.slane %v3382, 4
        %v3385 = vor.u32 %v3384, %v3380
        %v3386 = vrot.slane %v3385, 4
        %v3388 = vshll.u32 %v3259, 16
        %v3390 = vrot.slane %v3388, 5
        %v3391 = vsel %vm1397, %v3386, %v3390
        %v3393 = vshrl.u32 %v3260, 16
        %v3395 = vrot.slane %v3393, 4
        %v3396 = vshll.u32 %v3260, 16
        %v3398 = vrot.slane %v3396, 5
        %v3399 = vor.u32 %v3395, %v3398
        %v3400 = vrot.slane %v3399, 4
        %v3402 = vshll.u32 %v3261, 16
        %v3404 = vrot.slane %v3402, 5
        %v3405 = vsel %vm1397, %v3400, %v3404
        %v3406 = vshrl.u32 %v3261, 16
        %v3408 = vrot.slane %v3406, 4
        %v3409 = vor.u32 %v3408, %v3404
        %v3410 = vrot.slane %v3409, 4
        %v3412 = vshll.u32 %v3262, 16
        %v3414 = vrot.slane %v3412, 5
        %v3415 = vsel %vm1397, %v3410, %v3414
        %v3417 = vshrl.u32 %v3263, 16
        %v3419 = vrot.slane %v3417, 4
        %v3420 = vshll.u32 %v3263, 16
        %v3422 = vrot.slane %v3420, 5
        %v3423 = vor.u32 %v3419, %v3422
        %v3424 = vrot.slane %v3423, 4
        %v3426 = vshll.u32 %v3264, 16
        %v3428 = vrot.slane %v3426, 5
        %v3429 = vsel %vm1397, %v3424, %v3428
        %v3430 = vshrl.u32 %v3264, 16
        %v3432 = vrot.slane %v3430, 4
        %v3433 = vor.u32 %v3432, %v3428
        %v3434 = vrot.slane %v3433, 4
        %v3436 = vshll.u32 %v3265, 16
        %v3438 = vrot.slane %v3436, 5
        %v3439 = vsel %vm1397, %v3434, %v3438
        %v3441 = vshrl.u32 %v3266, 16
        %v3443 = vrot.slane %v3441, 4
        %v3444 = vshll.u32 %v3266, 16
        %v3446 = vrot.slane %v3444, 5
        %v3447 = vor.u32 %v3443, %v3446
        %v3448 = vrot.slane %v3447, 4
        %v3450 = vshll.u32 %v3267, 16
        %v3452 = vrot.slane %v3450, 5
        %v3453 = vsel %vm1397, %v3448, %v3452
        %v3454 = vshrl.u32 %v3267, 16
        %v3456 = vrot.slane %v3454, 4
        %v3457 = vor.u32 %v3456, %v3452
        %v3458 = vrot.slane %v3457, 4
        %v3460 = vshll.u32 %v3268, 16
        %v3462 = vrot.slane %v3460, 5
        %v3463 = vsel %vm1397, %v3458, %v3462
        %v3465 = vshrl.u32 %v3269, 16
        %v3467 = vrot.slane %v3465, 4
        %v3468 = vshll.u32 %v3269, 16
        %v3470 = vrot.slane %v3468, 5
        %v3471 = vor.u32 %v3467, %v3470
        %v3472 = vrot.slane %v3471, 4
        %v3474 = vshll.u32 %v3270, 16
        %v3476 = vrot.slane %v3474, 5
        %v3477 = vsel %vm1397, %v3472, %v3476
        %v3478 = vshrl.u32 %v3270, 16
        %v3480 = vrot.slane %v3478, 4
        %v3481 = vor.u32 %v3480, %v3476
        %v3482 = vrot.slane %v3481, 4
        %v3484 = vshll.u32 %v3271, 16
        %v3486 = vrot.slane %v3484, 5
        %v3487 = vsel %vm1397, %v3482, %v3486
        %v3489 = vshrl.u32 %v3272, 16
        %v3491 = vrot.slane %v3489, 4
        %v3492 = vshll.u32 %v3272, 16
        %v3494 = vrot.slane %v3492, 5
        %v3495 = vor.u32 %v3491, %v3494
        %v3496 = vrot.slane %v3495, 4
        %v3498 = vshll.u32 %v3273, 16
        %v3500 = vrot.slane %v3498, 5
        %v3501 = vsel %vm1397, %v3496, %v3500
        %v3502 = vshrl.u32 %v3273, 16
        %v3504 = vrot.slane %v3502, 4
        %v3505 = vor.u32 %v3504, %v3500
        %v3506 = vrot.slane %v3505, 4
        %v3508 = vshll.u32 %v3274, 16
        %v3510 = vrot.slane %v3508, 5
        %v3511 = vsel %vm1397, %v3506, %v3510
        %v3513 = vshrl.u32 %v3275, 16
        %v3515 = vrot.slane %v3513, 4
        %v3516 = vshll.u32 %v3275, 16
        %v3518 = vrot.slane %v3516, 5
        %v3519 = vor.u32 %v3515, %v3518
        %v3520 = vrot.slane %v3519, 4
        %v3522 = vshll.u32 %v3276, 16
        %v3524 = vrot.slane %v3522, 5
        %v3525 = vsel %vm1397, %v3520, %v3524
        %v3526 = vshrl.u32 %v3276, 16
        %v3528 = vrot.slane %v3526, 4
        %v3529 = vor.u32 %v3528, %v3524
        %v3530 = vrot.slane %v3529, 4
        %v3532 = vshll.u32 %v3277, 16
        %v3534 = vrot.slane %v3532, 5
        %v3535 = vsel %vm1397, %v3530, %v3534
        %v3537 = vshrl.u32 %v3278, 16
        %v3539 = vrot.slane %v3537, 4
        %v3540 = vshll.u32 %v3278, 16
        %v3542 = vrot.slane %v3540, 5
        %v3543 = vor.u32 %v3539, %v3542
        %v3544 = vrot.slane %v3543, 4
        %v3546 = vshll.u32 %v3279, 16
        %v3548 = vrot.slane %v3546, 5
        %v3549 = vsel %vm1397, %v3544, %v3548
        %v3550 = vshrl.u32 %v3279, 16
        %v3552 = vrot.slane %v3550, 4
        %v3553 = vor.u32 %v3552, %v3548
        %v3554 = vrot.slane %v3553, 4
        %v3556 = vshll.u32 %v3280, 16
        %v3558 = vrot.slane %v3556, 5
        %v3559 = vsel %vm1397, %v3554, %v3558
        %v3561 = vshrl.u32 %v3281, 16
        %v3563 = vrot.slane %v3561, 4
        %v3564 = vshll.u32 %v3281, 16
        %v3566 = vrot.slane %v3564, 5
        %v3567 = vor.u32 %v3563, %v3566
        %v3568 = vrot.slane %v3567, 4
        %v3570 = vshll.u32 %v3282, 16
        %v3572 = vrot.slane %v3570, 5
        %v3573 = vsel %vm1397, %v3568, %v3572
        %v3574 = vshrl.u32 %v3282, 16
        %v3576 = vrot.slane %v3574, 4
        %v3577 = vor.u32 %v3576, %v3572
        %v3578 = vrot.slane %v3577, 4
        %v3580 = vshll.u32 %v3283, 16
        %v3582 = vrot.slane %v3580, 5
        %v3583 = vsel %vm1397, %v3578, %v3582
        %v3585 = vshrl.u32 %v3284, 16
        %v3587 = vrot.slane %v3585, 4
        %v3588 = vshll.u32 %v3284, 16
        %v3590 = vrot.slane %v3588, 5
        %v3591 = vor.u32 %v3587, %v3590
        %v3592 = vrot.slane %v3591, 4
        %v3594 = vshll.u32 %v3285, 16
        %v3596 = vrot.slane %v3594, 5
        %v3597 = vsel %vm1397, %v3592, %v3596
        %v3598 = vshrl.u32 %v3285, 16
        %v3600 = vrot.slane %v3598, 4
        %v3601 = vor.u32 %v3600, %v3596
        %v3602 = vrot.slane %v3601, 4
        %v3604 = vshll.u32 %v3286, 16
        %v3606 = vrot.slane %v3604, 5
        %v3607 = vsel %vm1397, %v3602, %v3606
        %v3609 = vshrl.u32 %v3287, 16
        %v3611 = vrot.slane %v3609, 4
        %v3612 = vshll.u32 %v3287, 16
        %v3614 = vrot.slane %v3612, 5
        %v3615 = vor.u32 %v3611, %v3614
        %v3616 = vrot.slane %v3615, 4
        %v3618 = vshll.u32 %v3288, 16
        %v3620 = vrot.slane %v3618, 5
        %v3621 = vsel %vm1397, %v3616, %v3620
        %v3622 = vshrl.u32 %v3288, 16
        %v3624 = vrot.slane %v3622, 4
        %v3625 = vor.u32 %v3624, %v3620
        %v3626 = vrot.slane %v3625, 4
        %v3628 = vshll.u32 %v3289, 16
        %v3630 = vrot.slane %v3628, 5
        %v3631 = vsel %vm1397, %v3626, %v3630
        %v3633 = vshrl.u32 %v3290, 16
        %v3635 = vrot.slane %v3633, 4
        %v3636 = vshll.u32 %v3290, 16
        %v3638 = vrot.slane %v3636, 5
        %v3639 = vor.u32 %v3635, %v3638
        %v3640 = vrot.slane %v3639, 4
        %v3642 = vshll.u32 %v3291, 16
        %v3644 = vrot.slane %v3642, 5
        %v3645 = vsel %vm1397, %v3640, %v3644
        %v3646 = vshrl.u32 %v3291, 16
        %v3648 = vrot.slane %v3646, 4
        %v3649 = vor.u32 %v3648, %v3644
        %v3650 = vrot.slane %v3649, 4
        %v3652 = vshll.u32 %v3292, 16
        %v3654 = vrot.slane %v3652, 5
        %v3655 = vsel %vm1397, %v3650, %v3654
        %v3657 = vshrl.u32 %v3293, 16
        %v3659 = vrot.slane %v3657, 4
        %v3660 = vshll.u32 %v3293, 16
        %v3662 = vrot.slane %v3660, 5
        %v3663 = vor.u32 %v3659, %v3662
        %v3664 = vrot.slane %v3663, 4
        %v3666 = vshll.u32 %v3294, 16
        %v3668 = vrot.slane %v3666, 5
        %v3669 = vsel %vm1397, %v3664, %v3668
        %v3670 = vshrl.u32 %v3294, 16
        %v3672 = vrot.slane %v3670, 4
        %v3673 = vor.u32 %v3672, %v3668
        %v3674 = vrot.slane %v3673, 4
        %v3676 = vshll.u32 %v3295, 16
        %v3678 = vrot.slane %v3676, 5
        %v3679 = vsel %vm1397, %v3674, %v3678
        %s3680 = scalar_lea.vmem [#allocation6], 256
        %v3681 = vld [vmem:[%s3680] sm:$0xf]
        %v3682 = vld [vmem:[%s3680 + $0x4] sm:$0xf]
        %v3683 = vld [vmem:[%s3680 + $0x8] sm:$0xf]
        %v3684 = vld [vmem:[%s3680 + $0xc] sm:$0xf]
        %v3685 = vld [vmem:[%s3680 + $0x10] sm:$0xf]
        %v3686 = vld [vmem:[%s3680 + $0x14] sm:$0xf]
        %v3687 = vld [vmem:[%s3680 + $0x18] sm:$0xf]
        %v3688 = vld [vmem:[%s3680 + $0x1c] sm:$0xf]
        %v3689 = vld [vmem:[%s3680 + $0x20] sm:$0xf]
        %v3690 = vld [vmem:[%s3680 + $0x24] sm:$0xf]
        %v3691 = vld [vmem:[%s3680 + $0x28] sm:$0xf]
        %v3692 = vld [vmem:[%s3680 + $0x2c] sm:$0xf]
        %v3693 = vld [vmem:[%s3680 + $0x30] sm:$0xf]
        %v3694 = vld [vmem:[%s3680 + $0x34] sm:$0xf]
        %v3695 = vld [vmem:[%s3680 + $0x38] sm:$0xf]
        %v3696 = vld [vmem:[%s3680 + $0x3c] sm:$0xf]
        %v3697 = vunpack.c.l.b16 %v3309
        %v3698 = vunpack.c.l.b16 %v3319
        %v3699 = vunpack.c.l.b16 %v3333
        %v3700 = vunpack.c.l.b16 %v3343
        %v3701 = vunpack.c.l.b16 %v3357
        %v3702 = vunpack.c.l.b16 %v3367
        %v3703 = vunpack.c.l.b16 %v3381
        %v3704 = vunpack.c.l.b16 %v3391
        %v3705 = vunpack.c.l.b16 %v3405
        %v3706 = vunpack.c.l.b16 %v3415
        %v3707 = vunpack.c.l.b16 %v3429
        %v3708 = vunpack.c.l.b16 %v3439
        %v3709 = vunpack.c.l.b16 %v3453
        %v3710 = vunpack.c.l.b16 %v3463
        %v3711 = vunpack.c.l.b16 %v3477
        %v3712 = vunpack.c.l.b16 %v3487
        %v3713 = vunpack.c.l.b16 %v3501
        %v3714 = vunpack.c.l.b16 %v3511
        %v3715 = vunpack.c.l.b16 %v3525
        %v3716 = vunpack.c.l.b16 %v3535
        %v3717 = vunpack.c.l.b16 %v3549
        %v3718 = vunpack.c.l.b16 %v3559
        %v3719 = vunpack.c.l.b16 %v3573
        %v3720 = vunpack.c.l.b16 %v3583
        %v3721 = vunpack.c.l.b16 %v3597
        %v3722 = vunpack.c.l.b16 %v3607
        %v3723 = vunpack.c.l.b16 %v3621
        %v3724 = vunpack.c.l.b16 %v3631
        %v3725 = vunpack.c.l.b16 %v3645
        %v3726 = vunpack.c.l.b16 %v3655
        %v3727 = vunpack.c.l.b16 %v3669
        %v3728 = vunpack.c.l.b16 %v3679
        %v3729 = vpack.c.b16 %v3698, %v3697
        %v3730 = vpack.c.b16 %v3700, %v3699
        %v3731 = vpack.c.b16 %v3702, %v3701
        %v3732 = vpack.c.b16 %v3704, %v3703
        %v3733 = vpack.c.b16 %v3706, %v3705
        %v3734 = vpack.c.b16 %v3708, %v3707
        %v3735 = vpack.c.b16 %v3710, %v3709
        %v3736 = vpack.c.b16 %v3712, %v3711
        %v3737 = vpack.c.b16 %v3714, %v3713
        %v3738 = vpack.c.b16 %v3716, %v3715
        %v3739 = vpack.c.b16 %v3718, %v3717
        %v3740 = vpack.c.b16 %v3720, %v3719
        %v3741 = vpack.c.b16 %v3722, %v3721
        %v3742 = vpack.c.b16 %v3724, %v3723
        %v3743 = vpack.c.b16 %v3726, %v3725
        %v3744 = vpack.c.b16 %v3728, %v3727
        %v3777 = vunpack.c.l.b16 %v3681
        %v3778 = vunpack.c.l.b16 %v3682
        %v3779 = vunpack.c.l.b16 %v3683
        %v3780 = vunpack.c.l.b16 %v3684
        %v3781 = vunpack.c.l.b16 %v3685
        %v3782 = vunpack.c.l.b16 %v3686
        %v3783 = vunpack.c.l.b16 %v3687
        %v3784 = vunpack.c.l.b16 %v3688
        %v3785 = vunpack.c.l.b16 %v3689
        %v3786 = vunpack.c.l.b16 %v3690
        %v3787 = vunpack.c.l.b16 %v3691
        %v3788 = vunpack.c.l.b16 %v3692
        %v3789 = vunpack.c.l.b16 %v3693
        %v3790 = vunpack.c.l.b16 %v3694
        %v3791 = vunpack.c.l.b16 %v3695
        %v3792 = vunpack.c.l.b16 %v3696
        %v3793 = vpack.c.b16 %v3778, %v3777
        %v3794 = vpack.c.b16 %v3780, %v3779
        %v3795 = vpack.c.b16 %v3782, %v3781
        %v3796 = vpack.c.b16 %v3784, %v3783
        %v3797 = vpack.c.b16 %v3786, %v3785
        %v3798 = vpack.c.b16 %v3788, %v3787
        %v3799 = vpack.c.b16 %v3790, %v3789
        %v3800 = vpack.c.b16 %v3792, %v3791
        %3809 = vmatprep.subr.bf16.mxu0 0
        %3810 = vmatpush1.bf16.msra.mxu0 %v3793
        %3811 = vmatprep.subr.bf16.mxu0 0
        %3812 = vmatpush1.bf16.msra.mxu0 %v3794
        %3813 = vmatprep.subr.bf16.mxu0 0
        %3814 = vmatpush1.bf16.msra.mxu0 %v3795
        %3815 = vmatprep.subr.bf16.mxu0 0
        %3816 = vmatpush1.bf16.msra.mxu0 %v3796
        %3817 = vmatprep.subr.bf16.mxu0 0
        %3818 = vmatpush1.bf16.msra.mxu0 %v3797
        %3819 = vmatprep.subr.bf16.mxu0 0
        %3820 = vmatpush1.bf16.msra.mxu0 %v3798
        %3821 = vmatprep.subr.bf16.mxu0 0
        %3822 = vmatpush1.bf16.msra.mxu0 %v3799
        %3823 = vmatprep.subr.bf16.mxu0 0
        %3824 = vmatpush1.bf16.msra.mxu0 %v3800
        %3825 = vmatprep.subr.bf16.mxu0 0
        %3826 = vmatpush1.bf16.msra.mxu0 0
        %3827 = vmatprep.subr.bf16.mxu0 0
        %3828 = vmatpush1.bf16.msra.mxu0 0
        %3829 = vmatprep.subr.bf16.mxu0 0
        %3830 = vmatpush1.bf16.msra.mxu0 0
        %3831 = vmatprep.subr.bf16.mxu0 0
        %3832 = vmatpush1.bf16.msra.mxu0 0
        %3833 = vmatprep.subr.bf16.mxu0 0
        %3834 = vmatpush1.bf16.msra.mxu0 0
        %3835 = vmatprep.subr.bf16.mxu0 0
        %3836 = vmatpush1.bf16.msra.mxu0 0
        %3837 = vmatprep.subr.bf16.mxu0 0
        %3838 = vmatpush1.bf16.msra.mxu0 0
        %3839 = vmatprep.subr.bf16.mxu0 0
        %3840 = vmatpush1.bf16.msra.mxu0 0
        %3841 = vmatprep.mubr.bf16.mxu0 0
        %3842 = vmatmul.mubr.bf16.gmra.mrb[0].mxu0 %v3729
        %v3843 = vpop.f32.mrb[0].mxu0
        %v3844 = vadd.f32 0.0, %v3843
        %v3845 = vpop.f32.mrb[0].mxu0
        %v3846 = vpop.f32.mrb[0].mxu0
        %v3847 = vadd.f32 0.0, %v3846
        %v3848 = vpop.f32.mrb[0].mxu0
        %3849 = vmatprep.mubr.bf16.mxu0 0
        %3850 = vmatmul.mubr.bf16.gmra.mrb[0].mxu0 %v3730
        %v3851 = vpop.f32.mrb[0].mxu0
        %v3852 = vadd.f32 0.0, %v3851
        %v3853 = vpop.f32.mrb[0].mxu0
        %v3854 = vpop.f32.mrb[0].mxu0
        %v3855 = vadd.f32 0.0, %v3854
        %v3856 = vpop.f32.mrb[0].mxu0
        %3857 = vmatprep.mubr.bf16.mxu0 0
        %3858 = vmatmul.mubr.bf16.gmra.mrb[0].mxu0 %v3731
        %v3859 = vpop.f32.mrb[0].mxu0
        %v3860 = vadd.f32 0.0, %v3859
        %v3861 = vpop.f32.mrb[0].mxu0
        %v3862 = vpop.f32.mrb[0].mxu0
        %v3863 = vadd.f32 0.0, %v3862
        %v3864 = vpop.f32.mrb[0].mxu0
        %3865 = vmatprep.mubr.bf16.mxu0 0
        %3866 = vmatmul.mubr.bf16.gmra.mrb[0].mxu0 %v3732
        %v3867 = vpop.f32.mrb[0].mxu0
        %v3868 = vadd.f32 0.0, %v3867
        %v3869 = vpop.f32.mrb[0].mxu0
        %v3870 = vpop.f32.mrb[0].mxu0
        %v3871 = vadd.f32 0.0, %v3870
        %v3872 = vpop.f32.mrb[0].mxu0
        %3873 = vmatprep.mubr.bf16.mxu0 0
        %3874 = vmatmul.mubr.bf16.gmra.mrb[0].mxu0 %v3733
        %v3875 = vpop.f32.mrb[0].mxu0
        %v3876 = vadd.f32 0.0, %v3875
        %v3877 = vpop.f32.mrb[0].mxu0
        %v3878 = vpop.f32.mrb[0].mxu0
        %v3879 = vadd.f32 0.0, %v3878
        %v3880 = vpop.f32.mrb[0].mxu0
        %3881 = vmatprep.mubr.bf16.mxu0 0
        %3882 = vmatmul.mubr.bf16.gmra.mrb[0].mxu0 %v3734
        %v3883 = vpop.f32.mrb[0].mxu0
        %v3884 = vadd.f32 0.0, %v3883
        %v3885 = vpop.f32.mrb[0].mxu0
        %v3886 = vpop.f32.mrb[0].mxu0
        %v3887 = vadd.f32 0.0, %v3886
        %v3888 = vpop.f32.mrb[0].mxu0
        %3889 = vmatprep.mubr.bf16.mxu0 0
        %3890 = vmatmul.mubr.bf16.gmra.mrb[0].mxu0 %v3735
        %v3891 = vpop.f32.mrb[0].mxu0
        %v3892 = vadd.f32 0.0, %v3891
        %v3893 = vpop.f32.mrb[0].mxu0
        %v3894 = vpop.f32.mrb[0].mxu0
        %v3895 = vadd.f32 0.0, %v3894
        %v3896 = vpop.f32.mrb[0].mxu0
        %3897 = vmatprep.mubr.bf16.mxu0 0
        %3898 = vmatmul.mubr.bf16.gmra.mrb[0].mxu0 %v3736
        %v3899 = vpop.f32.mrb[0].mxu0
        %v3900 = vadd.f32 0.0, %v3899
        %v3901 = vpop.f32.mrb[0].mxu0
        %v3902 = vpop.f32.mrb[0].mxu0
        %v3903 = vadd.f32 0.0, %v3902
        %v3904 = vpop.f32.mrb[0].mxu0
        %3905 = vmatprep.mubr.bf16.mxu0 0
        %3906 = vmatmul.mubr.bf16.gmra.mrb[0].mxu0 %v3737
        %v3907 = vpop.f32.mrb[0].mxu0
        %v3908 = vadd.f32 0.0, %v3907
        %v3909 = vpop.f32.mrb[0].mxu0
        %v3910 = vpop.f32.mrb[0].mxu0
        %v3911 = vadd.f32 0.0, %v3910
        %v3912 = vpop.f32.mrb[0].mxu0
        %3913 = vmatprep.mubr.bf16.mxu0 0
        %3914 = vmatmul.mubr.bf16.gmra.mrb[0].mxu0 %v3738
        %v3915 = vpop.f32.mrb[0].mxu0
        %v3916 = vadd.f32 0.0, %v3915
        %v3917 = vpop.f32.mrb[0].mxu0
        %v3918 = vpop.f32.mrb[0].mxu0
        %v3919 = vadd.f32 0.0, %v3918
        %v3920 = vpop.f32.mrb[0].mxu0
        %3921 = vmatprep.mubr.bf16.mxu0 0
        %3922 = vmatmul.mubr.bf16.gmra.mrb[0].mxu0 %v3739
        %v3923 = vpop.f32.mrb[0].mxu0
        %v3924 = vadd.f32 0.0, %v3923
        %v3925 = vpop.f32.mrb[0].mxu0
        %v3926 = vpop.f32.mrb[0].mxu0
        %v3927 = vadd.f32 0.0, %v3926
        %v3928 = vpop.f32.mrb[0].mxu0
        %3929 = vmatprep.mubr.bf16.mxu0 0
        %3930 = vmatmul.mubr.bf16.gmra.mrb[0].mxu0 %v3740
        %v3931 = vpop.f32.mrb[0].mxu0
        %v3932 = vadd.f32 0.0, %v3931
        %v3933 = vpop.f32.mrb[0].mxu0
        %v3934 = vpop.f32.mrb[0].mxu0
        %v3935 = vadd.f32 0.0, %v3934
        %v3936 = vpop.f32.mrb[0].mxu0
        %3937 = vmatprep.mubr.bf16.mxu0 0
        %3938 = vmatmul.mubr.bf16.gmra.mrb[0].mxu0 %v3741
        %v3939 = vpop.f32.mrb[0].mxu0
        %v3940 = vadd.f32 0.0, %v3939
        %v3941 = vpop.f32.mrb[0].mxu0
        %v3942 = vpop.f32.mrb[0].mxu0
        %v3943 = vadd.f32 0.0, %v3942
        %v3944 = vpop.f32.mrb[0].mxu0
        %3945 = vmatprep.mubr.bf16.mxu0 0
        %3946 = vmatmul.mubr.bf16.gmra.mrb[0].mxu0 %v3742
        %v3947 = vpop.f32.mrb[0].mxu0
        %v3948 = vadd.f32 0.0, %v3947
        %v3949 = vpop.f32.mrb[0].mxu0
        %v3950 = vpop.f32.mrb[0].mxu0
        %v3951 = vadd.f32 0.0, %v3950
        %v3952 = vpop.f32.mrb[0].mxu0
        %3953 = vmatprep.mubr.bf16.mxu0 0
        %3954 = vmatmul.mubr.bf16.gmra.mrb[0].mxu0 %v3743
        %v3955 = vpop.f32.mrb[0].mxu0
        %v3956 = vadd.f32 0.0, %v3955
        %v3957 = vpop.f32.mrb[0].mxu0
        %v3958 = vpop.f32.mrb[0].mxu0
        %v3959 = vadd.f32 0.0, %v3958
        %v3960 = vpop.f32.mrb[0].mxu0
        %3961 = vmatprep.mubr.bf16.mxu0 0
        %3962 = vmatmul.mubr.bf16.gmra.mrb[0].mxu0 %v3744
        %v3963 = vpop.f32.mrb[0].mxu0
        %v3964 = vadd.f32 0.0, %v3963
        %v3965 = vpop.f32.mrb[0].mxu0
        %v3966 = vpop.f32.mrb[0].mxu0
        %v3967 = vadd.f32 0.0, %v3966
        %v3968 = vpop.f32.mrb[0].mxu0
        %3969 = vdwg.mxu0
        %v3970 = vadd.f32 %v3216, %v3844
        %v3971 = vadd.f32 %v3217, %v3847
        %v3972 = vadd.f32 %v3218, %v3852
        %v3973 = vadd.f32 %v3219, %v3855
        %v3974 = vadd.f32 %v3220, %v3860
        %v3975 = vadd.f32 %v3221, %v3863
        %v3976 = vadd.f32 %v3222, %v3868
        %v3977 = vadd.f32 %v3223, %v3871
        %v3978 = vadd.f32 %v3224, %v3876
        %v3979 = vadd.f32 %v3225, %v3879
        %v3980 = vadd.f32 %v3226, %v3884
        %v3981 = vadd.f32 %v3227, %v3887
        %v3982 = vadd.f32 %v3228, %v3892
        %v3983 = vadd.f32 %v3229, %v3895
        %v3984 = vadd.f32 %v3230, %v3900
        %v3985 = vadd.f32 %v3231, %v3903
        %v3986 = vadd.f32 %v3232, %v3908
        %v3987 = vadd.f32 %v3233, %v3911
        %v3988 = vadd.f32 %v3234, %v3916
        %v3989 = vadd.f32 %v3235, %v3919
        %v3990 = vadd.f32 %v3236, %v3924
        %v3991 = vadd.f32 %v3237, %v3927
        %v3992 = vadd.f32 %v3238, %v3932
        %v3993 = vadd.f32 %v3239, %v3935
        %v3994 = vadd.f32 %v3240, %v3940
        %v3995 = vadd.f32 %v3241, %v3943
        %v3996 = vadd.f32 %v3242, %v3948
        %v3997 = vadd.f32 %v3243, %v3951
        %v3998 = vadd.f32 %v3244, %v3956
        %v3999 = vadd.f32 %v3245, %v3959
        %v4000 = vadd.f32 %v3246, %v3964
        %v4001 = vadd.f32 %v3247, %v3967
        %v4002 = vld [vmem:[%s713] sm:$0xe]
        %v4003 = vld [vmem:[%s713 + $0xc] sm:$0xe]
        %v4004 = vld [vmem:[%s713 + $0x18] sm:$0xe]
        %v4005 = vld [vmem:[%s713 + $0x24] sm:$0xe]
        %v4006 = vld [vmem:[%s713 + $0x30] sm:$0xe]
        %v4007 = vld [vmem:[%s713 + $0x3c] sm:$0xe]
        %v4008 = vld [vmem:[%s713 + $0x48] sm:$0xe]
        %v4009 = vld [vmem:[%s713 + $0x54] sm:$0xe]
        %v4010 = vld [vmem:[%s713 + $0x60] sm:$0xe]
        %v4011 = vld [vmem:[%s713 + $0x6c] sm:$0xe]
        %v4012 = vld [vmem:[%s713 + $0x78] sm:$0xe]
        %v4013 = vld [vmem:[%s713 + $0x84] sm:$0xe]
        %v4014 = vld [vmem:[%s713 + $0x90] sm:$0xe]
        %v4015 = vld [vmem:[%s713 + $0x9c] sm:$0xe]
        %v4016 = vld [vmem:[%s713 + $0xa8] sm:$0xe]
        %v4017 = vld [vmem:[%s713 + $0xb4] sm:$0xe]
        %v4066 = vrot.slane %v4002, 5
        %v4067 = vrot.slane %v4066, 4
        %v4068 = vrot.slane %v3249, 5
        %v4069 = vsel %vm2427, %v4067, %v4068
        %v4070 = vrot.slane %v4068, 4
        %v4071 = vrot.slane %v3250, 5
        %v4072 = vsel %vm2427, %v4070, %v4071
        %v4073 = vrot.slane %v4003, 5
        %v4074 = vrot.slane %v4073, 4
        %v4075 = vrot.slane %v3252, 5
        %v4076 = vsel %vm2427, %v4074, %v4075
        %v4077 = vrot.slane %v4075, 4
        %v4078 = vrot.slane %v3253, 5
        %v4079 = vsel %vm2427, %v4077, %v4078
        %v4080 = vrot.slane %v4004, 5
        %v4081 = vrot.slane %v4080, 4
        %v4082 = vrot.slane %v3255, 5
        %v4083 = vsel %vm2427, %v4081, %v4082
        %v4084 = vrot.slane %v4082, 4
        %v4085 = vrot.slane %v3256, 5
        %v4086 = vsel %vm2427, %v4084, %v4085
        %v4087 = vrot.slane %v4005, 5
        %v4088 = vrot.slane %v4087, 4
        %v4089 = vrot.slane %v3258, 5
        %v4090 = vsel %vm2427, %v4088, %v4089
        %v4091 = vrot.slane %v4089, 4
        %v4092 = vrot.slane %v3259, 5
        %v4093 = vsel %vm2427, %v4091, %v4092
        %v4094 = vrot.slane %v4006, 5
        %v4095 = vrot.slane %v4094, 4
        %v4096 = vrot.slane %v3261, 5
        %v4097 = vsel %vm2427, %v4095, %v4096
        %v4098 = vrot.slane %v4096, 4
        %v4099 = vrot.slane %v3262, 5
        %v4100 = vsel %vm2427, %v4098, %v4099
        %v4101 = vrot.slane %v4007, 5
        %v4102 = vrot.slane %v4101, 4
        %v4103 = vrot.slane %v3264, 5
        %v4104 = vsel %vm2427, %v4102, %v4103
        %v4105 = vrot.slane %v4103, 4
        %v4106 = vrot.slane %v3265, 5
        %v4107 = vsel %vm2427, %v4105, %v4106
        %v4108 = vrot.slane %v4008, 5
        %v4109 = vrot.slane %v4108, 4
        %v4110 = vrot.slane %v3267, 5
        %v4111 = vsel %vm2427, %v4109, %v4110
        %v4112 = vrot.slane %v4110, 4
        %v4113 = vrot.slane %v3268, 5
        %v4114 = vsel %vm2427, %v4112, %v4113
        %v4115 = vrot.slane %v4009, 5
        %v4116 = vrot.slane %v4115, 4
        %v4117 = vrot.slane %v3270, 5
        %v4118 = vsel %vm2427, %v4116, %v4117
        %v4119 = vrot.slane %v4117, 4
        %v4120 = vrot.slane %v3271, 5
        %v4121 = vsel %vm2427, %v4119, %v4120
        %v4122 = vrot.slane %v4010, 5
        %v4123 = vrot.slane %v4122, 4
        %v4124 = vrot.slane %v3273, 5
        %v4125 = vsel %vm2427, %v4123, %v4124
        %v4126 = vrot.slane %v4124, 4
        %v4127 = vrot.slane %v3274, 5
        %v4128 = vsel %vm2427, %v4126, %v4127
        %v4129 = vrot.slane %v4011, 5
        %v4130 = vrot.slane %v4129, 4
        %v4131 = vrot.slane %v3276, 5
        %v4132 = vsel %vm2427, %v4130, %v4131
        %v4133 = vrot.slane %v4131, 4
        %v4134 = vrot.slane %v3277, 5
        %v4135 = vsel %vm2427, %v4133, %v4134
        %v4136 = vrot.slane %v4012, 5
        %v4137 = vrot.slane %v4136, 4
        %v4138 = vrot.slane %v3279, 5
        %v4139 = vsel %vm2427, %v4137, %v4138
        %v4140 = vrot.slane %v4138, 4
        %v4141 = vrot.slane %v3280, 5
        %v4142 = vsel %vm2427, %v4140, %v4141
        %v4143 = vrot.slane %v4013, 5
        %v4144 = vrot.slane %v4143, 4
        %v4145 = vrot.slane %v3282, 5
        %v4146 = vsel %vm2427, %v4144, %v4145
        %v4147 = vrot.slane %v4145, 4
        %v4148 = vrot.slane %v3283, 5
        %v4149 = vsel %vm2427, %v4147, %v4148
        %v4150 = vrot.slane %v4014, 5
        %v4151 = vrot.slane %v4150, 4
        %v4152 = vrot.slane %v3285, 5
        %v4153 = vsel %vm2427, %v4151, %v4152
        %v4154 = vrot.slane %v4152, 4
        %v4155 = vrot.slane %v3286, 5
        %v4156 = vsel %vm2427, %v4154, %v4155
        %v4157 = vrot.slane %v4015, 5
        %v4158 = vrot.slane %v4157, 4
        %v4159 = vrot.slane %v3288, 5
        %v4160 = vsel %vm2427, %v4158, %v4159
        %v4161 = vrot.slane %v4159, 4
        %v4162 = vrot.slane %v3289, 5
        %v4163 = vsel %vm2427, %v4161, %v4162
        %v4164 = vrot.slane %v4016, 5
        %v4165 = vrot.slane %v4164, 4
        %v4166 = vrot.slane %v3291, 5
        %v4167 = vsel %vm2427, %v4165, %v4166
        %v4168 = vrot.slane %v4166, 4
        %v4169 = vrot.slane %v3292, 5
        %v4170 = vsel %vm2427, %v4168, %v4169
        %v4171 = vrot.slane %v4017, 5
        %v4172 = vrot.slane %v4171, 4
        %v4173 = vrot.slane %v3294, 5
        %v4174 = vsel %vm2427, %v4172, %v4173
        %v4175 = vrot.slane %v4173, 4
        %v4176 = vrot.slane %v3295, 5
        %v4177 = vsel %vm2427, %v4175, %v4176
        %s4178 = scalar_lea.vmem [#allocation6], 320
        %v4179 = vld [vmem:[%s4178] sm:$0xf]
        %v4180 = vld [vmem:[%s4178 + $0x4] sm:$0xf]
        %v4181 = vld [vmem:[%s4178 + $0x8] sm:$0xf]
        %v4182 = vld [vmem:[%s4178 + $0xc] sm:$0xf]
        %v4183 = vld [vmem:[%s4178 + $0x10] sm:$0xf]
        %v4184 = vld [vmem:[%s4178 + $0x14] sm:$0xf]
        %v4185 = vld [vmem:[%s4178 + $0x18] sm:$0xf]
        %v4186 = vld [vmem:[%s4178 + $0x1c] sm:$0xf]
        %v4187 = vld [vmem:[%s4178 + $0x20] sm:$0xf]
        %v4188 = vld [vmem:[%s4178 + $0x24] sm:$0xf]
        %v4189 = vld [vmem:[%s4178 + $0x28] sm:$0xf]
        %v4190 = vld [vmem:[%s4178 + $0x2c] sm:$0xf]
        %v4191 = vld [vmem:[%s4178 + $0x30] sm:$0xf]
        %v4192 = vld [vmem:[%s4178 + $0x34] sm:$0xf]
        %v4193 = vld [vmem:[%s4178 + $0x38] sm:$0xf]
        %v4194 = vld [vmem:[%s4178 + $0x3c] sm:$0xf]
        %v4195 = vunpack.c.l.b16 %v4069
        %v4196 = vunpack.c.l.b16 %v4072
        %v4197 = vunpack.c.l.b16 %v4076
        %v4198 = vunpack.c.l.b16 %v4079
        %v4199 = vunpack.c.l.b16 %v4083
        %v4200 = vunpack.c.l.b16 %v4086
        %v4201 = vunpack.c.l.b16 %v4090
        %v4202 = vunpack.c.l.b16 %v4093
        %v4203 = vunpack.c.l.b16 %v4097
        %v4204 = vunpack.c.l.b16 %v4100
        %v4205 = vunpack.c.l.b16 %v4104
        %v4206 = vunpack.c.l.b16 %v4107
        %v4207 = vunpack.c.l.b16 %v4111
        %v4208 = vunpack.c.l.b16 %v4114
        %v4209 = vunpack.c.l.b16 %v4118
        %v4210 = vunpack.c.l.b16 %v4121
        %v4211 = vunpack.c.l.b16 %v4125
        %v4212 = vunpack.c.l.b16 %v4128
        %v4213 = vunpack.c.l.b16 %v4132
        %v4214 = vunpack.c.l.b16 %v4135
        %v4215 = vunpack.c.l.b16 %v4139
        %v4216 = vunpack.c.l.b16 %v4142
        %v4217 = vunpack.c.l.b16 %v4146
        %v4218 = vunpack.c.l.b16 %v4149
        %v4219 = vunpack.c.l.b16 %v4153
        %v4220 = vunpack.c.l.b16 %v4156
        %v4221 = vunpack.c.l.b16 %v4160
        %v4222 = vunpack.c.l.b16 %v4163
        %v4223 = vunpack.c.l.b16 %v4167
        %v4224 = vunpack.c.l.b16 %v4170
        %v4225 = vunpack.c.l.b16 %v4174
        %v4226 = vunpack.c.l.b16 %v4177
        %v4227 = vpack.c.b16 %v4196, %v4195
        %v4228 = vpack.c.b16 %v4198, %v4197
        %v4229 = vpack.c.b16 %v4200, %v4199
        %v4230 = vpack.c.b16 %v4202, %v4201
        %v4231 = vpack.c.b16 %v4204, %v4203
        %v4232 = vpack.c.b16 %v4206, %v4205
        %v4233 = vpack.c.b16 %v4208, %v4207
        %v4234 = vpack.c.b16 %v4210, %v4209
        %v4235 = vpack.c.b16 %v4212, %v4211
        %v4236 = vpack.c.b16 %v4214, %v4213
        %v4237 = vpack.c.b16 %v4216, %v4215
        %v4238 = vpack.c.b16 %v4218, %v4217
        %v4239 = vpack.c.b16 %v4220, %v4219
        %v4240 = vpack.c.b16 %v4222, %v4221
        %v4241 = vpack.c.b16 %v4224, %v4223
        %v4242 = vpack.c.b16 %v4226, %v4225
        %v4275 = vunpack.c.l.b16 %v4179
        %v4276 = vunpack.c.l.b16 %v4180
        %v4277 = vunpack.c.l.b16 %v4181
        %v4278 = vunpack.c.l.b16 %v4182
        %v4279 = vunpack.c.l.b16 %v4183
        %v4280 = vunpack.c.l.b16 %v4184
        %v4281 = vunpack.c.l.b16 %v4185
        %v4282 = vunpack.c.l.b16 %v4186
        %v4283 = vunpack.c.l.b16 %v4187
        %v4284 = vunpack.c.l.b16 %v4188
        %v4285 = vunpack.c.l.b16 %v4189
        %v4286 = vunpack.c.l.b16 %v4190
        %v4287 = vunpack.c.l.b16 %v4191
        %v4288 = vunpack.c.l.b16 %v4192
        %v4289 = vunpack.c.l.b16 %v4193
        %v4290 = vunpack.c.l.b16 %v4194
        %v4291 = vpack.c.b16 %v4276, %v4275
        %v4292 = vpack.c.b16 %v4278, %v4277
        %v4293 = vpack.c.b16 %v4280, %v4279
        %v4294 = vpack.c.b16 %v4282, %v4281
        %v4295 = vpack.c.b16 %v4284, %v4283
        %v4296 = vpack.c.b16 %v4286, %v4285
        %v4297 = vpack.c.b16 %v4288, %v4287
        %v4298 = vpack.c.b16 %v4290, %v4289
        %4307 = vmatprep.subr.bf16.mxu0 0
        %4308 = vmatpush1.bf16.msra.mxu0 %v4291
        %4309 = vmatprep.subr.bf16.mxu0 0
        %4310 = vmatpush1.bf16.msra.mxu0 %v4292
        %4311 = vmatprep.subr.bf16.mxu0 0
        %4312 = vmatpush1.bf16.msra.mxu0 %v4293
        %4313 = vmatprep.subr.bf16.mxu0 0
        %4314 = vmatpush1.bf16.msra.mxu0 %v4294
        %4315 = vmatprep.subr.bf16.mxu0 0
        %4316 = vmatpush1.bf16.msra.mxu0 %v4295
        %4317 = vmatprep.subr.bf16.mxu0 0
        %4318 = vmatpush1.bf16.msra.mxu0 %v4296
        %4319 = vmatprep.subr.bf16.mxu0 0
        %4320 = vmatpush1.bf16.msra.mxu0 %v4297
        %4321 = vmatprep.subr.bf16.mxu0 0
        %4322 = vmatpush1.bf16.msra.mxu0 %v4298
        %4323 = vmatprep.subr.bf16.mxu0 0
        %4324 = vmatpush1.bf16.msra.mxu0 0
        %4325 = vmatprep.subr.bf16.mxu0 0
        %4326 = vmatpush1.bf16.msra.mxu0 0
        %4327 = vmatprep.subr.bf16.mxu0 0
        %4328 = vmatpush1.bf16.msra.mxu0 0
        %4329 = vmatprep.subr.bf16.mxu0 0
        %4330 = vmatpush1.bf16.msra.mxu0 0
        %4331 = vmatprep.subr.bf16.mxu0 0
        %4332 = vmatpush1.bf16.msra.mxu0 0
        %4333 = vmatprep.subr.bf16.mxu0 0
        %4334 = vmatpush1.bf16.msra.mxu0 0
        %4335 = vmatprep.subr.bf16.mxu0 0
        %4336 = vmatpush1.bf16.msra.mxu0 0
        %4337 = vmatprep.subr.bf16.mxu0 0
        %4338 = vmatpush1.bf16.msra.mxu0 0
        %4339 = vmatprep.mubr.bf16.mxu0 0
        %4340 = vmatmul.mubr.bf16.gmra.mrb[0].mxu0 %v4227
        %v4341 = vpop.f32.mrb[0].mxu0
        %v4342 = vadd.f32 0.0, %v4341
        %v4343 = vpop.f32.mrb[0].mxu0
        %v4344 = vpop.f32.mrb[0].mxu0
        %v4345 = vadd.f32 0.0, %v4344
        %v4346 = vpop.f32.mrb[0].mxu0
        %4347 = vmatprep.mubr.bf16.mxu0 0
        %4348 = vmatmul.mubr.bf16.gmra.mrb[0].mxu0 %v4228
        %v4349 = vpop.f32.mrb[0].mxu0
        %v4350 = vadd.f32 0.0, %v4349
        %v4351 = vpop.f32.mrb[0].mxu0
        %v4352 = vpop.f32.mrb[0].mxu0
        %v4353 = vadd.f32 0.0, %v4352
        %v4354 = vpop.f32.mrb[0].mxu0
        %4355 = vmatprep.mubr.bf16.mxu0 0
        %4356 = vmatmul.mubr.bf16.gmra.mrb[0].mxu0 %v4229
        %v4357 = vpop.f32.mrb[0].mxu0
        %v4358 = vadd.f32 0.0, %v4357
        %v4359 = vpop.f32.mrb[0].mxu0
        %v4360 = vpop.f32.mrb[0].mxu0
        %v4361 = vadd.f32 0.0, %v4360
        %v4362 = vpop.f32.mrb[0].mxu0
        %4363 = vmatprep.mubr.bf16.mxu0 0
        %4364 = vmatmul.mubr.bf16.gmra.mrb[0].mxu0 %v4230
        %v4365 = vpop.f32.mrb[0].mxu0
        %v4366 = vadd.f32 0.0, %v4365
        %v4367 = vpop.f32.mrb[0].mxu0
        %v4368 = vpop.f32.mrb[0].mxu0
        %v4369 = vadd.f32 0.0, %v4368
        %v4370 = vpop.f32.mrb[0].mxu0
        %4371 = vmatprep.mubr.bf16.mxu0 0
        %4372 = vmatmul.mubr.bf16.gmra.mrb[0].mxu0 %v4231
        %v4373 = vpop.f32.mrb[0].mxu0
        %v4374 = vadd.f32 0.0, %v4373
        %v4375 = vpop.f32.mrb[0].mxu0
        %v4376 = vpop.f32.mrb[0].mxu0
        %v4377 = vadd.f32 0.0, %v4376
        %v4378 = vpop.f32.mrb[0].mxu0
        %4379 = vmatprep.mubr.bf16.mxu0 0
        %4380 = vmatmul.mubr.bf16.gmra.mrb[0].mxu0 %v4232
        %v4381 = vpop.f32.mrb[0].mxu0
        %v4382 = vadd.f32 0.0, %v4381
        %v4383 = vpop.f32.mrb[0].mxu0
        %v4384 = vpop.f32.mrb[0].mxu0
        %v4385 = vadd.f32 0.0, %v4384
        %v4386 = vpop.f32.mrb[0].mxu0
        %4387 = vmatprep.mubr.bf16.mxu0 0
        %4388 = vmatmul.mubr.bf16.gmra.mrb[0].mxu0 %v4233
        %v4389 = vpop.f32.mrb[0].mxu0
        %v4390 = vadd.f32 0.0, %v4389
        %v4391 = vpop.f32.mrb[0].mxu0
        %v4392 = vpop.f32.mrb[0].mxu0
        %v4393 = vadd.f32 0.0, %v4392
        %v4394 = vpop.f32.mrb[0].mxu0
        %4395 = vmatprep.mubr.bf16.mxu0 0
        %4396 = vmatmul.mubr.bf16.gmra.mrb[0].mxu0 %v4234
        %v4397 = vpop.f32.mrb[0].mxu0
        %v4398 = vadd.f32 0.0, %v4397
        %v4399 = vpop.f32.mrb[0].mxu0
        %v4400 = vpop.f32.mrb[0].mxu0
        %v4401 = vadd.f32 0.0, %v4400
        %v4402 = vpop.f32.mrb[0].mxu0
        %4403 = vmatprep.mubr.bf16.mxu0 0
        %4404 = vmatmul.mubr.bf16.gmra.mrb[0].mxu0 %v4235
        %v4405 = vpop.f32.mrb[0].mxu0
        %v4406 = vadd.f32 0.0, %v4405
        %v4407 = vpop.f32.mrb[0].mxu0
        %v4408 = vpop.f32.mrb[0].mxu0
        %v4409 = vadd.f32 0.0, %v4408
        %v4410 = vpop.f32.mrb[0].mxu0
        %4411 = vmatprep.mubr.bf16.mxu0 0
        %4412 = vmatmul.mubr.bf16.gmra.mrb[0].mxu0 %v4236
        %v4413 = vpop.f32.mrb[0].mxu0
        %v4414 = vadd.f32 0.0, %v4413
        %v4415 = vpop.f32.mrb[0].mxu0
        %v4416 = vpop.f32.mrb[0].mxu0
        %v4417 = vadd.f32 0.0, %v4416
        %v4418 = vpop.f32.mrb[0].mxu0
        %4419 = vmatprep.mubr.bf16.mxu0 0
        %4420 = vmatmul.mubr.bf16.gmra.mrb[0].mxu0 %v4237
        %v4421 = vpop.f32.mrb[0].mxu0
        %v4422 = vadd.f32 0.0, %v4421
        %v4423 = vpop.f32.mrb[0].mxu0
        %v4424 = vpop.f32.mrb[0].mxu0
        %v4425 = vadd.f32 0.0, %v4424
        %v4426 = vpop.f32.mrb[0].mxu0
        %4427 = vmatprep.mubr.bf16.mxu0 0
        %4428 = vmatmul.mubr.bf16.gmra.mrb[0].mxu0 %v4238
        %v4429 = vpop.f32.mrb[0].mxu0
        %v4430 = vadd.f32 0.0, %v4429
        %v4431 = vpop.f32.mrb[0].mxu0
        %v4432 = vpop.f32.mrb[0].mxu0
        %v4433 = vadd.f32 0.0, %v4432
        %v4434 = vpop.f32.mrb[0].mxu0
        %4435 = vmatprep.mubr.bf16.mxu0 0
        %4436 = vmatmul.mubr.bf16.gmra.mrb[0].mxu0 %v4239
        %v4437 = vpop.f32.mrb[0].mxu0
        %v4438 = vadd.f32 0.0, %v4437
        %v4439 = vpop.f32.mrb[0].mxu0
        %v4440 = vpop.f32.mrb[0].mxu0
        %v4441 = vadd.f32 0.0, %v4440
        %v4442 = vpop.f32.mrb[0].mxu0
        %4443 = vmatprep.mubr.bf16.mxu0 0
        %4444 = vmatmul.mubr.bf16.gmra.mrb[0].mxu0 %v4240
        %v4445 = vpop.f32.mrb[0].mxu0
        %v4446 = vadd.f32 0.0, %v4445
        %v4447 = vpop.f32.mrb[0].mxu0
        %v4448 = vpop.f32.mrb[0].mxu0
        %v4449 = vadd.f32 0.0, %v4448
        %v4450 = vpop.f32.mrb[0].mxu0
        %4451 = vmatprep.mubr.bf16.mxu0 0
        %4452 = vmatmul.mubr.bf16.gmra.mrb[0].mxu0 %v4241
        %v4453 = vpop.f32.mrb[0].mxu0
        %v4454 = vadd.f32 0.0, %v4453
        %v4455 = vpop.f32.mrb[0].mxu0
        %v4456 = vpop.f32.mrb[0].mxu0
        %v4457 = vadd.f32 0.0, %v4456
        %v4458 = vpop.f32.mrb[0].mxu0
        %4459 = vmatprep.mubr.bf16.mxu0 0
        %4460 = vmatmul.mubr.bf16.gmra.mrb[0].mxu0 %v4242
        %v4461 = vpop.f32.mrb[0].mxu0
        %v4462 = vadd.f32 0.0, %v4461
        %v4463 = vpop.f32.mrb[0].mxu0
        %v4464 = vpop.f32.mrb[0].mxu0
        %v4465 = vadd.f32 0.0, %v4464
        %v4466 = vpop.f32.mrb[0].mxu0
        %4467 = vdwg.mxu0
        %v4468 = vadd.f32 %v3970, %v4342
        %v4469 = vadd.f32 %v3971, %v4345
        %v4470 = vadd.f32 %v3972, %v4350
        %v4471 = vadd.f32 %v3973, %v4353
        %v4472 = vadd.f32 %v3974, %v4358
        %v4473 = vadd.f32 %v3975, %v4361
        %v4474 = vadd.f32 %v3976, %v4366
        %v4475 = vadd.f32 %v3977, %v4369
        %v4476 = vadd.f32 %v3978, %v4374
        %v4477 = vadd.f32 %v3979, %v4377
        %v4478 = vadd.f32 %v3980, %v4382
        %v4479 = vadd.f32 %v3981, %v4385
        %v4480 = vadd.f32 %v3982, %v4390
        %v4481 = vadd.f32 %v3983, %v4393
        %v4482 = vadd.f32 %v3984, %v4398
        %v4483 = vadd.f32 %v3985, %v4401
        %v4484 = vadd.f32 %v3986, %v4406
        %v4485 = vadd.f32 %v3987, %v4409
        %v4486 = vadd.f32 %v3988, %v4414
        %v4487 = vadd.f32 %v3989, %v4417
        %v4488 = vadd.f32 %v3990, %v4422
        %v4489 = vadd.f32 %v3991, %v4425
        %v4490 = vadd.f32 %v3992, %v4430
        %v4491 = vadd.f32 %v3993, %v4433
        %v4492 = vadd.f32 %v3994, %v4438
        %v4493 = vadd.f32 %v3995, %v4441
        %v4494 = vadd.f32 %v3996, %v4446
        %v4495 = vadd.f32 %v3997, %v4449
        %v4496 = vadd.f32 %v3998, %v4454
        %v4497 = vadd.f32 %v3999, %v4457
        %v4498 = vadd.f32 %v4000, %v4462
        %v4499 = vadd.f32 %v4001, %v4465
        %s4500 = scalar_lea.vmem [#allocation2], 24
        %v4501 = vld [vmem:[%s4500] sm:$0xf]
        %v4502 = vld [vmem:[%s4500 + $0x4] sm:$0xf]
        %v4503 = vld [vmem:[%s4500 + $0xc] sm:$0xf]
        %v4504 = vld [vmem:[%s4500 + $0x10] sm:$0xf]
        %v4505 = vld [vmem:[%s4500 + $0x18] sm:$0xf]
        %v4506 = vld [vmem:[%s4500 + $0x1c] sm:$0xf]
        %v4507 = vld [vmem:[%s4500 + $0x24] sm:$0xf]
        %v4508 = vld [vmem:[%s4500 + $0x28] sm:$0xf]
        %v4509 = vld [vmem:[%s4500 + $0x30] sm:$0xf]
        %v4510 = vld [vmem:[%s4500 + $0x34] sm:$0xf]
        %v4511 = vld [vmem:[%s4500 + $0x3c] sm:$0xf]
        %v4512 = vld [vmem:[%s4500 + $0x40] sm:$0xf]
        %v4513 = vld [vmem:[%s4500 + $0x48] sm:$0xf]
        %v4514 = vld [vmem:[%s4500 + $0x4c] sm:$0xf]
        %v4515 = vld [vmem:[%s4500 + $0x54] sm:$0xf]
        %v4516 = vld [vmem:[%s4500 + $0x58] sm:$0xf]
        %v4517 = vld [vmem:[%s4500 + $0x60] sm:$0xf]
        %v4518 = vld [vmem:[%s4500 + $0x64] sm:$0xf]
        %v4519 = vld [vmem:[%s4500 + $0x6c] sm:$0xf]
        %v4520 = vld [vmem:[%s4500 + $0x70] sm:$0xf]
        %v4521 = vld [vmem:[%s4500 + $0x78] sm:$0xf]
        %v4522 = vld [vmem:[%s4500 + $0x7c] sm:$0xf]
        %v4523 = vld [vmem:[%s4500 + $0x84] sm:$0xf]
        %v4524 = vld [vmem:[%s4500 + $0x88] sm:$0xf]
        %v4525 = vld [vmem:[%s4500 + $0x90] sm:$0xf]
        %v4526 = vld [vmem:[%s4500 + $0x94] sm:$0xf]
        %v4527 = vld [vmem:[%s4500 + $0x9c] sm:$0xf]
        %v4528 = vld [vmem:[%s4500 + $0xa0] sm:$0xf]
        %v4529 = vld [vmem:[%s4500 + $0xa8] sm:$0xf]
        %v4530 = vld [vmem:[%s4500 + $0xac] sm:$0xf]
        %v4531 = vld [vmem:[%s4500 + $0xb4] sm:$0xf]
        %v4532 = vld [vmem:[%s4500 + $0xb8] sm:$0xf]
        %s4533 = scalar_lea.vmem [#allocation6], 384
        %v4534 = vld [vmem:[%s4533] sm:$0xf]
        %v4535 = vld [vmem:[%s4533 + $0x4] sm:$0xf]
        %v4536 = vld [vmem:[%s4533 + $0x8] sm:$0xf]
        %v4537 = vld [vmem:[%s4533 + $0xc] sm:$0xf]
        %v4538 = vld [vmem:[%s4533 + $0x10] sm:$0xf]
        %v4539 = vld [vmem:[%s4533 + $0x14] sm:$0xf]
        %v4540 = vld [vmem:[%s4533 + $0x18] sm:$0xf]
        %v4541 = vld [vmem:[%s4533 + $0x1c] sm:$0xf]
        %v4542 = vld [vmem:[%s4533 + $0x20] sm:$0xf]
        %v4543 = vld [vmem:[%s4533 + $0x24] sm:$0xf]
        %v4544 = vld [vmem:[%s4533 + $0x28] sm:$0xf]
        %v4545 = vld [vmem:[%s4533 + $0x2c] sm:$0xf]
        %v4546 = vld [vmem:[%s4533 + $0x30] sm:$0xf]
        %v4547 = vld [vmem:[%s4533 + $0x34] sm:$0xf]
        %v4548 = vld [vmem:[%s4533 + $0x38] sm:$0xf]
        %v4549 = vld [vmem:[%s4533 + $0x3c] sm:$0xf]
        %v4582 = vunpack.c.l.b16 %v4501
        %v4583 = vunpack.c.l.b16 %v4502
        %v4584 = vunpack.c.l.b16 %v4503
        %v4585 = vunpack.c.l.b16 %v4504
        %v4586 = vunpack.c.l.b16 %v4505
        %v4587 = vunpack.c.l.b16 %v4506
        %v4588 = vunpack.c.l.b16 %v4507
        %v4589 = vunpack.c.l.b16 %v4508
        %v4590 = vunpack.c.l.b16 %v4509
        %v4591 = vunpack.c.l.b16 %v4510
        %v4592 = vunpack.c.l.b16 %v4511
        %v4593 = vunpack.c.l.b16 %v4512
        %v4594 = vunpack.c.l.b16 %v4513
        %v4595 = vunpack.c.l.b16 %v4514
        %v4596 = vunpack.c.l.b16 %v4515
        %v4597 = vunpack.c.l.b16 %v4516
        %v4598 = vunpack.c.l.b16 %v4517
        %v4599 = vunpack.c.l.b16 %v4518
        %v4600 = vunpack.c.l.b16 %v4519
        %v4601 = vunpack.c.l.b16 %v4520
        %v4602 = vunpack.c.l.b16 %v4521
        %v4603 = vunpack.c.l.b16 %v4522
        %v4604 = vunpack.c.l.b16 %v4523
        %v4605 = vunpack.c.l.b16 %v4524
        %v4606 = vunpack.c.l.b16 %v4525
        %v4607 = vunpack.c.l.b16 %v4526
        %v4608 = vunpack.c.l.b16 %v4527
        %v4609 = vunpack.c.l.b16 %v4528
        %v4610 = vunpack.c.l.b16 %v4529
        %v4611 = vunpack.c.l.b16 %v4530
        %v4612 = vunpack.c.l.b16 %v4531
        %v4613 = vunpack.c.l.b16 %v4532
        %v4614 = vpack.c.b16 %v4583, %v4582
        %v4615 = vpack.c.b16 %v4585, %v4584
        %v4616 = vpack.c.b16 %v4587, %v4586
        %v4617 = vpack.c.b16 %v4589, %v4588
        %v4618 = vpack.c.b16 %v4591, %v4590
        %v4619 = vpack.c.b16 %v4593, %v4592
        %v4620 = vpack.c.b16 %v4595, %v4594
        %v4621 = vpack.c.b16 %v4597, %v4596
        %v4622 = vpack.c.b16 %v4599, %v4598
        %v4623 = vpack.c.b16 %v4601, %v4600
        %v4624 = vpack.c.b16 %v4603, %v4602
        %v4625 = vpack.c.b16 %v4605, %v4604
        %v4626 = vpack.c.b16 %v4607, %v4606
        %v4627 = vpack.c.b16 %v4609, %v4608
        %v4628 = vpack.c.b16 %v4611, %v4610
        %v4629 = vpack.c.b16 %v4613, %v4612
        %v4662 = vunpack.c.l.b16 %v4534
        %v4663 = vunpack.c.l.b16 %v4535
        %v4664 = vunpack.c.l.b16 %v4536
        %v4665 = vunpack.c.l.b16 %v4537
        %v4666 = vunpack.c.l.b16 %v4538
        %v4667 = vunpack.c.l.b16 %v4539
        %v4668 = vunpack.c.l.b16 %v4540
        %v4669 = vunpack.c.l.b16 %v4541
        %v4670 = vunpack.c.l.b16 %v4542
        %v4671 = vunpack.c.l.b16 %v4543
        %v4672 = vunpack.c.l.b16 %v4544
        %v4673 = vunpack.c.l.b16 %v4545
        %v4674 = vunpack.c.l.b16 %v4546
        %v4675 = vunpack.c.l.b16 %v4547
        %v4676 = vunpack.c.l.b16 %v4548
        %v4677 = vunpack.c.l.b16 %v4549
        %v4678 = vpack.c.b16 %v4663, %v4662
        %v4679 = vpack.c.b16 %v4665, %v4664
        %v4680 = vpack.c.b16 %v4667, %v4666
        %v4681 = vpack.c.b16 %v4669, %v4668
        %v4682 = vpack.c.b16 %v4671, %v4670
        %v4683 = vpack.c.b16 %v4673, %v4672
        %v4684 = vpack.c.b16 %v4675, %v4674
        %v4685 = vpack.c.b16 %v4677, %v4676
        %4694 = vmatprep.subr.bf16.mxu0 0
        %4695 = vmatpush1.bf16.msra.mxu0 %v4678
        %4696 = vmatprep.subr.bf16.mxu0 0
        %4697 = vmatpush1.bf16.msra.mxu0 %v4679
        %4698 = vmatprep.subr.bf16.mxu0 0
        %4699 = vmatpush1.bf16.msra.mxu0 %v4680
        %4700 = vmatprep.subr.bf16.mxu0 0
        %4701 = vmatpush1.bf16.msra.mxu0 %v4681
        %4702 = vmatprep.subr.bf16.mxu0 0
        %4703 = vmatpush1.bf16.msra.mxu0 %v4682
        %4704 = vmatprep.subr.bf16.mxu0 0
        %4705 = vmatpush1.bf16.msra.mxu0 %v4683
        %4706 = vmatprep.subr.bf16.mxu0 0
        %4707 = vmatpush1.bf16.msra.mxu0 %v4684
        %4708 = vmatprep.subr.bf16.mxu0 0
        %4709 = vmatpush1.bf16.msra.mxu0 %v4685
        %4710 = vmatprep.subr.bf16.mxu0 0
        %4711 = vmatpush1.bf16.msra.mxu0 0
        %4712 = vmatprep.subr.bf16.mxu0 0
        %4713 = vmatpush1.bf16.msra.mxu0 0
        %4714 = vmatprep.subr.bf16.mxu0 0
        %4715 = vmatpush1.bf16.msra.mxu0 0
        %4716 = vmatprep.subr.bf16.mxu0 0
        %4717 = vmatpush1.bf16.msra.mxu0 0
        %4718 = vmatprep.subr.bf16.mxu0 0
        %4719 = vmatpush1.bf16.msra.mxu0 0
        %4720 = vmatprep.subr.bf16.mxu0 0
        %4721 = vmatpush1.bf16.msra.mxu0 0
        %4722 = vmatprep.subr.bf16.mxu0 0
        %4723 = vmatpush1.bf16.msra.mxu0 0
        %4724 = vmatprep.subr.bf16.mxu0 0
        %4725 = vmatpush1.bf16.msra.mxu0 0
        %4726 = vmatprep.mubr.bf16.mxu0 0
        %4727 = vmatmul.mubr.bf16.gmra.mrb[0].mxu0 %v4614
        %v4728 = vpop.f32.mrb[0].mxu0
        %v4729 = vadd.f32 0.0, %v4728
        %v4730 = vpop.f32.mrb[0].mxu0
        %v4731 = vpop.f32.mrb[0].mxu0
        %v4732 = vadd.f32 0.0, %v4731
        %v4733 = vpop.f32.mrb[0].mxu0
        %4734 = vmatprep.mubr.bf16.mxu0 0
        %4735 = vmatmul.mubr.bf16.gmra.mrb[0].mxu0 %v4615
        %v4736 = vpop.f32.mrb[0].mxu0
        %v4737 = vadd.f32 0.0, %v4736
        %v4738 = vpop.f32.mrb[0].mxu0
        %v4739 = vpop.f32.mrb[0].mxu0
        %v4740 = vadd.f32 0.0, %v4739
        %v4741 = vpop.f32.mrb[0].mxu0
        %4742 = vmatprep.mubr.bf16.mxu0 0
        %4743 = vmatmul.mubr.bf16.gmra.mrb[0].mxu0 %v4616
        %v4744 = vpop.f32.mrb[0].mxu0
        %v4745 = vadd.f32 0.0, %v4744
        %v4746 = vpop.f32.mrb[0].mxu0
        %v4747 = vpop.f32.mrb[0].mxu0
        %v4748 = vadd.f32 0.0, %v4747
        %v4749 = vpop.f32.mrb[0].mxu0
        %4750 = vmatprep.mubr.bf16.mxu0 0
        %4751 = vmatmul.mubr.bf16.gmra.mrb[0].mxu0 %v4617
        %v4752 = vpop.f32.mrb[0].mxu0
        %v4753 = vadd.f32 0.0, %v4752
        %v4754 = vpop.f32.mrb[0].mxu0
        %v4755 = vpop.f32.mrb[0].mxu0
        %v4756 = vadd.f32 0.0, %v4755
        %v4757 = vpop.f32.mrb[0].mxu0
        %4758 = vmatprep.mubr.bf16.mxu0 0
        %4759 = vmatmul.mubr.bf16.gmra.mrb[0].mxu0 %v4618
        %v4760 = vpop.f32.mrb[0].mxu0
        %v4761 = vadd.f32 0.0, %v4760
        %v4762 = vpop.f32.mrb[0].mxu0
        %v4763 = vpop.f32.mrb[0].mxu0
        %v4764 = vadd.f32 0.0, %v4763
        %v4765 = vpop.f32.mrb[0].mxu0
        %4766 = vmatprep.mubr.bf16.mxu0 0
        %4767 = vmatmul.mubr.bf16.gmra.mrb[0].mxu0 %v4619
        %v4768 = vpop.f32.mrb[0].mxu0
        %v4769 = vadd.f32 0.0, %v4768
        %v4770 = vpop.f32.mrb[0].mxu0
        %v4771 = vpop.f32.mrb[0].mxu0
        %v4772 = vadd.f32 0.0, %v4771
        %v4773 = vpop.f32.mrb[0].mxu0
        %4774 = vmatprep.mubr.bf16.mxu0 0
        %4775 = vmatmul.mubr.bf16.gmra.mrb[0].mxu0 %v4620
        %v4776 = vpop.f32.mrb[0].mxu0
        %v4777 = vadd.f32 0.0, %v4776
        %v4778 = vpop.f32.mrb[0].mxu0
        %v4779 = vpop.f32.mrb[0].mxu0
        %v4780 = vadd.f32 0.0, %v4779
        %v4781 = vpop.f32.mrb[0].mxu0
        %4782 = vmatprep.mubr.bf16.mxu0 0
        %4783 = vmatmul.mubr.bf16.gmra.mrb[0].mxu0 %v4621
        %v4784 = vpop.f32.mrb[0].mxu0
        %v4785 = vadd.f32 0.0, %v4784
        %v4786 = vpop.f32.mrb[0].mxu0
        %v4787 = vpop.f32.mrb[0].mxu0
        %v4788 = vadd.f32 0.0, %v4787
        %v4789 = vpop.f32.mrb[0].mxu0
        %4790 = vmatprep.mubr.bf16.mxu0 0
        %4791 = vmatmul.mubr.bf16.gmra.mrb[0].mxu0 %v4622
        %v4792 = vpop.f32.mrb[0].mxu0
        %v4793 = vadd.f32 0.0, %v4792
        %v4794 = vpop.f32.mrb[0].mxu0
        %v4795 = vpop.f32.mrb[0].mxu0
        %v4796 = vadd.f32 0.0, %v4795
        %v4797 = vpop.f32.mrb[0].mxu0
        %4798 = vmatprep.mubr.bf16.mxu0 0
        %4799 = vmatmul.mubr.bf16.gmra.mrb[0].mxu0 %v4623
        %v4800 = vpop.f32.mrb[0].mxu0
        %v4801 = vadd.f32 0.0, %v4800
        %v4802 = vpop.f32.mrb[0].mxu0
        %v4803 = vpop.f32.mrb[0].mxu0
        %v4804 = vadd.f32 0.0, %v4803
        %v4805 = vpop.f32.mrb[0].mxu0
        %4806 = vmatprep.mubr.bf16.mxu0 0
        %4807 = vmatmul.mubr.bf16.gmra.mrb[0].mxu0 %v4624
        %v4808 = vpop.f32.mrb[0].mxu0
        %v4809 = vadd.f32 0.0, %v4808
        %v4810 = vpop.f32.mrb[0].mxu0
        %v4811 = vpop.f32.mrb[0].mxu0
        %v4812 = vadd.f32 0.0, %v4811
        %v4813 = vpop.f32.mrb[0].mxu0
        %4814 = vmatprep.mubr.bf16.mxu0 0
        %4815 = vmatmul.mubr.bf16.gmra.mrb[0].mxu0 %v4625
        %v4816 = vpop.f32.mrb[0].mxu0
        %v4817 = vadd.f32 0.0, %v4816
        %v4818 = vpop.f32.mrb[0].mxu0
        %v4819 = vpop.f32.mrb[0].mxu0
        %v4820 = vadd.f32 0.0, %v4819
        %v4821 = vpop.f32.mrb[0].mxu0
        %4822 = vmatprep.mubr.bf16.mxu0 0
        %4823 = vmatmul.mubr.bf16.gmra.mrb[0].mxu0 %v4626
        %v4824 = vpop.f32.mrb[0].mxu0
        %v4825 = vadd.f32 0.0, %v4824
        %v4826 = vpop.f32.mrb[0].mxu0
        %v4827 = vpop.f32.mrb[0].mxu0
        %v4828 = vadd.f32 0.0, %v4827
        %v4829 = vpop.f32.mrb[0].mxu0
        %4830 = vmatprep.mubr.bf16.mxu0 0
        %4831 = vmatmul.mubr.bf16.gmra.mrb[0].mxu0 %v4627
        %v4832 = vpop.f32.mrb[0].mxu0
        %v4833 = vadd.f32 0.0, %v4832
        %v4834 = vpop.f32.mrb[0].mxu0
        %v4835 = vpop.f32.mrb[0].mxu0
        %v4836 = vadd.f32 0.0, %v4835
        %v4837 = vpop.f32.mrb[0].mxu0
        %4838 = vmatprep.mubr.bf16.mxu0 0
        %4839 = vmatmul.mubr.bf16.gmra.mrb[0].mxu0 %v4628
        %v4840 = vpop.f32.mrb[0].mxu0
        %v4841 = vadd.f32 0.0, %v4840
        %v4842 = vpop.f32.mrb[0].mxu0
        %v4843 = vpop.f32.mrb[0].mxu0
        %v4844 = vadd.f32 0.0, %v4843
        %v4845 = vpop.f32.mrb[0].mxu0
        %4846 = vmatprep.mubr.bf16.mxu0 0
        %4847 = vmatmul.mubr.bf16.gmra.mrb[0].mxu0 %v4629
        %v4848 = vpop.f32.mrb[0].mxu0
        %v4849 = vadd.f32 0.0, %v4848
        %v4850 = vpop.f32.mrb[0].mxu0
        %v4851 = vpop.f32.mrb[0].mxu0
        %v4852 = vadd.f32 0.0, %v4851
        %v4853 = vpop.f32.mrb[0].mxu0
        %4854 = vdwg.mxu0
        %v4855 = vadd.f32 %v4468, %v4729
        %v4856 = vadd.f32 %v4469, %v4732
        %v4857 = vadd.f32 %v4470, %v4737
        %v4858 = vadd.f32 %v4471, %v4740
        %v4859 = vadd.f32 %v4472, %v4745
        %v4860 = vadd.f32 %v4473, %v4748
        %v4861 = vadd.f32 %v4474, %v4753
        %v4862 = vadd.f32 %v4475, %v4756
        %v4863 = vadd.f32 %v4476, %v4761
        %v4864 = vadd.f32 %v4477, %v4764
        %v4865 = vadd.f32 %v4478, %v4769
        %v4866 = vadd.f32 %v4479, %v4772
        %v4867 = vadd.f32 %v4480, %v4777
        %v4868 = vadd.f32 %v4481, %v4780
        %v4869 = vadd.f32 %v4482, %v4785
        %v4870 = vadd.f32 %v4483, %v4788
        %v4871 = vadd.f32 %v4484, %v4793
        %v4872 = vadd.f32 %v4485, %v4796
        %v4873 = vadd.f32 %v4486, %v4801
        %v4874 = vadd.f32 %v4487, %v4804
        %v4875 = vadd.f32 %v4488, %v4809
        %v4876 = vadd.f32 %v4489, %v4812
        %v4877 = vadd.f32 %v4490, %v4817
        %v4878 = vadd.f32 %v4491, %v4820
        %v4879 = vadd.f32 %v4492, %v4825
        %v4880 = vadd.f32 %v4493, %v4828
        %v4881 = vadd.f32 %v4494, %v4833
        %v4882 = vadd.f32 %v4495, %v4836
        %v4883 = vadd.f32 %v4496, %v4841
        %v4884 = vadd.f32 %v4497, %v4844
        %v4885 = vadd.f32 %v4498, %v4849
        %v4886 = vadd.f32 %v4499, %v4852
        %v4887 = vld [vmem:[%s4500] sm:$0xf]
        %v4888 = vld [vmem:[%s4500 + $0x4] sm:$0xf]
        %v4889 = vld [vmem:[%s4500 + $0x8] sm:$0x1]
        %v4890 = vld [vmem:[%s4500 + $0xc] sm:$0xf]
        %v4891 = vld [vmem:[%s4500 + $0x10] sm:$0xf]
        %v4892 = vld [vmem:[%s4500 + $0x14] sm:$0x1]
        %v4893 = vld [vmem:[%s4500 + $0x18] sm:$0xf]
        %v4894 = vld [vmem:[%s4500 + $0x1c] sm:$0xf]
        %v4895 = vld [vmem:[%s4500 + $0x20] sm:$0x1]
        %v4896 = vld [vmem:[%s4500 + $0x24] sm:$0xf]
        %v4897 = vld [vmem:[%s4500 + $0x28] sm:$0xf]
        %v4898 = vld [vmem:[%s4500 + $0x2c] sm:$0x1]
        %v4899 = vld [vmem:[%s4500 + $0x30] sm:$0xf]
        %v4900 = vld [vmem:[%s4500 + $0x34] sm:$0xf]
        %v4901 = vld [vmem:[%s4500 + $0x38] sm:$0x1]
        %v4902 = vld [vmem:[%s4500 + $0x3c] sm:$0xf]
        %v4903 = vld [vmem:[%s4500 + $0x40] sm:$0xf]
        %v4904 = vld [vmem:[%s4500 + $0x44] sm:$0x1]
        %v4905 = vld [vmem:[%s4500 + $0x48] sm:$0xf]
        %v4906 = vld [vmem:[%s4500 + $0x4c] sm:$0xf]
        %v4907 = vld [vmem:[%s4500 + $0x50] sm:$0x1]
        %v4908 = vld [vmem:[%s4500 + $0x54] sm:$0xf]
        %v4909 = vld [vmem:[%s4500 + $0x58] sm:$0xf]
        %v4910 = vld [vmem:[%s4500 + $0x5c] sm:$0x1]
        %v4911 = vld [vmem:[%s4500 + $0x60] sm:$0xf]
        %v4912 = vld [vmem:[%s4500 + $0x64] sm:$0xf]
        %v4913 = vld [vmem:[%s4500 + $0x68] sm:$0x1]
        %v4914 = vld [vmem:[%s4500 + $0x6c] sm:$0xf]
        %v4915 = vld [vmem:[%s4500 + $0x70] sm:$0xf]
        %v4916 = vld [vmem:[%s4500 + $0x74] sm:$0x1]
        %v4917 = vld [vmem:[%s4500 + $0x78] sm:$0xf]
        %v4918 = vld [vmem:[%s4500 + $0x7c] sm:$0xf]
        %v4919 = vld [vmem:[%s4500 + $0x80] sm:$0x1]
        %v4920 = vld [vmem:[%s4500 + $0x84] sm:$0xf]
        %v4921 = vld [vmem:[%s4500 + $0x88] sm:$0xf]
        %v4922 = vld [vmem:[%s4500 + $0x8c] sm:$0x1]
        %v4923 = vld [vmem:[%s4500 + $0x90] sm:$0xf]
        %v4924 = vld [vmem:[%s4500 + $0x94] sm:$0xf]
        %v4925 = vld [vmem:[%s4500 + $0x98] sm:$0x1]
        %v4926 = vld [vmem:[%s4500 + $0x9c] sm:$0xf]
        %v4927 = vld [vmem:[%s4500 + $0xa0] sm:$0xf]
        %v4928 = vld [vmem:[%s4500 + $0xa4] sm:$0x1]
        %v4929 = vld [vmem:[%s4500 + $0xa8] sm:$0xf]
        %v4930 = vld [vmem:[%s4500 + $0xac] sm:$0xf]
        %v4931 = vld [vmem:[%s4500 + $0xb0] sm:$0x1]
        %v4932 = vld [vmem:[%s4500 + $0xb4] sm:$0xf]
        %v4933 = vld [vmem:[%s4500 + $0xb8] sm:$0xf]
        %v4934 = vld [vmem:[%s4500 + $0xbc] sm:$0x1]
        %v4936 = vshrl.u32 %v4887, 16
        %v4938 = vrot.slane %v4936, 4
        %v4939 = vshll.u32 %v4887, 16
        %v4941 = vrot.slane %v4939, 5
        %v4942 = vor.u32 %v4938, %v4941
        %v4943 = vrot.slane %v4942, 4
        %v4945 = vshll.u32 %v4888, 16
        %v4947 = vrot.slane %v4945, 5
        %v4948 = vsel %vm1397, %v4943, %v4947
        %v4949 = vshrl.u32 %v4888, 16
        %v4951 = vrot.slane %v4949, 4
        %v4952 = vor.u32 %v4951, %v4947
        %v4953 = vrot.slane %v4952, 4
        %v4955 = vshll.u32 %v4889, 16
        %v4957 = vrot.slane %v4955, 5
        %v4958 = vsel %vm1397, %v4953, %v4957
        %v4960 = vshrl.u32 %v4890, 16
        %v4962 = vrot.slane %v4960, 4
        %v4963 = vshll.u32 %v4890, 16
        %v4965 = vrot.slane %v4963, 5
        %v4966 = vor.u32 %v4962, %v4965
        %v4967 = vrot.slane %v4966, 4
        %v4969 = vshll.u32 %v4891, 16
        %v4971 = vrot.slane %v4969, 5
        %v4972 = vsel %vm1397, %v4967, %v4971
        %v4973 = vshrl.u32 %v4891, 16
        %v4975 = vrot.slane %v4973, 4
        %v4976 = vor.u32 %v4975, %v4971
        %v4977 = vrot.slane %v4976, 4
        %v4979 = vshll.u32 %v4892, 16
        %v4981 = vrot.slane %v4979, 5
        %v4982 = vsel %vm1397, %v4977, %v4981
        %v4984 = vshrl.u32 %v4893, 16
        %v4986 = vrot.slane %v4984, 4
        %v4987 = vshll.u32 %v4893, 16
        %v4989 = vrot.slane %v4987, 5
        %v4990 = vor.u32 %v4986, %v4989
        %v4991 = vrot.slane %v4990, 4
        %v4993 = vshll.u32 %v4894, 16
        %v4995 = vrot.slane %v4993, 5
        %v4996 = vsel %vm1397, %v4991, %v4995
        %v4997 = vshrl.u32 %v4894, 16
        %v4999 = vrot.slane %v4997, 4
        %v5000 = vor.u32 %v4999, %v4995
        %v5001 = vrot.slane %v5000, 4
        %v5003 = vshll.u32 %v4895, 16
        %v5005 = vrot.slane %v5003, 5
        %v5006 = vsel %vm1397, %v5001, %v5005
        %v5008 = vshrl.u32 %v4896, 16
        %v5010 = vrot.slane %v5008, 4
        %v5011 = vshll.u32 %v4896, 16
        %v5013 = vrot.slane %v5011, 5
        %v5014 = vor.u32 %v5010, %v5013
        %v5015 = vrot.slane %v5014, 4
        %v5017 = vshll.u32 %v4897, 16
        %v5019 = vrot.slane %v5017, 5
        %v5020 = vsel %vm1397, %v5015, %v5019
        %v5021 = vshrl.u32 %v4897, 16
        %v5023 = vrot.slane %v5021, 4
        %v5024 = vor.u32 %v5023, %v5019
        %v5025 = vrot.slane %v5024, 4
        %v5027 = vshll.u32 %v4898, 16
        %v5029 = vrot.slane %v5027, 5
        %v5030 = vsel %vm1397, %v5025, %v5029
        %v5032 = vshrl.u32 %v4899, 16
        %v5034 = vrot.slane %v5032, 4
        %v5035 = vshll.u32 %v4899, 16
        %v5037 = vrot.slane %v5035, 5
        %v5038 = vor.u32 %v5034, %v5037
        %v5039 = vrot.slane %v5038, 4
        %v5041 = vshll.u32 %v4900, 16
        %v5043 = vrot.slane %v5041, 5
        %v5044 = vsel %vm1397, %v5039, %v5043
        %v5045 = vshrl.u32 %v4900, 16
        %v5047 = vrot.slane %v5045, 4
        %v5048 = vor.u32 %v5047, %v5043
        %v5049 = vrot.slane %v5048, 4
        %v5051 = vshll.u32 %v4901, 16
        %v5053 = vrot.slane %v5051, 5
        %v5054 = vsel %vm1397, %v5049, %v5053
        %v5056 = vshrl.u32 %v4902, 16
        %v5058 = vrot.slane %v5056, 4
        %v5059 = vshll.u32 %v4902, 16
        %v5061 = vrot.slane %v5059, 5
        %v5062 = vor.u32 %v5058, %v5061
        %v5063 = vrot.slane %v5062, 4
        %v5065 = vshll.u32 %v4903, 16
        %v5067 = vrot.slane %v5065, 5
        %v5068 = vsel %vm1397, %v5063, %v5067
        %v5069 = vshrl.u32 %v4903, 16
        %v5071 = vrot.slane %v5069, 4
        %v5072 = vor.u32 %v5071, %v5067
        %v5073 = vrot.slane %v5072, 4
        %v5075 = vshll.u32 %v4904, 16
        %v5077 = vrot.slane %v5075, 5
        %v5078 = vsel %vm1397, %v5073, %v5077
        %v5080 = vshrl.u32 %v4905, 16
        %v5082 = vrot.slane %v5080, 4
        %v5083 = vshll.u32 %v4905, 16
        %v5085 = vrot.slane %v5083, 5
        %v5086 = vor.u32 %v5082, %v5085
        %v5087 = vrot.slane %v5086, 4
        %v5089 = vshll.u32 %v4906, 16
        %v5091 = vrot.slane %v5089, 5
        %v5092 = vsel %vm1397, %v5087, %v5091
        %v5093 = vshrl.u32 %v4906, 16
        %v5095 = vrot.slane %v5093, 4
        %v5096 = vor.u32 %v5095, %v5091
        %v5097 = vrot.slane %v5096, 4
        %v5099 = vshll.u32 %v4907, 16
        %v5101 = vrot.slane %v5099, 5
        %v5102 = vsel %vm1397, %v5097, %v5101
        %v5104 = vshrl.u32 %v4908, 16
        %v5106 = vrot.slane %v5104, 4
        %v5107 = vshll.u32 %v4908, 16
        %v5109 = vrot.slane %v5107, 5
        %v5110 = vor.u32 %v5106, %v5109
        %v5111 = vrot.slane %v5110, 4
        %v5113 = vshll.u32 %v4909, 16
        %v5115 = vrot.slane %v5113, 5
        %v5116 = vsel %vm1397, %v5111, %v5115
        %v5117 = vshrl.u32 %v4909, 16
        %v5119 = vrot.slane %v5117, 4
        %v5120 = vor.u32 %v5119, %v5115
        %v5121 = vrot.slane %v5120, 4
        %v5123 = vshll.u32 %v4910, 16
        %v5125 = vrot.slane %v5123, 5
        %v5126 = vsel %vm1397, %v5121, %v5125
        %v5128 = vshrl.u32 %v4911, 16
        %v5130 = vrot.slane %v5128, 4
        %v5131 = vshll.u32 %v4911, 16
        %v5133 = vrot.slane %v5131, 5
        %v5134 = vor.u32 %v5130, %v5133
        %v5135 = vrot.slane %v5134, 4
        %v5137 = vshll.u32 %v4912, 16
        %v5139 = vrot.slane %v5137, 5
        %v5140 = vsel %vm1397, %v5135, %v5139
        %v5141 = vshrl.u32 %v4912, 16
        %v5143 = vrot.slane %v5141, 4
        %v5144 = vor.u32 %v5143, %v5139
        %v5145 = vrot.slane %v5144, 4
        %v5147 = vshll.u32 %v4913, 16
        %v5149 = vrot.slane %v5147, 5
        %v5150 = vsel %vm1397, %v5145, %v5149
        %v5152 = vshrl.u32 %v4914, 16
        %v5154 = vrot.slane %v5152, 4
        %v5155 = vshll.u32 %v4914, 16
        %v5157 = vrot.slane %v5155, 5
        %v5158 = vor.u32 %v5154, %v5157
        %v5159 = vrot.slane %v5158, 4
        %v5161 = vshll.u32 %v4915, 16
        %v5163 = vrot.slane %v5161, 5
        %v5164 = vsel %vm1397, %v5159, %v5163
        %v5165 = vshrl.u32 %v4915, 16
        %v5167 = vrot.slane %v5165, 4
        %v5168 = vor.u32 %v5167, %v5163
        %v5169 = vrot.slane %v5168, 4
        %v5171 = vshll.u32 %v4916, 16
        %v5173 = vrot.slane %v5171, 5
        %v5174 = vsel %vm1397, %v5169, %v5173
        %v5176 = vshrl.u32 %v4917, 16
        %v5178 = vrot.slane %v5176, 4
        %v5179 = vshll.u32 %v4917, 16
        %v5181 = vrot.slane %v5179, 5
        %v5182 = vor.u32 %v5178, %v5181
        %v5183 = vrot.slane %v5182, 4
        %v5185 = vshll.u32 %v4918, 16
        %v5187 = vrot.slane %v5185, 5
        %v5188 = vsel %vm1397, %v5183, %v5187
        %v5189 = vshrl.u32 %v4918, 16
        %v5191 = vrot.slane %v5189, 4
        %v5192 = vor.u32 %v5191, %v5187
        %v5193 = vrot.slane %v5192, 4
        %v5195 = vshll.u32 %v4919, 16
        %v5197 = vrot.slane %v5195, 5
        %v5198 = vsel %vm1397, %v5193, %v5197
        %v5200 = vshrl.u32 %v4920, 16
        %v5202 = vrot.slane %v5200, 4
        %v5203 = vshll.u32 %v4920, 16
        %v5205 = vrot.slane %v5203, 5
        %v5206 = vor.u32 %v5202, %v5205
        %v5207 = vrot.slane %v5206, 4
        %v5209 = vshll.u32 %v4921, 16
        %v5211 = vrot.slane %v5209, 5
        %v5212 = vsel %vm1397, %v5207, %v5211
        %v5213 = vshrl.u32 %v4921, 16
        %v5215 = vrot.slane %v5213, 4
        %v5216 = vor.u32 %v5215, %v5211
        %v5217 = vrot.slane %v5216, 4
        %v5219 = vshll.u32 %v4922, 16
        %v5221 = vrot.slane %v5219, 5
        %v5222 = vsel %vm1397, %v5217, %v5221
        %v5224 = vshrl.u32 %v4923, 16
        %v5226 = vrot.slane %v5224, 4
        %v5227 = vshll.u32 %v4923, 16
        %v5229 = vrot.slane %v5227, 5
        %v5230 = vor.u32 %v5226, %v5229
        %v5231 = vrot.slane %v5230, 4
        %v5233 = vshll.u32 %v4924, 16
        %v5235 = vrot.slane %v5233, 5
        %v5236 = vsel %vm1397, %v5231, %v5235
        %v5237 = vshrl.u32 %v4924, 16
        %v5239 = vrot.slane %v5237, 4
        %v5240 = vor.u32 %v5239, %v5235
        %v5241 = vrot.slane %v5240, 4
        %v5243 = vshll.u32 %v4925, 16
        %v5245 = vrot.slane %v5243, 5
        %v5246 = vsel %vm1397, %v5241, %v5245
        %v5248 = vshrl.u32 %v4926, 16
        %v5250 = vrot.slane %v5248, 4
        %v5251 = vshll.u32 %v4926, 16
        %v5253 = vrot.slane %v5251, 5
        %v5254 = vor.u32 %v5250, %v5253
        %v5255 = vrot.slane %v5254, 4
        %v5257 = vshll.u32 %v4927, 16
        %v5259 = vrot.slane %v5257, 5
        %v5260 = vsel %vm1397, %v5255, %v5259
        %v5261 = vshrl.u32 %v4927, 16
        %v5263 = vrot.slane %v5261, 4
        %v5264 = vor.u32 %v5263, %v5259
        %v5265 = vrot.slane %v5264, 4
        %v5267 = vshll.u32 %v4928, 16
        %v5269 = vrot.slane %v5267, 5
        %v5270 = vsel %vm1397, %v5265, %v5269
        %v5272 = vshrl.u32 %v4929, 16
        %v5274 = vrot.slane %v5272, 4
        %v5275 = vshll.u32 %v4929, 16
        %v5277 = vrot.slane %v5275, 5
        %v5278 = vor.u32 %v5274, %v5277
        %v5279 = vrot.slane %v5278, 4
        %v5281 = vshll.u32 %v4930, 16
        %v5283 = vrot.slane %v5281, 5
        %v5284 = vsel %vm1397, %v5279, %v5283
        %v5285 = vshrl.u32 %v4930, 16
        %v5287 = vrot.slane %v5285, 4
        %v5288 = vor.u32 %v5287, %v5283
        %v5289 = vrot.slane %v5288, 4
        %v5291 = vshll.u32 %v4931, 16
        %v5293 = vrot.slane %v5291, 5
        %v5294 = vsel %vm1397, %v5289, %v5293
        %v5296 = vshrl.u32 %v4932, 16
        %v5298 = vrot.slane %v5296, 4
        %v5299 = vshll.u32 %v4932, 16
        %v5301 = vrot.slane %v5299, 5
        %v5302 = vor.u32 %v5298, %v5301
        %v5303 = vrot.slane %v5302, 4
        %v5305 = vshll.u32 %v4933, 16
        %v5307 = vrot.slane %v5305, 5
        %v5308 = vsel %vm1397, %v5303, %v5307
        %v5309 = vshrl.u32 %v4933, 16
        %v5311 = vrot.slane %v5309, 4
        %v5312 = vor.u32 %v5311, %v5307
        %v5313 = vrot.slane %v5312, 4
        %v5315 = vshll.u32 %v4934, 16
        %v5317 = vrot.slane %v5315, 5
        %v5318 = vsel %vm1397, %v5313, %v5317
        %s5319 = scalar_lea.vmem [#allocation6], 448
        %v5320 = vld [vmem:[%s5319] sm:$0xf]
        %v5321 = vld [vmem:[%s5319 + $0x4] sm:$0xf]
        %v5322 = vld [vmem:[%s5319 + $0x8] sm:$0xf]
        %v5323 = vld [vmem:[%s5319 + $0xc] sm:$0xf]
        %v5324 = vld [vmem:[%s5319 + $0x10] sm:$0xf]
        %v5325 = vld [vmem:[%s5319 + $0x14] sm:$0xf]
        %v5326 = vld [vmem:[%s5319 + $0x18] sm:$0xf]
        %v5327 = vld [vmem:[%s5319 + $0x1c] sm:$0xf]
        %v5328 = vld [vmem:[%s5319 + $0x20] sm:$0xf]
        %v5329 = vld [vmem:[%s5319 + $0x24] sm:$0xf]
        %v5330 = vld [vmem:[%s5319 + $0x28] sm:$0xf]
        %v5331 = vld [vmem:[%s5319 + $0x2c] sm:$0xf]
        %v5332 = vld [vmem:[%s5319 + $0x30] sm:$0xf]
        %v5333 = vld [vmem:[%s5319 + $0x34] sm:$0xf]
        %v5334 = vld [vmem:[%s5319 + $0x38] sm:$0xf]
        %v5335 = vld [vmem:[%s5319 + $0x3c] sm:$0xf]
        %v5336 = vunpack.c.l.b16 %v4948
        %v5337 = vunpack.c.l.b16 %v4958
        %v5338 = vunpack.c.l.b16 %v4972
        %v5339 = vunpack.c.l.b16 %v4982
        %v5340 = vunpack.c.l.b16 %v4996
        %v5341 = vunpack.c.l.b16 %v5006
        %v5342 = vunpack.c.l.b16 %v5020
        %v5343 = vunpack.c.l.b16 %v5030
        %v5344 = vunpack.c.l.b16 %v5044
        %v5345 = vunpack.c.l.b16 %v5054
        %v5346 = vunpack.c.l.b16 %v5068
        %v5347 = vunpack.c.l.b16 %v5078
        %v5348 = vunpack.c.l.b16 %v5092
        %v5349 = vunpack.c.l.b16 %v5102
        %v5350 = vunpack.c.l.b16 %v5116
        %v5351 = vunpack.c.l.b16 %v5126
        %v5352 = vunpack.c.l.b16 %v5140
        %v5353 = vunpack.c.l.b16 %v5150
        %v5354 = vunpack.c.l.b16 %v5164
        %v5355 = vunpack.c.l.b16 %v5174
        %v5356 = vunpack.c.l.b16 %v5188
        %v5357 = vunpack.c.l.b16 %v5198
        %v5358 = vunpack.c.l.b16 %v5212
        %v5359 = vunpack.c.l.b16 %v5222
        %v5360 = vunpack.c.l.b16 %v5236
        %v5361 = vunpack.c.l.b16 %v5246
        %v5362 = vunpack.c.l.b16 %v5260
        %v5363 = vunpack.c.l.b16 %v5270
        %v5364 = vunpack.c.l.b16 %v5284
        %v5365 = vunpack.c.l.b16 %v5294
        %v5366 = vunpack.c.l.b16 %v5308
        %v5367 = vunpack.c.l.b16 %v5318
        %v5368 = vpack.c.b16 %v5337, %v5336
        %v5369 = vpack.c.b16 %v5339, %v5338
        %v5370 = vpack.c.b16 %v5341, %v5340
        %v5371 = vpack.c.b16 %v5343, %v5342
        %v5372 = vpack.c.b16 %v5345, %v5344
        %v5373 = vpack.c.b16 %v5347, %v5346
        %v5374 = vpack.c.b16 %v5349, %v5348
        %v5375 = vpack.c.b16 %v5351, %v5350
        %v5376 = vpack.c.b16 %v5353, %v5352
        %v5377 = vpack.c.b16 %v5355, %v5354
        %v5378 = vpack.c.b16 %v5357, %v5356
        %v5379 = vpack.c.b16 %v5359, %v5358
        %v5380 = vpack.c.b16 %v5361, %v5360
        %v5381 = vpack.c.b16 %v5363, %v5362
        %v5382 = vpack.c.b16 %v5365, %v5364
        %v5383 = vpack.c.b16 %v5367, %v5366
        %v5416 = vunpack.c.l.b16 %v5320
        %v5417 = vunpack.c.l.b16 %v5321
        %v5418 = vunpack.c.l.b16 %v5322
        %v5419 = vunpack.c.l.b16 %v5323
        %v5420 = vunpack.c.l.b16 %v5324
        %v5421 = vunpack.c.l.b16 %v5325
        %v5422 = vunpack.c.l.b16 %v5326
        %v5423 = vunpack.c.l.b16 %v5327
        %v5424 = vunpack.c.l.b16 %v5328
        %v5425 = vunpack.c.l.b16 %v5329
        %v5426 = vunpack.c.l.b16 %v5330
        %v5427 = vunpack.c.l.b16 %v5331
        %v5428 = vunpack.c.l.b16 %v5332
        %v5429 = vunpack.c.l.b16 %v5333
        %v5430 = vunpack.c.l.b16 %v5334
        %v5431 = vunpack.c.l.b16 %v5335
        %v5432 = vpack.c.b16 %v5417, %v5416
        %v5433 = vpack.c.b16 %v5419, %v5418
        %v5434 = vpack.c.b16 %v5421, %v5420
        %v5435 = vpack.c.b16 %v5423, %v5422
        %v5436 = vpack.c.b16 %v5425, %v5424
        %v5437 = vpack.c.b16 %v5427, %v5426
        %v5438 = vpack.c.b16 %v5429, %v5428
        %v5439 = vpack.c.b16 %v5431, %v5430
        %5448 = vmatprep.subr.bf16.mxu0 0
        %5449 = vmatpush1.bf16.msra.mxu0 %v5432
        %5450 = vmatprep.subr.bf16.mxu0 0
        %5451 = vmatpush1.bf16.msra.mxu0 %v5433
        %5452 = vmatprep.subr.bf16.mxu0 0
        %5453 = vmatpush1.bf16.msra.mxu0 %v5434
        %5454 = vmatprep.subr.bf16.mxu0 0
        %5455 = vmatpush1.bf16.msra.mxu0 %v5435
        %5456 = vmatprep.subr.bf16.mxu0 0
        %5457 = vmatpush1.bf16.msra.mxu0 %v5436
        %5458 = vmatprep.subr.bf16.mxu0 0
        %5459 = vmatpush1.bf16.msra.mxu0 %v5437
        %5460 = vmatprep.subr.bf16.mxu0 0
        %5461 = vmatpush1.bf16.msra.mxu0 %v5438
        %5462 = vmatprep.subr.bf16.mxu0 0
        %5463 = vmatpush1.bf16.msra.mxu0 %v5439
        %5464 = vmatprep.subr.bf16.mxu0 0
        %5465 = vmatpush1.bf16.msra.mxu0 0
        %5466 = vmatprep.subr.bf16.mxu0 0
        %5467 = vmatpush1.bf16.msra.mxu0 0
        %5468 = vmatprep.subr.bf16.mxu0 0
        %5469 = vmatpush1.bf16.msra.mxu0 0
        %5470 = vmatprep.subr.bf16.mxu0 0
        %5471 = vmatpush1.bf16.msra.mxu0 0
        %5472 = vmatprep.subr.bf16.mxu0 0
        %5473 = vmatpush1.bf16.msra.mxu0 0
        %5474 = vmatprep.subr.bf16.mxu0 0
        %5475 = vmatpush1.bf16.msra.mxu0 0
        %5476 = vmatprep.subr.bf16.mxu0 0
        %5477 = vmatpush1.bf16.msra.mxu0 0
        %5478 = vmatprep.subr.bf16.mxu0 0
        %5479 = vmatpush1.bf16.msra.mxu0 0
        %5480 = vmatprep.mubr.bf16.mxu0 0
        %5481 = vmatmul.mubr.bf16.gmra.mrb[0].mxu0 %v5368
        %v5482 = vpop.f32.mrb[0].mxu0
        %v5483 = vadd.f32 0.0, %v5482
        %v5484 = vpop.f32.mrb[0].mxu0
        %v5485 = vpop.f32.mrb[0].mxu0
        %v5486 = vadd.f32 0.0, %v5485
        %v5487 = vpop.f32.mrb[0].mxu0
        %5488 = vmatprep.mubr.bf16.mxu0 0
        %5489 = vmatmul.mubr.bf16.gmra.mrb[0].mxu0 %v5369
        %v5490 = vpop.f32.mrb[0].mxu0
        %v5491 = vadd.f32 0.0, %v5490
        %v5492 = vpop.f32.mrb[0].mxu0
        %v5493 = vpop.f32.mrb[0].mxu0
        %v5494 = vadd.f32 0.0, %v5493
        %v5495 = vpop.f32.mrb[0].mxu0
        %5496 = vmatprep.mubr.bf16.mxu0 0
        %5497 = vmatmul.mubr.bf16.gmra.mrb[0].mxu0 %v5370
        %v5498 = vpop.f32.mrb[0].mxu0
        %v5499 = vadd.f32 0.0, %v5498
        %v5500 = vpop.f32.mrb[0].mxu0
        %v5501 = vpop.f32.mrb[0].mxu0
        %v5502 = vadd.f32 0.0, %v5501
        %v5503 = vpop.f32.mrb[0].mxu0
        %5504 = vmatprep.mubr.bf16.mxu0 0
        %5505 = vmatmul.mubr.bf16.gmra.mrb[0].mxu0 %v5371
        %v5506 = vpop.f32.mrb[0].mxu0
        %v5507 = vadd.f32 0.0, %v5506
        %v5508 = vpop.f32.mrb[0].mxu0
        %v5509 = vpop.f32.mrb[0].mxu0
        %v5510 = vadd.f32 0.0, %v5509
        %v5511 = vpop.f32.mrb[0].mxu0
        %5512 = vmatprep.mubr.bf16.mxu0 0
        %5513 = vmatmul.mubr.bf16.gmra.mrb[0].mxu0 %v5372
        %v5514 = vpop.f32.mrb[0].mxu0
        %v5515 = vadd.f32 0.0, %v5514
        %v5516 = vpop.f32.mrb[0].mxu0
        %v5517 = vpop.f32.mrb[0].mxu0
        %v5518 = vadd.f32 0.0, %v5517
        %v5519 = vpop.f32.mrb[0].mxu0
        %5520 = vmatprep.mubr.bf16.mxu0 0
        %5521 = vmatmul.mubr.bf16.gmra.mrb[0].mxu0 %v5373
        %v5522 = vpop.f32.mrb[0].mxu0
        %v5523 = vadd.f32 0.0, %v5522
        %v5524 = vpop.f32.mrb[0].mxu0
        %v5525 = vpop.f32.mrb[0].mxu0
        %v5526 = vadd.f32 0.0, %v5525
        %v5527 = vpop.f32.mrb[0].mxu0
        %5528 = vmatprep.mubr.bf16.mxu0 0
        %5529 = vmatmul.mubr.bf16.gmra.mrb[0].mxu0 %v5374
        %v5530 = vpop.f32.mrb[0].mxu0
        %v5531 = vadd.f32 0.0, %v5530
        %v5532 = vpop.f32.mrb[0].mxu0
        %v5533 = vpop.f32.mrb[0].mxu0
        %v5534 = vadd.f32 0.0, %v5533
        %v5535 = vpop.f32.mrb[0].mxu0
        %5536 = vmatprep.mubr.bf16.mxu0 0
        %5537 = vmatmul.mubr.bf16.gmra.mrb[0].mxu0 %v5375
        %v5538 = vpop.f32.mrb[0].mxu0
        %v5539 = vadd.f32 0.0, %v5538
        %v5540 = vpop.f32.mrb[0].mxu0
        %v5541 = vpop.f32.mrb[0].mxu0
        %v5542 = vadd.f32 0.0, %v5541
        %v5543 = vpop.f32.mrb[0].mxu0
        %5544 = vmatprep.mubr.bf16.mxu0 0
        %5545 = vmatmul.mubr.bf16.gmra.mrb[0].mxu0 %v5376
        %v5546 = vpop.f32.mrb[0].mxu0
        %v5547 = vadd.f32 0.0, %v5546
        %v5548 = vpop.f32.mrb[0].mxu0
        %v5549 = vpop.f32.mrb[0].mxu0
        %v5550 = vadd.f32 0.0, %v5549
        %v5551 = vpop.f32.mrb[0].mxu0
        %5552 = vmatprep.mubr.bf16.mxu0 0
        %5553 = vmatmul.mubr.bf16.gmra.mrb[0].mxu0 %v5377
        %v5554 = vpop.f32.mrb[0].mxu0
        %v5555 = vadd.f32 0.0, %v5554
        %v5556 = vpop.f32.mrb[0].mxu0
        %v5557 = vpop.f32.mrb[0].mxu0
        %v5558 = vadd.f32 0.0, %v5557
        %v5559 = vpop.f32.mrb[0].mxu0
        %5560 = vmatprep.mubr.bf16.mxu0 0
        %5561 = vmatmul.mubr.bf16.gmra.mrb[0].mxu0 %v5378
        %v5562 = vpop.f32.mrb[0].mxu0
        %v5563 = vadd.f32 0.0, %v5562
        %v5564 = vpop.f32.mrb[0].mxu0
        %v5565 = vpop.f32.mrb[0].mxu0
        %v5566 = vadd.f32 0.0, %v5565
        %v5567 = vpop.f32.mrb[0].mxu0
        %5568 = vmatprep.mubr.bf16.mxu0 0
        %5569 = vmatmul.mubr.bf16.gmra.mrb[0].mxu0 %v5379
        %v5570 = vpop.f32.mrb[0].mxu0
        %v5571 = vadd.f32 0.0, %v5570
        %v5572 = vpop.f32.mrb[0].mxu0
        %v5573 = vpop.f32.mrb[0].mxu0
        %v5574 = vadd.f32 0.0, %v5573
        %v5575 = vpop.f32.mrb[0].mxu0
        %5576 = vmatprep.mubr.bf16.mxu0 0
        %5577 = vmatmul.mubr.bf16.gmra.mrb[0].mxu0 %v5380
        %v5578 = vpop.f32.mrb[0].mxu0
        %v5579 = vadd.f32 0.0, %v5578
        %v5580 = vpop.f32.mrb[0].mxu0
        %v5581 = vpop.f32.mrb[0].mxu0
        %v5582 = vadd.f32 0.0, %v5581
        %v5583 = vpop.f32.mrb[0].mxu0
        %5584 = vmatprep.mubr.bf16.mxu0 0
        %5585 = vmatmul.mubr.bf16.gmra.mrb[0].mxu0 %v5381
        %v5586 = vpop.f32.mrb[0].mxu0
        %v5587 = vadd.f32 0.0, %v5586
        %v5588 = vpop.f32.mrb[0].mxu0
        %v5589 = vpop.f32.mrb[0].mxu0
        %v5590 = vadd.f32 0.0, %v5589
        %v5591 = vpop.f32.mrb[0].mxu0
        %5592 = vmatprep.mubr.bf16.mxu0 0
        %5593 = vmatmul.mubr.bf16.gmra.mrb[0].mxu0 %v5382
        %v5594 = vpop.f32.mrb[0].mxu0
        %v5595 = vadd.f32 0.0, %v5594
        %v5596 = vpop.f32.mrb[0].mxu0
        %v5597 = vpop.f32.mrb[0].mxu0
        %v5598 = vadd.f32 0.0, %v5597
        %v5599 = vpop.f32.mrb[0].mxu0
        %5600 = vmatprep.mubr.bf16.mxu0 0
        %5601 = vmatmul.mubr.bf16.gmra.mrb[0].mxu0 %v5383
        %v5602 = vpop.f32.mrb[0].mxu0
        %v5603 = vadd.f32 0.0, %v5602
        %v5604 = vpop.f32.mrb[0].mxu0
        %v5605 = vpop.f32.mrb[0].mxu0
        %v5606 = vadd.f32 0.0, %v5605
        %v5607 = vpop.f32.mrb[0].mxu0
        %5608 = vdwg.mxu0
        %v5609 = vadd.f32 %v4855, %v5483
        %v5610 = vadd.f32 %v4856, %v5486
        %v5611 = vadd.f32 %v4857, %v5491
        %v5612 = vadd.f32 %v4858, %v5494
        %v5613 = vadd.f32 %v4859, %v5499
        %v5614 = vadd.f32 %v4860, %v5502
        %v5615 = vadd.f32 %v4861, %v5507
        %v5616 = vadd.f32 %v4862, %v5510
        %v5617 = vadd.f32 %v4863, %v5515
        %v5618 = vadd.f32 %v4864, %v5518
        %v5619 = vadd.f32 %v4865, %v5523
        %v5620 = vadd.f32 %v4866, %v5526
        %v5621 = vadd.f32 %v4867, %v5531
        %v5622 = vadd.f32 %v4868, %v5534
        %v5623 = vadd.f32 %v4869, %v5539
        %v5624 = vadd.f32 %v4870, %v5542
        %v5625 = vadd.f32 %v4871, %v5547
        %v5626 = vadd.f32 %v4872, %v5550
        %v5627 = vadd.f32 %v4873, %v5555
        %v5628 = vadd.f32 %v4874, %v5558
        %v5629 = vadd.f32 %v4875, %v5563
        %v5630 = vadd.f32 %v4876, %v5566
        %v5631 = vadd.f32 %v4877, %v5571
        %v5632 = vadd.f32 %v4878, %v5574
        %v5633 = vadd.f32 %v4879, %v5579
        %v5634 = vadd.f32 %v4880, %v5582
        %v5635 = vadd.f32 %v4881, %v5587
        %v5636 = vadd.f32 %v4882, %v5590
        %v5637 = vadd.f32 %v4883, %v5595
        %v5638 = vadd.f32 %v4884, %v5598
        %v5639 = vadd.f32 %v4885, %v5603
        %v5640 = vadd.f32 %v4886, %v5606
        %v5641 = vld [vmem:[%s4500] sm:$0xe]
        %v5642 = vld [vmem:[%s4500 + $0xc] sm:$0xe]
        %v5643 = vld [vmem:[%s4500 + $0x18] sm:$0xe]
        %v5644 = vld [vmem:[%s4500 + $0x24] sm:$0xe]
        %v5645 = vld [vmem:[%s4500 + $0x30] sm:$0xe]
        %v5646 = vld [vmem:[%s4500 + $0x3c] sm:$0xe]
        %v5647 = vld [vmem:[%s4500 + $0x48] sm:$0xe]
        %v5648 = vld [vmem:[%s4500 + $0x54] sm:$0xe]
        %v5649 = vld [vmem:[%s4500 + $0x60] sm:$0xe]
        %v5650 = vld [vmem:[%s4500 + $0x6c] sm:$0xe]
        %v5651 = vld [vmem:[%s4500 + $0x78] sm:$0xe]
        %v5652 = vld [vmem:[%s4500 + $0x84] sm:$0xe]
        %v5653 = vld [vmem:[%s4500 + $0x90] sm:$0xe]
        %v5654 = vld [vmem:[%s4500 + $0x9c] sm:$0xe]
        %v5655 = vld [vmem:[%s4500 + $0xa8] sm:$0xe]
        %v5656 = vld [vmem:[%s4500 + $0xb4] sm:$0xe]
        %v5705 = vrot.slane %v5641, 5
        %v5706 = vrot.slane %v5705, 4
        %v5707 = vrot.slane %v4888, 5
        %v5708 = vsel %vm2427, %v5706, %v5707
        %v5709 = vrot.slane %v5707, 4
        %v5710 = vrot.slane %v4889, 5
        %v5711 = vsel %vm2427, %v5709, %v5710
        %v5712 = vrot.slane %v5642, 5
        %v5713 = vrot.slane %v5712, 4
        %v5714 = vrot.slane %v4891, 5
        %v5715 = vsel %vm2427, %v5713, %v5714
        %v5716 = vrot.slane %v5714, 4
        %v5717 = vrot.slane %v4892, 5
        %v5718 = vsel %vm2427, %v5716, %v5717
        %v5719 = vrot.slane %v5643, 5
        %v5720 = vrot.slane %v5719, 4
        %v5721 = vrot.slane %v4894, 5
        %v5722 = vsel %vm2427, %v5720, %v5721
        %v5723 = vrot.slane %v5721, 4
        %v5724 = vrot.slane %v4895, 5
        %v5725 = vsel %vm2427, %v5723, %v5724
        %v5726 = vrot.slane %v5644, 5
        %v5727 = vrot.slane %v5726, 4
        %v5728 = vrot.slane %v4897, 5
        %v5729 = vsel %vm2427, %v5727, %v5728
        %v5730 = vrot.slane %v5728, 4
        %v5731 = vrot.slane %v4898, 5
        %v5732 = vsel %vm2427, %v5730, %v5731
        %v5733 = vrot.slane %v5645, 5
        %v5734 = vrot.slane %v5733, 4
        %v5735 = vrot.slane %v4900, 5
        %v5736 = vsel %vm2427, %v5734, %v5735
        %v5737 = vrot.slane %v5735, 4
        %v5738 = vrot.slane %v4901, 5
        %v5739 = vsel %vm2427, %v5737, %v5738
        %v5740 = vrot.slane %v5646, 5
        %v5741 = vrot.slane %v5740, 4
        %v5742 = vrot.slane %v4903, 5
        %v5743 = vsel %vm2427, %v5741, %v5742
        %v5744 = vrot.slane %v5742, 4
        %v5745 = vrot.slane %v4904, 5
        %v5746 = vsel %vm2427, %v5744, %v5745
        %v5747 = vrot.slane %v5647, 5
        %v5748 = vrot.slane %v5747, 4
        %v5749 = vrot.slane %v4906, 5
        %v5750 = vsel %vm2427, %v5748, %v5749
        %v5751 = vrot.slane %v5749, 4
        %v5752 = vrot.slane %v4907, 5
        %v5753 = vsel %vm2427, %v5751, %v5752
        %v5754 = vrot.slane %v5648, 5
        %v5755 = vrot.slane %v5754, 4
        %v5756 = vrot.slane %v4909, 5
        %v5757 = vsel %vm2427, %v5755, %v5756
        %v5758 = vrot.slane %v5756, 4
        %v5759 = vrot.slane %v4910, 5
        %v5760 = vsel %vm2427, %v5758, %v5759
        %v5761 = vrot.slane %v5649, 5
        %v5762 = vrot.slane %v5761, 4
        %v5763 = vrot.slane %v4912, 5
        %v5764 = vsel %vm2427, %v5762, %v5763
        %v5765 = vrot.slane %v5763, 4
        %v5766 = vrot.slane %v4913, 5
        %v5767 = vsel %vm2427, %v5765, %v5766
        %v5768 = vrot.slane %v5650, 5
        %v5769 = vrot.slane %v5768, 4
        %v5770 = vrot.slane %v4915, 5
        %v5771 = vsel %vm2427, %v5769, %v5770
        %v5772 = vrot.slane %v5770, 4
        %v5773 = vrot.slane %v4916, 5
        %v5774 = vsel %vm2427, %v5772, %v5773
        %v5775 = vrot.slane %v5651, 5
        %v5776 = vrot.slane %v5775, 4
        %v5777 = vrot.slane %v4918, 5
        %v5778 = vsel %vm2427, %v5776, %v5777
        %v5779 = vrot.slane %v5777, 4
        %v5780 = vrot.slane %v4919, 5
        %v5781 = vsel %vm2427, %v5779, %v5780
        %v5782 = vrot.slane %v5652, 5
        %v5783 = vrot.slane %v5782, 4
        %v5784 = vrot.slane %v4921, 5
        %v5785 = vsel %vm2427, %v5783, %v5784
        %v5786 = vrot.slane %v5784, 4
        %v5787 = vrot.slane %v4922, 5
        %v5788 = vsel %vm2427, %v5786, %v5787
        %v5789 = vrot.slane %v5653, 5
        %v5790 = vrot.slane %v5789, 4
        %v5791 = vrot.slane %v4924, 5
        %v5792 = vsel %vm2427, %v5790, %v5791
        %v5793 = vrot.slane %v5791, 4
        %v5794 = vrot.slane %v4925, 5
        %v5795 = vsel %vm2427, %v5793, %v5794
        %v5796 = vrot.slane %v5654, 5
        %v5797 = vrot.slane %v5796, 4
        %v5798 = vrot.slane %v4927, 5
        %v5799 = vsel %vm2427, %v5797, %v5798
        %v5800 = vrot.slane %v5798, 4
        %v5801 = vrot.slane %v4928, 5
        %v5802 = vsel %vm2427, %v5800, %v5801
        %v5803 = vrot.slane %v5655, 5
        %v5804 = vrot.slane %v5803, 4
        %v5805 = vrot.slane %v4930, 5
        %v5806 = vsel %vm2427, %v5804, %v5805
        %v5807 = vrot.slane %v5805, 4
        %v5808 = vrot.slane %v4931, 5
        %v5809 = vsel %vm2427, %v5807, %v5808
        %v5810 = vrot.slane %v5656, 5
        %v5811 = vrot.slane %v5810, 4
        %v5812 = vrot.slane %v4933, 5
        %v5813 = vsel %vm2427, %v5811, %v5812
        %v5814 = vrot.slane %v5812, 4
        %v5815 = vrot.slane %v4934, 5
        %v5816 = vsel %vm2427, %v5814, %v5815
        %s5817 = scalar_lea.vmem [#allocation6], 512
        %v5818 = vld [vmem:[%s5817] sm:$0xf]
        %v5819 = vld [vmem:[%s5817 + $0x4] sm:$0xf]
        %v5820 = vld [vmem:[%s5817 + $0x8] sm:$0xf]
        %v5821 = vld [vmem:[%s5817 + $0xc] sm:$0xf]
        %v5822 = vld [vmem:[%s5817 + $0x10] sm:$0xf]
        %v5823 = vld [vmem:[%s5817 + $0x14] sm:$0xf]
        %v5824 = vld [vmem:[%s5817 + $0x18] sm:$0xf]
        %v5825 = vld [vmem:[%s5817 + $0x1c] sm:$0xf]
        %v5826 = vld [vmem:[%s5817 + $0x20] sm:$0xf]
        %v5827 = vld [vmem:[%s5817 + $0x24] sm:$0xf]
        %v5828 = vld [vmem:[%s5817 + $0x28] sm:$0xf]
        %v5829 = vld [vmem:[%s5817 + $0x2c] sm:$0xf]
        %v5830 = vld [vmem:[%s5817 + $0x30] sm:$0xf]
        %v5831 = vld [vmem:[%s5817 + $0x34] sm:$0xf]
        %v5832 = vld [vmem:[%s5817 + $0x38] sm:$0xf]
        %v5833 = vld [vmem:[%s5817 + $0x3c] sm:$0xf]
        %v5834 = vunpack.c.l.b16 %v5708
        %v5835 = vunpack.c.l.b16 %v5711
        %v5836 = vunpack.c.l.b16 %v5715
        %v5837 = vunpack.c.l.b16 %v5718
        %v5838 = vunpack.c.l.b16 %v5722
        %v5839 = vunpack.c.l.b16 %v5725
        %v5840 = vunpack.c.l.b16 %v5729
        %v5841 = vunpack.c.l.b16 %v5732
        %v5842 = vunpack.c.l.b16 %v5736
        %v5843 = vunpack.c.l.b16 %v5739
        %v5844 = vunpack.c.l.b16 %v5743
        %v5845 = vunpack.c.l.b16 %v5746
        %v5846 = vunpack.c.l.b16 %v5750
        %v5847 = vunpack.c.l.b16 %v5753
        %v5848 = vunpack.c.l.b16 %v5757
        %v5849 = vunpack.c.l.b16 %v5760
        %v5850 = vunpack.c.l.b16 %v5764
        %v5851 = vunpack.c.l.b16 %v5767
        %v5852 = vunpack.c.l.b16 %v5771
        %v5853 = vunpack.c.l.b16 %v5774
        %v5854 = vunpack.c.l.b16 %v5778
        %v5855 = vunpack.c.l.b16 %v5781
        %v5856 = vunpack.c.l.b16 %v5785
        %v5857 = vunpack.c.l.b16 %v5788
        %v5858 = vunpack.c.l.b16 %v5792
        %v5859 = vunpack.c.l.b16 %v5795
        %v5860 = vunpack.c.l.b16 %v5799
        %v5861 = vunpack.c.l.b16 %v5802
        %v5862 = vunpack.c.l.b16 %v5806
        %v5863 = vunpack.c.l.b16 %v5809
        %v5864 = vunpack.c.l.b16 %v5813
        %v5865 = vunpack.c.l.b16 %v5816
        %v5866 = vpack.c.b16 %v5835, %v5834
        %v5867 = vpack.c.b16 %v5837, %v5836
        %v5868 = vpack.c.b16 %v5839, %v5838
        %v5869 = vpack.c.b16 %v5841, %v5840
        %v5870 = vpack.c.b16 %v5843, %v5842
        %v5871 = vpack.c.b16 %v5845, %v5844
        %v5872 = vpack.c.b16 %v5847, %v5846
        %v5873 = vpack.c.b16 %v5849, %v5848
        %v5874 = vpack.c.b16 %v5851, %v5850
        %v5875 = vpack.c.b16 %v5853, %v5852
        %v5876 = vpack.c.b16 %v5855, %v5854
        %v5877 = vpack.c.b16 %v5857, %v5856
        %v5878 = vpack.c.b16 %v5859, %v5858
        %v5879 = vpack.c.b16 %v5861, %v5860
        %v5880 = vpack.c.b16 %v5863, %v5862
        %v5881 = vpack.c.b16 %v5865, %v5864
        %v5914 = vunpack.c.l.b16 %v5818
        %v5915 = vunpack.c.l.b16 %v5819
        %v5916 = vunpack.c.l.b16 %v5820
        %v5917 = vunpack.c.l.b16 %v5821
        %v5918 = vunpack.c.l.b16 %v5822
        %v5919 = vunpack.c.l.b16 %v5823
        %v5920 = vunpack.c.l.b16 %v5824
        %v5921 = vunpack.c.l.b16 %v5825
        %v5922 = vunpack.c.l.b16 %v5826
        %v5923 = vunpack.c.l.b16 %v5827
        %v5924 = vunpack.c.l.b16 %v5828
        %v5925 = vunpack.c.l.b16 %v5829
        %v5926 = vunpack.c.l.b16 %v5830
        %v5927 = vunpack.c.l.b16 %v5831
        %v5928 = vunpack.c.l.b16 %v5832
        %v5929 = vunpack.c.l.b16 %v5833
        %v5930 = vpack.c.b16 %v5915, %v5914
        %v5931 = vpack.c.b16 %v5917, %v5916
        %v5932 = vpack.c.b16 %v5919, %v5918
        %v5933 = vpack.c.b16 %v5921, %v5920
        %v5934 = vpack.c.b16 %v5923, %v5922
        %v5935 = vpack.c.b16 %v5925, %v5924
        %v5936 = vpack.c.b16 %v5927, %v5926
        %v5937 = vpack.c.b16 %v5929, %v5928
        %5946 = vmatprep.subr.bf16.mxu0 0
        %5947 = vmatpush1.bf16.msra.mxu0 %v5930
        %5948 = vmatprep.subr.bf16.mxu0 0
        %5949 = vmatpush1.bf16.msra.mxu0 %v5931
        %5950 = vmatprep.subr.bf16.mxu0 0
        %5951 = vmatpush1.bf16.msra.mxu0 %v5932
        %5952 = vmatprep.subr.bf16.mxu0 0
        %5953 = vmatpush1.bf16.msra.mxu0 %v5933
        %5954 = vmatprep.subr.bf16.mxu0 0
        %5955 = vmatpush1.bf16.msra.mxu0 %v5934
        %5956 = vmatprep.subr.bf16.mxu0 0
        %5957 = vmatpush1.bf16.msra.mxu0 %v5935
        %5958 = vmatprep.subr.bf16.mxu0 0
        %5959 = vmatpush1.bf16.msra.mxu0 %v5936
        %5960 = vmatprep.subr.bf16.mxu0 0
        %5961 = vmatpush1.bf16.msra.mxu0 %v5937
        %5962 = vmatprep.subr.bf16.mxu0 0
        %5963 = vmatpush1.bf16.msra.mxu0 0
        %5964 = vmatprep.subr.bf16.mxu0 0
        %5965 = vmatpush1.bf16.msra.mxu0 0
        %5966 = vmatprep.subr.bf16.mxu0 0
        %5967 = vmatpush1.bf16.msra.mxu0 0
        %5968 = vmatprep.subr.bf16.mxu0 0
        %5969 = vmatpush1.bf16.msra.mxu0 0
        %5970 = vmatprep.subr.bf16.mxu0 0
        %5971 = vmatpush1.bf16.msra.mxu0 0
        %5972 = vmatprep.subr.bf16.mxu0 0
        %5973 = vmatpush1.bf16.msra.mxu0 0
        %5974 = vmatprep.subr.bf16.mxu0 0
        %5975 = vmatpush1.bf16.msra.mxu0 0
        %5976 = vmatprep.subr.bf16.mxu0 0
        %5977 = vmatpush1.bf16.msra.mxu0 0
        %5978 = vmatprep.mubr.bf16.mxu0 0
        %5979 = vmatmul.mubr.bf16.gmra.mrb[0].mxu0 %v5866
        %v5980 = vpop.f32.mrb[0].mxu0
        %v5981 = vadd.f32 0.0, %v5980
        %v5982 = vpop.f32.mrb[0].mxu0
        %v5983 = vpop.f32.mrb[0].mxu0
        %v5984 = vadd.f32 0.0, %v5983
        %v5985 = vpop.f32.mrb[0].mxu0
        %5986 = vmatprep.mubr.bf16.mxu0 0
        %5987 = vmatmul.mubr.bf16.gmra.mrb[0].mxu0 %v5867
        %v5988 = vpop.f32.mrb[0].mxu0
        %v5989 = vadd.f32 0.0, %v5988
        %v5990 = vpop.f32.mrb[0].mxu0
        %v5991 = vpop.f32.mrb[0].mxu0
        %v5992 = vadd.f32 0.0, %v5991
        %v5993 = vpop.f32.mrb[0].mxu0
        %5994 = vmatprep.mubr.bf16.mxu0 0
        %5995 = vmatmul.mubr.bf16.gmra.mrb[0].mxu0 %v5868
        %v5996 = vpop.f32.mrb[0].mxu0
        %v5997 = vadd.f32 0.0, %v5996
        %v5998 = vpop.f32.mrb[0].mxu0
        %v5999 = vpop.f32.mrb[0].mxu0
        %v6000 = vadd.f32 0.0, %v5999
        %v6001 = vpop.f32.mrb[0].mxu0
        %6002 = vmatprep.mubr.bf16.mxu0 0
        %6003 = vmatmul.mubr.bf16.gmra.mrb[0].mxu0 %v5869
        %v6004 = vpop.f32.mrb[0].mxu0
        %v6005 = vadd.f32 0.0, %v6004
        %v6006 = vpop.f32.mrb[0].mxu0
        %v6007 = vpop.f32.mrb[0].mxu0
        %v6008 = vadd.f32 0.0, %v6007
        %v6009 = vpop.f32.mrb[0].mxu0
        %6010 = vmatprep.mubr.bf16.mxu0 0
        %6011 = vmatmul.mubr.bf16.gmra.mrb[0].mxu0 %v5870
        %v6012 = vpop.f32.mrb[0].mxu0
        %v6013 = vadd.f32 0.0, %v6012
        %v6014 = vpop.f32.mrb[0].mxu0
        %v6015 = vpop.f32.mrb[0].mxu0
        %v6016 = vadd.f32 0.0, %v6015
        %v6017 = vpop.f32.mrb[0].mxu0
        %6018 = vmatprep.mubr.bf16.mxu0 0
        %6019 = vmatmul.mubr.bf16.gmra.mrb[0].mxu0 %v5871
        %v6020 = vpop.f32.mrb[0].mxu0
        %v6021 = vadd.f32 0.0, %v6020
        %v6022 = vpop.f32.mrb[0].mxu0
        %v6023 = vpop.f32.mrb[0].mxu0
        %v6024 = vadd.f32 0.0, %v6023
        %v6025 = vpop.f32.mrb[0].mxu0
        %6026 = vmatprep.mubr.bf16.mxu0 0
        %6027 = vmatmul.mubr.bf16.gmra.mrb[0].mxu0 %v5872
        %v6028 = vpop.f32.mrb[0].mxu0
        %v6029 = vadd.f32 0.0, %v6028
        %v6030 = vpop.f32.mrb[0].mxu0
        %v6031 = vpop.f32.mrb[0].mxu0
        %v6032 = vadd.f32 0.0, %v6031
        %v6033 = vpop.f32.mrb[0].mxu0
        %6034 = vmatprep.mubr.bf16.mxu0 0
        %6035 = vmatmul.mubr.bf16.gmra.mrb[0].mxu0 %v5873
        %v6036 = vpop.f32.mrb[0].mxu0
        %v6037 = vadd.f32 0.0, %v6036
        %v6038 = vpop.f32.mrb[0].mxu0
        %v6039 = vpop.f32.mrb[0].mxu0
        %v6040 = vadd.f32 0.0, %v6039
        %v6041 = vpop.f32.mrb[0].mxu0
        %6042 = vmatprep.mubr.bf16.mxu0 0
        %6043 = vmatmul.mubr.bf16.gmra.mrb[0].mxu0 %v5874
        %v6044 = vpop.f32.mrb[0].mxu0
        %v6045 = vadd.f32 0.0, %v6044
        %v6046 = vpop.f32.mrb[0].mxu0
        %v6047 = vpop.f32.mrb[0].mxu0
        %v6048 = vadd.f32 0.0, %v6047
        %v6049 = vpop.f32.mrb[0].mxu0
        %6050 = vmatprep.mubr.bf16.mxu0 0
        %6051 = vmatmul.mubr.bf16.gmra.mrb[0].mxu0 %v5875
        %v6052 = vpop.f32.mrb[0].mxu0
        %v6053 = vadd.f32 0.0, %v6052
        %v6054 = vpop.f32.mrb[0].mxu0
        %v6055 = vpop.f32.mrb[0].mxu0
        %v6056 = vadd.f32 0.0, %v6055
        %v6057 = vpop.f32.mrb[0].mxu0
        %6058 = vmatprep.mubr.bf16.mxu0 0
        %6059 = vmatmul.mubr.bf16.gmra.mrb[0].mxu0 %v5876
        %v6060 = vpop.f32.mrb[0].mxu0
        %v6061 = vadd.f32 0.0, %v6060
        %v6062 = vpop.f32.mrb[0].mxu0
        %v6063 = vpop.f32.mrb[0].mxu0
        %v6064 = vadd.f32 0.0, %v6063
        %v6065 = vpop.f32.mrb[0].mxu0
        %6066 = vmatprep.mubr.bf16.mxu0 0
        %6067 = vmatmul.mubr.bf16.gmra.mrb[0].mxu0 %v5877
        %v6068 = vpop.f32.mrb[0].mxu0
        %v6069 = vadd.f32 0.0, %v6068
        %v6070 = vpop.f32.mrb[0].mxu0
        %v6071 = vpop.f32.mrb[0].mxu0
        %v6072 = vadd.f32 0.0, %v6071
        %v6073 = vpop.f32.mrb[0].mxu0
        %6074 = vmatprep.mubr.bf16.mxu0 0
        %6075 = vmatmul.mubr.bf16.gmra.mrb[0].mxu0 %v5878
        %v6076 = vpop.f32.mrb[0].mxu0
        %v6077 = vadd.f32 0.0, %v6076
        %v6078 = vpop.f32.mrb[0].mxu0
        %v6079 = vpop.f32.mrb[0].mxu0
        %v6080 = vadd.f32 0.0, %v6079
        %v6081 = vpop.f32.mrb[0].mxu0
        %6082 = vmatprep.mubr.bf16.mxu0 0
        %6083 = vmatmul.mubr.bf16.gmra.mrb[0].mxu0 %v5879
        %v6084 = vpop.f32.mrb[0].mxu0
        %v6085 = vadd.f32 0.0, %v6084
        %v6086 = vpop.f32.mrb[0].mxu0
        %v6087 = vpop.f32.mrb[0].mxu0
        %v6088 = vadd.f32 0.0, %v6087
        %v6089 = vpop.f32.mrb[0].mxu0
        %6090 = vmatprep.mubr.bf16.mxu0 0
        %6091 = vmatmul.mubr.bf16.gmra.mrb[0].mxu0 %v5880
        %v6092 = vpop.f32.mrb[0].mxu0
        %v6093 = vadd.f32 0.0, %v6092
        %v6094 = vpop.f32.mrb[0].mxu0
        %v6095 = vpop.f32.mrb[0].mxu0
        %v6096 = vadd.f32 0.0, %v6095
        %v6097 = vpop.f32.mrb[0].mxu0
        %6098 = vmatprep.mubr.bf16.mxu0 0
        %6099 = vmatmul.mubr.bf16.gmra.mrb[0].mxu0 %v5881
        %v6100 = vpop.f32.mrb[0].mxu0
        %v6101 = vadd.f32 0.0, %v6100
        %v6102 = vpop.f32.mrb[0].mxu0
        %v6103 = vpop.f32.mrb[0].mxu0
        %v6104 = vadd.f32 0.0, %v6103
        %v6105 = vpop.f32.mrb[0].mxu0
        %6106 = vdwg.mxu0
        %v6107 = vadd.f32 %v5609, %v5981
        %v6108 = vadd.f32 %v5610, %v5984
        %v6109 = vadd.f32 %v5611, %v5989
        %v6110 = vadd.f32 %v5612, %v5992
        %v6111 = vadd.f32 %v5613, %v5997
        %v6112 = vadd.f32 %v5614, %v6000
        %v6113 = vadd.f32 %v5615, %v6005
        %v6114 = vadd.f32 %v5616, %v6008
        %v6115 = vadd.f32 %v5617, %v6013
        %v6116 = vadd.f32 %v5618, %v6016
        %v6117 = vadd.f32 %v5619, %v6021
        %v6118 = vadd.f32 %v5620, %v6024
        %v6119 = vadd.f32 %v5621, %v6029
        %v6120 = vadd.f32 %v5622, %v6032
        %v6121 = vadd.f32 %v5623, %v6037
        %v6122 = vadd.f32 %v5624, %v6040
        %v6123 = vadd.f32 %v5625, %v6045
        %v6124 = vadd.f32 %v5626, %v6048
        %v6125 = vadd.f32 %v5627, %v6053
        %v6126 = vadd.f32 %v5628, %v6056
        %v6127 = vadd.f32 %v5629, %v6061
        %v6128 = vadd.f32 %v5630, %v6064
        %v6129 = vadd.f32 %v5631, %v6069
        %v6130 = vadd.f32 %v5632, %v6072
        %v6131 = vadd.f32 %v5633, %v6077
        %v6132 = vadd.f32 %v5634, %v6080
        %v6133 = vadd.f32 %v5635, %v6085
        %v6134 = vadd.f32 %v5636, %v6088
        %v6135 = vadd.f32 %v5637, %v6093
        %v6136 = vadd.f32 %v5638, %v6096
        %v6137 = vadd.f32 %v5639, %v6101
        %v6138 = vadd.f32 %v5640, %v6104
        %v6139 = vld [vmem:[%s4] sm:$0x1]
        %v6141 = vlaneseq
        %v6142 = vshrl.u32 %v6141, 7
        %v6143 = vsub.s32 0, %v6142
        %v6144 = vrot.slane %v6139, %v6143
        %v6146 = vadd.f32 %v6107, %v6144
        %v6147 = vadd.f32 %v6108, %v6144
        %v6148 = vadd.f32 %v6109, %v6144
        %v6149 = vadd.f32 %v6110, %v6144
        %v6150 = vadd.f32 %v6111, %v6144
        %v6151 = vadd.f32 %v6112, %v6144
        %v6152 = vadd.f32 %v6113, %v6144
        %v6153 = vadd.f32 %v6114, %v6144
        %v6154 = vadd.f32 %v6115, %v6144
        %v6155 = vadd.f32 %v6116, %v6144
        %v6156 = vadd.f32 %v6117, %v6144
        %v6157 = vadd.f32 %v6118, %v6144
        %v6158 = vadd.f32 %v6119, %v6144
        %v6159 = vadd.f32 %v6120, %v6144
        %v6160 = vadd.f32 %v6121, %v6144
        %v6161 = vadd.f32 %v6122, %v6144
        %v6162 = vadd.f32 %v6123, %v6144
        %v6163 = vadd.f32 %v6124, %v6144
        %v6164 = vadd.f32 %v6125, %v6144
        %v6165 = vadd.f32 %v6126, %v6144
        %v6166 = vadd.f32 %v6127, %v6144
        %v6167 = vadd.f32 %v6128, %v6144
        %v6168 = vadd.f32 %v6129, %v6144
        %v6169 = vadd.f32 %v6130, %v6144
        %v6170 = vadd.f32 %v6131, %v6144
        %v6171 = vadd.f32 %v6132, %v6144
        %v6172 = vadd.f32 %v6133, %v6144
        %v6173 = vadd.f32 %v6134, %v6144
        %v6174 = vadd.f32 %v6135, %v6144
        %v6175 = vadd.f32 %v6136, %v6144
        %v6176 = vadd.f32 %v6137, %v6144
        %v6177 = vadd.f32 %v6138, %v6144
        %v6178 = vmax.f32 %v6146, 0.0
        %v6179 = vmax.f32 %v6147, 0.0
        %v6180 = vmax.f32 %v6148, 0.0
        %v6181 = vmax.f32 %v6149, 0.0
        %v6182 = vmax.f32 %v6150, 0.0
        %v6183 = vmax.f32 %v6151, 0.0
        %v6184 = vmax.f32 %v6152, 0.0
        %v6185 = vmax.f32 %v6153, 0.0
        %v6186 = vmax.f32 %v6154, 0.0
        %v6187 = vmax.f32 %v6155, 0.0
        %v6188 = vmax.f32 %v6156, 0.0
        %v6189 = vmax.f32 %v6157, 0.0
        %v6190 = vmax.f32 %v6158, 0.0
        %v6191 = vmax.f32 %v6159, 0.0
        %v6192 = vmax.f32 %v6160, 0.0
        %v6193 = vmax.f32 %v6161, 0.0
        %v6194 = vmax.f32 %v6162, 0.0
        %v6195 = vmax.f32 %v6163, 0.0
        %v6196 = vmax.f32 %v6164, 0.0
        %v6197 = vmax.f32 %v6165, 0.0
        %v6198 = vmax.f32 %v6166, 0.0
        %v6199 = vmax.f32 %v6167, 0.0
        %v6200 = vmax.f32 %v6168, 0.0
        %v6201 = vmax.f32 %v6169, 0.0
        %v6202 = vmax.f32 %v6170, 0.0
        %v6203 = vmax.f32 %v6171, 0.0
        %v6204 = vmax.f32 %v6172, 0.0
        %v6205 = vmax.f32 %v6173, 0.0
        %v6206 = vmax.f32 %v6174, 0.0
        %v6207 = vmax.f32 %v6175, 0.0
        %v6208 = vmax.f32 %v6176, 0.0
        %v6209 = vmax.f32 %v6177, 0.0
        %v6210 = vpack.c.bf16 %v6179, %v6178
        %v6211 = vpack.c.bf16 %v6181, %v6180
        %v6212 = vpack.c.bf16 %v6183, %v6182
        %v6213 = vpack.c.bf16 %v6185, %v6184
        %v6214 = vpack.c.bf16 %v6187, %v6186
        %v6215 = vpack.c.bf16 %v6189, %v6188
        %v6216 = vpack.c.bf16 %v6191, %v6190
        %v6217 = vpack.c.bf16 %v6193, %v6192
        %v6218 = vpack.c.bf16 %v6195, %v6194
        %v6219 = vpack.c.bf16 %v6197, %v6196
        %v6220 = vpack.c.bf16 %v6199, %v6198
        %v6221 = vpack.c.bf16 %v6201, %v6200
        %v6222 = vpack.c.bf16 %v6203, %v6202
        %v6223 = vpack.c.bf16 %v6205, %v6204
        %v6224 = vpack.c.bf16 %v6207, %v6206
        %v6225 = vpack.c.bf16 %v6209, %v6208
        %v6226 = vld [vmem:[%s5] sm:$0xf]
        %v6227 = vld [vmem:[%s5 + $0x4] sm:$0xf]
        %v6228 = vld [vmem:[%s5 + $0x8] sm:$0xf]
        %v6229 = vld [vmem:[%s5 + $0xc] sm:$0xf]
        %v6230 = vld [vmem:[%s5 + $0x10] sm:$0xf]
        %v6231 = vld [vmem:[%s5 + $0x14] sm:$0xf]
        %v6232 = vld [vmem:[%s5 + $0x18] sm:$0xf]
        %v6233 = vld [vmem:[%s5 + $0x1c] sm:$0xf]
        %v6234 = vld [vmem:[%s5 + $0x20] sm:$0xf]
        %v6235 = vld [vmem:[%s5 + $0x24] sm:$0xf]
        %v6236 = vld [vmem:[%s5 + $0x28] sm:$0xf]
        %v6237 = vld [vmem:[%s5 + $0x2c] sm:$0xf]
        %v6238 = vld [vmem:[%s5 + $0x30] sm:$0xf]
        %v6239 = vld [vmem:[%s5 + $0x34] sm:$0xf]
        %v6240 = vld [vmem:[%s5 + $0x38] sm:$0xf]
        %v6241 = vld [vmem:[%s5 + $0x3c] sm:$0xf]
        %v6242 = vld [vmem:[%s6] sm:$0x1]
        %v6244 = vlaneseq
        %v6245 = vshrl.u32 %v6244, 7
        %v6246 = vsub.s32 0, %v6245
        %v6247 = vrot.slane %v6242, %v6246
        %v6265 = vunpack.c.l.b16 %v6226
        %v6266 = vunpack.c.l.b16 %v6227
        %v6267 = vunpack.c.l.b16 %v6228
        %v6268 = vunpack.c.l.b16 %v6229
        %v6269 = vunpack.c.l.b16 %v6230
        %v6270 = vunpack.c.l.b16 %v6231
        %v6271 = vunpack.c.l.b16 %v6232
        %v6272 = vunpack.c.l.b16 %v6233
        %v6273 = vunpack.c.l.b16 %v6234
        %v6274 = vunpack.c.l.b16 %v6235
        %v6275 = vunpack.c.l.b16 %v6236
        %v6276 = vunpack.c.l.b16 %v6237
        %v6277 = vunpack.c.l.b16 %v6238
        %v6278 = vunpack.c.l.b16 %v6239
        %v6279 = vunpack.c.l.b16 %v6240
        %v6280 = vunpack.c.l.b16 %v6241
        %v6281 = vpack.c.b16 %v6266, %v6265
        %v6282 = vpack.c.b16 %v6268, %v6267
        %v6283 = vpack.c.b16 %v6270, %v6269
        %v6284 = vpack.c.b16 %v6272, %v6271
        %v6285 = vpack.c.b16 %v6274, %v6273
        %v6286 = vpack.c.b16 %v6276, %v6275
        %v6287 = vpack.c.b16 %v6278, %v6277
        %v6288 = vpack.c.b16 %v6280, %v6279
        %6297 = vmatprep.subr.bf16.mxu0 0
        %6298 = vmatpush1.bf16.msra.mxu0 %v6281
        %6299 = vmatprep.subr.bf16.mxu0 0
        %6300 = vmatpush1.bf16.msra.mxu0 %v6282
        %6301 = vmatprep.subr.bf16.mxu0 0
        %6302 = vmatpush1.bf16.msra.mxu0 %v6283
        %6303 = vmatprep.subr.bf16.mxu0 0
        %6304 = vmatpush1.bf16.msra.mxu0 %v6284
        %6305 = vmatprep.subr.bf16.mxu0 0
        %6306 = vmatpush1.bf16.msra.mxu0 %v6285
        %6307 = vmatprep.subr.bf16.mxu0 0
        %6308 = vmatpush1.bf16.msra.mxu0 %v6286
        %6309 = vmatprep.subr.bf16.mxu0 0
        %6310 = vmatpush1.bf16.msra.mxu0 %v6287
        %6311 = vmatprep.subr.bf16.mxu0 0
        %6312 = vmatpush1.bf16.msra.mxu0 %v6288
        %6313 = vmatprep.subr.bf16.mxu0 0
        %6314 = vmatpush1.bf16.msra.mxu0 0
        %6315 = vmatprep.subr.bf16.mxu0 0
        %6316 = vmatpush1.bf16.msra.mxu0 0
        %6317 = vmatprep.subr.bf16.mxu0 0
        %6318 = vmatpush1.bf16.msra.mxu0 0
        %6319 = vmatprep.subr.bf16.mxu0 0
        %6320 = vmatpush1.bf16.msra.mxu0 0
        %6321 = vmatprep.subr.bf16.mxu0 0
        %6322 = vmatpush1.bf16.msra.mxu0 0
        %6323 = vmatprep.subr.bf16.mxu0 0
        %6324 = vmatpush1.bf16.msra.mxu0 0
        %6325 = vmatprep.subr.bf16.mxu0 0
        %6326 = vmatpush1.bf16.msra.mxu0 0
        %6327 = vmatprep.subr.bf16.mxu0 0
        %6328 = vmatpush1.bf16.msra.mxu0 0
        %6329 = vmatprep.mubr.bf16.mxu0 0
        %6330 = vmatmul.mubr.bf16.gmra.mrb[0].mxu0 %v6210
        %v6331 = vpop.f32.mrb[0].mxu0
        %v6332 = vadd.f32 %v6247, %v6331
        %v6333 = vpop.f32.mrb[0].mxu0
        %v6334 = vpop.f32.mrb[0].mxu0
        %v6335 = vadd.f32 %v6247, %v6334
        %v6336 = vpop.f32.mrb[0].mxu0
        %6337 = vmatprep.mubr.bf16.mxu0 0
        %6338 = vmatmul.mubr.bf16.gmra.mrb[0].mxu0 %v6211
        %v6339 = vpop.f32.mrb[0].mxu0
        %v6340 = vadd.f32 %v6247, %v6339
        %v6341 = vpop.f32.mrb[0].mxu0
        %v6342 = vpop.f32.mrb[0].mxu0
        %v6343 = vadd.f32 %v6247, %v6342
        %v6344 = vpop.f32.mrb[0].mxu0
        %6345 = vmatprep.mubr.bf16.mxu0 0
        %6346 = vmatmul.mubr.bf16.gmra.mrb[0].mxu0 %v6212
        %v6347 = vpop.f32.mrb[0].mxu0
        %v6348 = vadd.f32 %v6247, %v6347
        %v6349 = vpop.f32.mrb[0].mxu0
        %v6350 = vpop.f32.mrb[0].mxu0
        %v6351 = vadd.f32 %v6247, %v6350
        %v6352 = vpop.f32.mrb[0].mxu0
        %6353 = vmatprep.mubr.bf16.mxu0 0
        %6354 = vmatmul.mubr.bf16.gmra.mrb[0].mxu0 %v6213
        %v6355 = vpop.f32.mrb[0].mxu0
        %v6356 = vadd.f32 %v6247, %v6355
        %v6357 = vpop.f32.mrb[0].mxu0
        %v6358 = vpop.f32.mrb[0].mxu0
        %v6359 = vadd.f32 %v6247, %v6358
        %v6360 = vpop.f32.mrb[0].mxu0
        %6361 = vmatprep.mubr.bf16.mxu0 0
        %6362 = vmatmul.mubr.bf16.gmra.mrb[0].mxu0 %v6214
        %v6363 = vpop.f32.mrb[0].mxu0
        %v6364 = vadd.f32 %v6247, %v6363
        %v6365 = vpop.f32.mrb[0].mxu0
        %v6366 = vpop.f32.mrb[0].mxu0
        %v6367 = vadd.f32 %v6247, %v6366
        %v6368 = vpop.f32.mrb[0].mxu0
        %6369 = vmatprep.mubr.bf16.mxu0 0
        %6370 = vmatmul.mubr.bf16.gmra.mrb[0].mxu0 %v6215
        %v6371 = vpop.f32.mrb[0].mxu0
        %v6372 = vadd.f32 %v6247, %v6371
        %v6373 = vpop.f32.mrb[0].mxu0
        %v6374 = vpop.f32.mrb[0].mxu0
        %v6375 = vadd.f32 %v6247, %v6374
        %v6376 = vpop.f32.mrb[0].mxu0
        %6377 = vmatprep.mubr.bf16.mxu0 0
        %6378 = vmatmul.mubr.bf16.gmra.mrb[0].mxu0 %v6216
        %v6379 = vpop.f32.mrb[0].mxu0
        %v6380 = vadd.f32 %v6247, %v6379
        %v6381 = vpop.f32.mrb[0].mxu0
        %v6382 = vpop.f32.mrb[0].mxu0
        %v6383 = vadd.f32 %v6247, %v6382
        %v6384 = vpop.f32.mrb[0].mxu0
        %6385 = vmatprep.mubr.bf16.mxu0 0
        %6386 = vmatmul.mubr.bf16.gmra.mrb[0].mxu0 %v6217
        %v6387 = vpop.f32.mrb[0].mxu0
        %v6388 = vadd.f32 %v6247, %v6387
        %v6389 = vpop.f32.mrb[0].mxu0
        %v6390 = vpop.f32.mrb[0].mxu0
        %v6391 = vadd.f32 %v6247, %v6390
        %v6392 = vpop.f32.mrb[0].mxu0
        %6393 = vmatprep.mubr.bf16.mxu0 0
        %6394 = vmatmul.mubr.bf16.gmra.mrb[0].mxu0 %v6218
        %v6395 = vpop.f32.mrb[0].mxu0
        %v6396 = vadd.f32 %v6247, %v6395
        %v6397 = vpop.f32.mrb[0].mxu0
        %v6398 = vpop.f32.mrb[0].mxu0
        %v6399 = vadd.f32 %v6247, %v6398
        %v6400 = vpop.f32.mrb[0].mxu0
        %6401 = vmatprep.mubr.bf16.mxu0 0
        %6402 = vmatmul.mubr.bf16.gmra.mrb[0].mxu0 %v6219
        %v6403 = vpop.f32.mrb[0].mxu0
        %v6404 = vadd.f32 %v6247, %v6403
        %v6405 = vpop.f32.mrb[0].mxu0
        %v6406 = vpop.f32.mrb[0].mxu0
        %v6407 = vadd.f32 %v6247, %v6406
        %v6408 = vpop.f32.mrb[0].mxu0
        %6409 = vmatprep.mubr.bf16.mxu0 0
        %6410 = vmatmul.mubr.bf16.gmra.mrb[0].mxu0 %v6220
        %v6411 = vpop.f32.mrb[0].mxu0
        %v6412 = vadd.f32 %v6247, %v6411
        %v6413 = vpop.f32.mrb[0].mxu0
        %v6414 = vpop.f32.mrb[0].mxu0
        %v6415 = vadd.f32 %v6247, %v6414
        %v6416 = vpop.f32.mrb[0].mxu0
        %6417 = vmatprep.mubr.bf16.mxu0 0
        %6418 = vmatmul.mubr.bf16.gmra.mrb[0].mxu0 %v6221
        %v6419 = vpop.f32.mrb[0].mxu0
        %v6420 = vadd.f32 %v6247, %v6419
        %v6421 = vpop.f32.mrb[0].mxu0
        %v6422 = vpop.f32.mrb[0].mxu0
        %v6423 = vadd.f32 %v6247, %v6422
        %v6424 = vpop.f32.mrb[0].mxu0
        %6425 = vmatprep.mubr.bf16.mxu0 0
        %6426 = vmatmul.mubr.bf16.gmra.mrb[0].mxu0 %v6222
        %v6427 = vpop.f32.mrb[0].mxu0
        %v6428 = vadd.f32 %v6247, %v6427
        %v6429 = vpop.f32.mrb[0].mxu0
        %v6430 = vpop.f32.mrb[0].mxu0
        %v6431 = vadd.f32 %v6247, %v6430
        %v6432 = vpop.f32.mrb[0].mxu0
        %6433 = vmatprep.mubr.bf16.mxu0 0
        %6434 = vmatmul.mubr.bf16.gmra.mrb[0].mxu0 %v6223
        %v6435 = vpop.f32.mrb[0].mxu0
        %v6436 = vadd.f32 %v6247, %v6435
        %v6437 = vpop.f32.mrb[0].mxu0
        %v6438 = vpop.f32.mrb[0].mxu0
        %v6439 = vadd.f32 %v6247, %v6438
        %v6440 = vpop.f32.mrb[0].mxu0
        %6441 = vmatprep.mubr.bf16.mxu0 0
        %6442 = vmatmul.mubr.bf16.gmra.mrb[0].mxu0 %v6224
        %v6443 = vpop.f32.mrb[0].mxu0
        %v6444 = vadd.f32 %v6247, %v6443
        %v6445 = vpop.f32.mrb[0].mxu0
        %v6446 = vpop.f32.mrb[0].mxu0
        %v6447 = vadd.f32 %v6247, %v6446
        %v6448 = vpop.f32.mrb[0].mxu0
        %6449 = vmatprep.mubr.bf16.mxu0 0
        %6450 = vmatmul.mubr.bf16.gmra.mrb[0].mxu0 %v6225
        %v6451 = vpop.f32.mrb[0].mxu0
        %v6452 = vadd.f32 %v6247, %v6451
        %v6453 = vpop.f32.mrb[0].mxu0
        %v6454 = vpop.f32.mrb[0].mxu0
        %v6455 = vadd.f32 %v6247, %v6454
        %v6456 = vpop.f32.mrb[0].mxu0
        %6457 = vdwg.mxu0
        %v6458 = vunpack.c.l.bf16 %v313
        %v6459 = vunpack.c.l.bf16 %v314
        %v6460 = vunpack.c.l.bf16 %v315
        %v6461 = vunpack.c.l.bf16 %v316
        %v6462 = vunpack.c.l.bf16 %v317
        %v6463 = vunpack.c.l.bf16 %v318
        %v6464 = vunpack.c.l.bf16 %v319
        %v6465 = vunpack.c.l.bf16 %v320
        %v6466 = vunpack.c.l.bf16 %v321
        %v6467 = vunpack.c.l.bf16 %v322
        %v6468 = vunpack.c.l.bf16 %v323
        %v6469 = vunpack.c.l.bf16 %v324
        %v6470 = vunpack.c.l.bf16 %v325
        %v6471 = vunpack.c.l.bf16 %v326
        %v6472 = vunpack.c.l.bf16 %v327
        %v6473 = vunpack.c.l.bf16 %v328
        %v6474 = vunpack.c.l.bf16 %v329
        %v6475 = vunpack.c.l.bf16 %v330
        %v6476 = vunpack.c.l.bf16 %v331
        %v6477 = vunpack.c.l.bf16 %v332
        %v6478 = vunpack.c.l.bf16 %v333
        %v6479 = vunpack.c.l.bf16 %v334
        %v6480 = vunpack.c.l.bf16 %v335
        %v6481 = vunpack.c.l.bf16 %v336
        %v6482 = vunpack.c.l.bf16 %v337
        %v6483 = vunpack.c.l.bf16 %v338
        %v6484 = vunpack.c.l.bf16 %v339
        %v6485 = vunpack.c.l.bf16 %v340
        %v6486 = vunpack.c.l.bf16 %v341
        %v6487 = vunpack.c.l.bf16 %v342
        %v6488 = vunpack.c.l.bf16 %v343
        %v6489 = vunpack.c.l.bf16 %v344
        %v6490 = vadd.f32 %v6332, %v6458
        %v6491 = vadd.f32 %v6335, %v6459
        %v6492 = vadd.f32 %v6340, %v6460
        %v6493 = vadd.f32 %v6343, %v6461
        %v6494 = vadd.f32 %v6348, %v6462
        %v6495 = vadd.f32 %v6351, %v6463
        %v6496 = vadd.f32 %v6356, %v6464
        %v6497 = vadd.f32 %v6359, %v6465
        %v6498 = vadd.f32 %v6364, %v6466
        %v6499 = vadd.f32 %v6367, %v6467
        %v6500 = vadd.f32 %v6372, %v6468
        %v6501 = vadd.f32 %v6375, %v6469
        %v6502 = vadd.f32 %v6380, %v6470
        %v6503 = vadd.f32 %v6383, %v6471
        %v6504 = vadd.f32 %v6388, %v6472
        %v6505 = vadd.f32 %v6391, %v6473
        %v6506 = vadd.f32 %v6396, %v6474
        %v6507 = vadd.f32 %v6399, %v6475
        %v6508 = vadd.f32 %v6404, %v6476
        %v6509 = vadd.f32 %v6407, %v6477
        %v6510 = vadd.f32 %v6412, %v6478
        %v6511 = vadd.f32 %v6415, %v6479
        %v6512 = vadd.f32 %v6420, %v6480
        %v6513 = vadd.f32 %v6423, %v6481
        %v6514 = vadd.f32 %v6428, %v6482
        %v6515 = vadd.f32 %v6431, %v6483
        %v6516 = vadd.f32 %v6436, %v6484
        %v6517 = vadd.f32 %v6439, %v6485
        %v6518 = vadd.f32 %v6444, %v6486
        %v6519 = vadd.f32 %v6447, %v6487
        %v6520 = vadd.f32 %v6452, %v6488
        %v6521 = vadd.f32 %v6455, %v6489
        %v6522 = vmax.f32 %v6490, 0.0
        %v6523 = vmax.f32 %v6491, 0.0
        %v6524 = vmax.f32 %v6492, 0.0
        %v6525 = vmax.f32 %v6493, 0.0
        %v6526 = vmax.f32 %v6494, 0.0
        %v6527 = vmax.f32 %v6495, 0.0
        %v6528 = vmax.f32 %v6496, 0.0
        %v6529 = vmax.f32 %v6497, 0.0
        %v6530 = vmax.f32 %v6498, 0.0
        %v6531 = vmax.f32 %v6499, 0.0
        %v6532 = vmax.f32 %v6500, 0.0
        %v6533 = vmax.f32 %v6501, 0.0
        %v6534 = vmax.f32 %v6502, 0.0
        %v6535 = vmax.f32 %v6503, 0.0
        %v6536 = vmax.f32 %v6504, 0.0
        %v6537 = vmax.f32 %v6505, 0.0
        %v6538 = vmax.f32 %v6506, 0.0
        %v6539 = vmax.f32 %v6507, 0.0
        %v6540 = vmax.f32 %v6508, 0.0
        %v6541 = vmax.f32 %v6509, 0.0
        %v6542 = vmax.f32 %v6510, 0.0
        %v6543 = vmax.f32 %v6511, 0.0
        %v6544 = vmax.f32 %v6512, 0.0
        %v6545 = vmax.f32 %v6513, 0.0
        %v6546 = vmax.f32 %v6514, 0.0
        %v6547 = vmax.f32 %v6515, 0.0
        %v6548 = vmax.f32 %v6516, 0.0
        %v6549 = vmax.f32 %v6517, 0.0
        %v6550 = vmax.f32 %v6518, 0.0
        %v6551 = vmax.f32 %v6519, 0.0
        %v6552 = vmax.f32 %v6520, 0.0
        %v6553 = vmax.f32 %v6521, 0.0
        %v6554 = vpack.c.bf16 %v6523, %v6522
        %v6555 = vpack.c.bf16 %v6525, %v6524
        %v6556 = vpack.c.bf16 %v6527, %v6526
        %v6557 = vpack.c.bf16 %v6529, %v6528
        %v6558 = vpack.c.bf16 %v6531, %v6530
        %v6559 = vpack.c.bf16 %v6533, %v6532
        %v6560 = vpack.c.bf16 %v6535, %v6534
        %v6561 = vpack.c.bf16 %v6537, %v6536
        %v6562 = vpack.c.bf16 %v6539, %v6538
        %v6563 = vpack.c.bf16 %v6541, %v6540
        %v6564 = vpack.c.bf16 %v6543, %v6542
        %v6565 = vpack.c.bf16 %v6545, %v6544
        %v6566 = vpack.c.bf16 %v6547, %v6546
        %v6567 = vpack.c.bf16 %v6549, %v6548
        %v6568 = vpack.c.bf16 %v6551, %v6550
        %v6569 = vpack.c.bf16 %v6553, %v6552
        %v6586 = vunpack.c.l.b16 %v6554
        %v6587 = vunpack.c.h.b16 %v6554
        %v6588 = vunpack.c.l.b16 %v6555
        %v6589 = vunpack.c.h.b16 %v6555
        %v6590 = vunpack.c.l.b16 %v6556
        %v6591 = vunpack.c.h.b16 %v6556
        %v6592 = vunpack.c.l.b16 %v6557
        %v6593 = vunpack.c.h.b16 %v6557
        %v6594 = vunpack.c.l.b16 %v6558
        %v6595 = vunpack.c.h.b16 %v6558
        %v6596 = vunpack.c.l.b16 %v6559
        %v6597 = vunpack.c.h.b16 %v6559
        %v6598 = vunpack.c.l.b16 %v6560
        %v6599 = vunpack.c.h.b16 %v6560
        %v6600 = vunpack.c.l.b16 %v6561
        %v6601 = vunpack.c.h.b16 %v6561
        %v6602 = vunpack.c.l.b16 %v6562
        %v6603 = vunpack.c.h.b16 %v6562
        %v6604 = vunpack.c.l.b16 %v6563
        %v6605 = vunpack.c.h.b16 %v6563
        %v6606 = vunpack.c.l.b16 %v6564
        %v6607 = vunpack.c.h.b16 %v6564
        %v6608 = vunpack.c.l.b16 %v6565
        %v6609 = vunpack.c.h.b16 %v6565
        %v6610 = vunpack.c.l.b16 %v6566
        %v6611 = vunpack.c.h.b16 %v6566
        %v6612 = vunpack.c.l.b16 %v6567
        %v6613 = vunpack.c.h.b16 %v6567
        %v6614 = vunpack.c.l.b16 %v6568
        %v6615 = vunpack.c.h.b16 %v6568
        %v6616 = vunpack.c.l.b16 %v6569
        %v6617 = vunpack.c.h.b16 %v6569
        %v6618 = vpack.c.b16 %v6586, %v6586
        %v6619 = vpack.c.b16 %v6587, %v6587
        %v6620 = vpack.c.b16 %v6588, %v6588
        %v6621 = vpack.c.b16 %v6589, %v6589
        %v6622 = vpack.c.b16 %v6590, %v6590
        %v6623 = vpack.c.b16 %v6591, %v6591
        %v6624 = vpack.c.b16 %v6592, %v6592
        %v6625 = vpack.c.b16 %v6593, %v6593
        %v6626 = vpack.c.b16 %v6594, %v6594
        %v6627 = vpack.c.b16 %v6595, %v6595
        %v6628 = vpack.c.b16 %v6596, %v6596
        %v6629 = vpack.c.b16 %v6597, %v6597
        %v6630 = vpack.c.b16 %v6598, %v6598
        %v6631 = vpack.c.b16 %v6599, %v6599
        %v6632 = vpack.c.b16 %v6600, %v6600
        %v6633 = vpack.c.b16 %v6601, %v6601
        %v6634 = vpack.c.b16 %v6602, %v6602
        %v6635 = vpack.c.b16 %v6603, %v6603
        %v6636 = vpack.c.b16 %v6604, %v6604
        %v6637 = vpack.c.b16 %v6605, %v6605
        %v6638 = vpack.c.b16 %v6606, %v6606
        %v6639 = vpack.c.b16 %v6607, %v6607
        %v6640 = vpack.c.b16 %v6608, %v6608
        %v6641 = vpack.c.b16 %v6609, %v6609
        %v6642 = vpack.c.b16 %v6610, %v6610
        %v6643 = vpack.c.b16 %v6611, %v6611
        %v6644 = vpack.c.b16 %v6612, %v6612
        %v6645 = vpack.c.b16 %v6613, %v6613
        %v6646 = vpack.c.b16 %v6614, %v6614
        %v6647 = vpack.c.b16 %v6615, %v6615
        %v6648 = vpack.c.b16 %v6616, %v6616
        %v6649 = vpack.c.b16 %v6617, %v6617
        %vm6682 = vcmask 257024
        %6683 = vst.msk [vmem:[%s311] sm:$0xf] %vm6682, %v6618
        %6684 = vst.msk [vmem:[%s311 + $0x4] sm:$0xf] %vm6682, %v6619
        %6685 = vst.msk [vmem:[%s311 + $0x8] sm:$0xf] %vm6682, %v6620
        %6686 = vst.msk [vmem:[%s311 + $0xc] sm:$0xf] %vm6682, %v6621
        %6687 = vst.msk [vmem:[%s311 + $0x10] sm:$0xf] %vm6682, %v6622
        %6688 = vst.msk [vmem:[%s311 + $0x14] sm:$0xf] %vm6682, %v6623
        %6689 = vst.msk [vmem:[%s311 + $0x18] sm:$0xf] %vm6682, %v6624
        %6690 = vst.msk [vmem:[%s311 + $0x1c] sm:$0xf] %vm6682, %v6625
        %6691 = vst.msk [vmem:[%s311 + $0x20] sm:$0xf] %vm6682, %v6626
        %6692 = vst.msk [vmem:[%s311 + $0x24] sm:$0xf] %vm6682, %v6627
        %6693 = vst.msk [vmem:[%s311 + $0x28] sm:$0xf] %vm6682, %v6628
        %6694 = vst.msk [vmem:[%s311 + $0x2c] sm:$0xf] %vm6682, %v6629
        %6695 = vst.msk [vmem:[%s311 + $0x30] sm:$0xf] %vm6682, %v6630
        %6696 = vst.msk [vmem:[%s311 + $0x34] sm:$0xf] %vm6682, %v6631
        %6697 = vst.msk [vmem:[%s311 + $0x38] sm:$0xf] %vm6682, %v6632
        %6698 = vst.msk [vmem:[%s311 + $0x3c] sm:$0xf] %vm6682, %v6633
        %6699 = vst.msk [vmem:[%s311 + $0x40] sm:$0xf] %vm6682, %v6634
        %6700 = vst.msk [vmem:[%s311 + $0x44] sm:$0xf] %vm6682, %v6635
        %6701 = vst.msk [vmem:[%s311 + $0x48] sm:$0xf] %vm6682, %v6636
        %6702 = vst.msk [vmem:[%s311 + $0x4c] sm:$0xf] %vm6682, %v6637
        %6703 = vst.msk [vmem:[%s311 + $0x50] sm:$0xf] %vm6682, %v6638
        %6704 = vst.msk [vmem:[%s311 + $0x54] sm:$0xf] %vm6682, %v6639
        %6705 = vst.msk [vmem:[%s311 + $0x58] sm:$0xf] %vm6682, %v6640
        %6706 = vst.msk [vmem:[%s311 + $0x5c] sm:$0xf] %vm6682, %v6641
        %6707 = vst.msk [vmem:[%s311 + $0x60] sm:$0xf] %vm6682, %v6642
        %6708 = vst.msk [vmem:[%s311 + $0x64] sm:$0xf] %vm6682, %v6643
        %6709 = vst.msk [vmem:[%s311 + $0x68] sm:$0xf] %vm6682, %v6644
        %6710 = vst.msk [vmem:[%s311 + $0x6c] sm:$0xf] %vm6682, %v6645
        %6711 = vst.msk [vmem:[%s311 + $0x70] sm:$0xf] %vm6682, %v6646
        %6712 = vst.msk [vmem:[%s311 + $0x74] sm:$0xf] %vm6682, %v6647
        %6713 = vst.msk [vmem:[%s311 + $0x78] sm:$0xf] %vm6682, %v6648
        %6714 = vst.msk [vmem:[%s311 + $0x7c] sm:$0xf] %vm6682, %v6649
        %s6715 = sand.u32 %s185, 1
        %s6716 = scalar_lea.sflag [#allocation5], %s6715
        %s6717 = sand.u32 %s185, 1
        %s6718 = smul.addr %s6717, 128
        %s6719 = scalar_lea.vmem [#allocation8], %s6718
        // Predicated region
        $region57: #{tpu_custom_call.1} parent=47 // pred_check
          %p6720 = pneg %p195
        $region58: #{tpu_custom_call.1} parent=47 // pred_check_branch
          %6722 = sbr.rel (%p6720) target = $region60
        $region59: #{tpu_custom_call.1} parent=47 // pred_region
          %s6724 = ssub.s32 2048, 2048
          %6725 = vsyncadd %s6716, %s6724
          %s6726 = smul.addr %s25, 32
          %s6727 = smul.addr %s6726, 64
          %s6728 = scalar_lea.hbm %s7, %s6727
          %s6729 = sshll.u32 %s6719, 4
          %s6730 = int_to_ptr.vmem [resolvable:$true] %s6729
          %6735 = dma.vmem_to_hbm [thread:$0]  %s6730, 2048, %s6728, %s6716, 64, 64, 4
        $region60: #{tpu_custom_call.1} parent=47 // pred_fallthru
          _
      $region48: #{tpu_custom_call.1} parent=5 // pred_fallthru
        _
      %p6736 = scmp.le.s32.totalorder 2, %s20
      // Predicated region
      $region61: #{tpu_custom_call.1} parent=5 // pred_check
        %p6737 = pneg %p6736
      $region62: #{tpu_custom_call.1} parent=5 // pred_check_branch
        %6739 = sbr.rel (%p6737) target = $region64
      $region63: #{tpu_custom_call.1} parent=5 // pred_region
        %s6740 = ssub.s32 %s20, 2
        // Predicated region
        $region65: #{tpu_custom_call.1} parent=63 // pred_check
          %p6741 = pneg %p201
        $region66: #{tpu_custom_call.1} parent=63 // pred_check_branch
          %6743 = sbr.rel (%p6741) target = $region68
        $region67: #{tpu_custom_call.1} parent=63 // pred_region
          %s6744 = sand.u32 %s186, 1
          %s6745 = scalar_lea.sflag [#allocation5], %s6744
          %s6746 = sand.u32 %s186, 1
          %s6747 = smul.addr %s6746, 128
          %s6748 = scalar_lea.vmem [#allocation8], %s6747
          %6749 = dma.done %s6745, 2048
        $region68: #{tpu_custom_call.1} parent=63 // pred_fallthru
          _
      $region64: #{tpu_custom_call.1} parent=5 // pred_fallthru
        _
    $region6: #{tpu_custom_call.1} parent=1 // loop_footer
      %s24 = sadd.s32 1, %s20
    $region7: #{tpu_custom_call.1} parent=1 // loop_footer_branch
      %19 = sbr.rel target = $region3
    $region8: #{tpu_custom_call.1} parent=1 // loop_exit
      _
    %6750 = vsyncpa [#allocation4], 1
    %s6751 = scalar_lea.sflag [#allocation4], 1
    %6752 = vsyncpa %s6751, 1
    %6753 = vsyncpa [#allocation7], 1
    %6754 = vsyncpa [#allocation5], 1
    %s6755 = scalar_lea.sflag [#allocation5], 1
    %6756 = vsyncpa %s6755, 1

</llo_original>
